<compile_context>
chip_gen: v5e
topology: v5e:2x2
jax: 0.10.0
libtpu: 0.0.40
codegen_flags: <defaults>
</compile_context>

<pallas_src>
import functools

import jax
import jax.numpy as jnp
from jax.experimental import pallas as pl
from jax.experimental.pallas import tpu as pltpu


# --------------------------------------------------------------------------- #
# Helpers
# --------------------------------------------------------------------------- #
def _vmem_limit_bytes(*block_bytes):
    """VMEM budget derived from the actual block sizes (double-buffering + temps),
    clamped to be safe on v7x's 64 MiB physical VMEM."""
    total = 4 * sum(int(b) for b in block_bytes) + (8 << 20)
    return int(min(max(total, 16 << 20), 64 << 20))


def _fold_bn(gamma, beta, mean, var, eps):
    """Fold inference BatchNorm into per-channel scale/bias (f32)."""
    scale = gamma / jnp.sqrt(var + eps)
    bias = beta - mean * scale
    return (scale.reshape(1, -1).astype(jnp.float32),
            bias.reshape(1, -1).astype(jnp.float32))


def _extract_patches(x, kh, kw, stride):
    """Wrapper-side im2col: (N,H,W,C) -> (N,OH,OW,KH*KW*C); stride folded here."""
    n, h, w, c = x.shape
    oh = (h - kh) // stride + 1
    ow = (w - kw) // stride + 1
    taps = []
    for dh in range(kh):
        for dw in range(kw):
            taps.append(x[:, dh:dh + (oh - 1) * stride + 1:stride,
                          dw:dw + (ow - 1) * stride + 1:stride, :])
    return jnp.concatenate(taps, axis=-1), oh, ow


# --------------------------------------------------------------------------- #
# Kernel 1: GEMM + folded-BN + ReLU (used for im2col'd / strided / tiny-Cin convs)
# --------------------------------------------------------------------------- #
def _matmul_bn_relu_kernel(x_ref, w_ref, scale_ref, bias_ref, o_ref):
    # x_ref: (1, M, K) bf16 patches; w_ref: (K, Cout) bf16
    # scale/bias: (1, Cout) f32 folded BN; o_ref: (1, M, Cout) bf16
    acc = jnp.dot(x_ref[0], w_ref[...], preferred_element_type=jnp.float32)
    y = acc * scale_ref[...] + bias_ref[...]
    o_ref[0] = jnp.maximum(y, 0.0).astype(o_ref.dtype)


# --------------------------------------------------------------------------- #
# Kernel 2: direct stride-1 conv + folded-BN + ReLU on a flattened row-major slab
# --------------------------------------------------------------------------- #
def _conv_bn_relu_kernel(x_ref, w_ref, scale_ref, bias_ref, o_ref, *, kh, kw, wp):
    # x_ref: (1, Hp*Wp, Cin) bf16 flattened input map (one image per grid step)
    # w_ref: (KH*KW, Cin, Cout) bf16
    # o_ref: (1, M_wide, Cout) bf16, M_wide = (OH-1)*Wp + OW
    #
    # Conv as a sum of shifted GEMMs: the tap (dh, dw) contribution to flat output
    # row j = r*Wp + c is x_flat[j + dh*Wp + dw] @ w[dh, dw].  Rows whose window
    # wraps a row edge (c >= OW) are junk, computed anyway (<(kw-1)/Wp extra work)
    # and stripped by the caller.  Every operand here is a contiguous 2-D slice,
    # so M ~= OH*OW (thousands) per MXU dot instead of one tiny row at a time.
    # NOTE: a full in-kernel im2col (K = KH*KW*Cin) would need lane-offset
    # concatenation of Cin=32 chunks; at stem sizes the extra shuffle work
    # outweighs the MXU-depth gain, so we accumulate per-tap dots in f32 instead.
    m_wide = o_ref.shape[1]
    cout = o_ref.shape[2]
    acc = None
    for dh in range(kh):
        for dw in range(kw):
            off = dh * wp + dw
            tap = x_ref[0, off:off + m_wide, :]          # (M_wide, Cin) contiguous
            contrib = jnp.dot(tap, w_ref[dh * kw + dw],
                              preferred_element_type=jnp.float32)
            acc = contrib if acc is None else acc + contrib
    y = acc * scale_ref[...] + bias_ref[...]
    o_ref[0] = jnp.maximum(y, 0.0).astype(o_ref.dtype)


# --------------------------------------------------------------------------- #
# BasicConv2d wrapper
# --------------------------------------------------------------------------- #
def basic_conv2d(x_nhwc, w_hwio, gamma, beta, mean, var, *, stride=1, padding=0,
                 eps=1e-3):
    """Conv2d(bias=False) + BatchNorm2d(eps, inference) + ReLU on an NHWC input.

    w_hwio: (KH, KW, Cin, Cout).  Output: (N, OH, OW, Cout) bf16.
    """
    kh, kw, cin, cout = w_hwio.shape
    scale, bias = _fold_bn(gamma, beta, mean, var, eps)

    x = x_nhwc.astype(jnp.bfloat16)
    w = w_hwio.astype(jnp.bfloat16)
    if padding:
        # TODO(synk): fold the halo into the kernel (zero-filled VMEM scratch) to avoid
        # this extra HBM pass; negligible at stem feature-map sizes (and it fuses into
        # the patch gather on the im2col path).
        x = jnp.pad(x, ((0, 0), (padding, padding), (padding, padding), (0, 0)))

    n, hp, wp, _ = x.shape

    if stride > 1 or cin < 16:
        # Strided and/or tiny-Cin (RGB) layers: wrapper-side im2col so the kernel sees a
        # single lane-friendly (M, KH*KW*Cin) @ (KH*KW*Cin, Cout) GEMM, with the stride
        # folded into the patch gather (no dense conv + subsample, no Cin=3 lane waste).
        patches, oh, ow = _extract_patches(x, kh, kw, stride)
        k = kh * kw * cin
        m = oh * ow
        patches = patches.reshape(n, m, k)
        w2 = w.reshape(k, cout)
        out = pl.pallas_call(
            _matmul_bn_relu_kernel,
            out_shape=jax.ShapeDtypeStruct((n, m, cout), jnp.bfloat16),
            grid=(n,),
            in_specs=[
                pl.BlockSpec((1, m, k), lambda i: (i, 0, 0)),
                pl.BlockSpec((k, cout), lambda i: (0, 0)),
                pl.BlockSpec((1, cout), lambda i: (0, 0)),
                pl.BlockSpec((1, cout), lambda i: (0, 0)),
            ],
            out_specs=pl.BlockSpec((1, m, cout), lambda i: (i, 0, 0)),
            compiler_params=pltpu.CompilerParams(
                dimension_semantics=("parallel",),
                vmem_limit_bytes=_vmem_limit_bytes(
                    m * k * 2, k * cout * 2, m * cout * 2, m * cout * 4),
            ),
        )(patches, w2, scale, bias)
        return out.reshape(n, oh, ow, cout)

    # stride-1, Cin >= 16: direct conv, whole image per grid step, flattened slab.
    oh = hp - kh + 1
    ow = wp - kw + 1
    m_wide = (oh - 1) * wp + ow
    xf = x.reshape(n, hp * wp, cin)                        # free row-major reshape
    w3 = w.reshape(kh * kw, cin, cout)
    kernel = functools.partial(_conv_bn_relu_kernel, kh=kh, kw=kw, wp=wp)
    out = pl.pallas_call(
        kernel,
        out_shape=jax.ShapeDtypeStruct((n, m_wide, cout), jnp.bfloat16),
        grid=(n,),
        in_specs=[
            pl.BlockSpec((1, hp * wp, cin), lambda i: (i, 0, 0)),
            pl.BlockSpec((kh * kw, cin, cout), lambda i: (0, 0, 0)),
            pl.BlockSpec((1, cout), lambda i: (0, 0)),
            pl.BlockSpec((1, cout), lambda i: (0, 0)),
        ],
        out_specs=pl.BlockSpec((1, m_wide, cout), lambda i: (i, 0, 0)),
        compiler_params=pltpu.CompilerParams(
            dimension_semantics=("parallel",),
            vmem_limit_bytes=_vmem_limit_bytes(
                hp * wp * cin * 2, kh * kw * cin * cout * 2,
                m_wide * cout * 2, m_wide * cout * 4, m_wide * cin * 2),
        ),
    )(xf, w3, scale, bias)
    # Strip the (kw-1) wrap-around junk columns per output row and restore NHWC
    # (pad + reshape + slice is one small fused XLA pass over the output).
    out = jnp.pad(out, ((0, 0), (0, wp - ow), (0, 0)))
    out = out.reshape(n, oh, wp, cout)[:, :, :ow, :]
    return out


# --------------------------------------------------------------------------- #
# Embedding head: AvgPool2d(8) -> flatten -> Linear(1536, E, bias=False)
#                 -> BatchNorm1d(E) -> F.normalize(p=2, dim=1)
# --------------------------------------------------------------------------- #
def _embedding_head_kernel(f_ref, w_ref, scale_ref, bias_ref, o_ref):
    # f_ref: (TN, HW, C) bf16 trunk feature slab; w_ref: (C, E) bf16 linear weight
    # scale/bias: (1, E) f32 folded BatchNorm1d; o_ref: (TN, E) f32 unit-norm embeddings
    feats = f_ref[...].astype(jnp.float32)
    pooled = jnp.mean(feats, axis=1)                        # AvgPool2d(8) + flatten
    emb = jnp.dot(pooled.astype(jnp.bfloat16), w_ref[...],
                  preferred_element_type=jnp.float32)       # Linear(bias=False)
    emb = emb * scale_ref[...] + bias_ref[...]              # BatchNorm1d (inference)
    ssq = jnp.sum(emb * emb, axis=1, keepdims=True)
    inv = jax.lax.rsqrt(jnp.maximum(ssq, 1e-24))            # EUP rsqrt; F.normalize eps
    o_ref[...] = emb * inv


def embedding_head(feats_nchw, w_t, gamma, beta, mean, var, *, eps=1e-3,
                   batch_tile=8):
    """feats_nchw: (N, 1536, 8, 8); w_t: (1536, E)."""
    n, c, h, wd = feats_nchw.shape
    e = w_t.shape[1]
    hw = h * wd
    slab = (jnp.transpose(feats_nchw, (0, 2, 3, 1))
            .reshape(n, hw, c).astype(jnp.bfloat16))
    w = w_t.astype(jnp.bfloat16)
    scale, bias = _fold_bn(gamma, beta, mean, var, eps)

    tn = min(batch_tile, n)
    return pl.pallas_call(
        _embedding_head_kernel,
        out_shape=jax.ShapeDtypeStruct((n, e), jnp.float32),
        grid=(pl.cdiv(n, tn),),                             # batch-tiled, pipelined
        in_specs=[
            pl.BlockSpec((tn, hw, c), lambda i: (i, 0, 0)),
            pl.BlockSpec((c, e), lambda i: (0, 0)),         # weights stay resident
            pl.BlockSpec((1, e), lambda i: (0, 0)),
            pl.BlockSpec((1, e), lambda i: (0, 0)),
        ],
        out_specs=pl.BlockSpec((tn, e), lambda i: (i, 0)),
        compiler_params=pltpu.CompilerParams(
            dimension_semantics=("parallel",),
            vmem_limit_bytes=_vmem_limit_bytes(
                tn * hw * c * 2, c * e * 2, tn * e * 4, tn * hw * c * 4),
        ),
    )(slab, w, scale, bias)


# --------------------------------------------------------------------------- #
# Driver
# --------------------------------------------------------------------------- #
if __name__ == "__main__":
    key = jax.random.PRNGKey(0)
    keys = jax.random.split(key, 16)

    N, EMB = 2, 256
    # PyTorch NCHW images.  Small demo resolution (the real backbone uses 299x299).
    images = jax.random.normal(keys[0], (N, 3, 101, 101), dtype=jnp.float32)

    def conv_params(k, cin, cout, kh, kw):
        ks = jax.random.split(k, 5)
        w = jax.random.normal(ks[0], (kh, kw, cin, cout), jnp.float32) * 0.05
        gamma = 1.0 + 0.1 * jax.random.normal(ks[1], (cout,), jnp.float32)
        beta = 0.1 * jax.random.normal(ks[2], (cout,), jnp.float32)
        mean = 0.1 * jax.random.normal(ks[3], (cout,), jnp.float32)
        var = jax.random.uniform(ks[4], (cout,), jnp.float32, minval=0.5, maxval=1.5)
        return w, gamma, beta, mean, var

    # ---- Inception-ResNet-V2 stem (BasicConv2d layers) on the images ----
    x = jnp.transpose(images, (0, 2, 3, 1))                              # NCHW -> NHWC
    x = basic_conv2d(x, *conv_params(keys[1], 3, 32, 3, 3), stride=2)    # conv2d_1a
    x = basic_conv2d(x, *conv_params(keys[2], 32, 32, 3, 3), stride=1)   # conv2d_2a
    stem = basic_conv2d(x, *conv_params(keys[3], 32, 64, 3, 3),
                        stride=1, padding=1)                             # conv2d_2b
    stem = jax.block_until_ready(stem)
    assert stem.shape == (N, 48, 48, 64), stem.shape

    # TODO(synk): the remaining Inception-ResNet-V2 trunk (maxpool_3a ... mixed_5b,
    # block35 x10, mixed_6a, block17 x20, mixed_7a, block8 x10, conv2d_7b) is not
    # reproduced here; the head below consumes synthetic 1536-channel trunk features.
    trunk_feats = jax.random.normal(keys[4], (N, 1536, 8, 8), dtype=jnp.float32)

    # last_linear = Sequential(Linear(1536, EMB, bias=False), BatchNorm1d(EMB, eps=1e-3))
    lin_w = jax.random.normal(keys[5], (EMB, 1536), jnp.float32) * 0.02  # PyTorch (out, in)
    g = 1.0 + 0.1 * jax.random.normal(keys[6], (EMB,), jnp.float32)
    b = 0.1 * jax.random.normal(keys[7], (EMB,), jnp.float32)
    rm = 0.1 * jax.random.normal(keys[8], (EMB,), jnp.float32)
    rv = jax.random.uniform(keys[9], (EMB,), jnp.float32, minval=0.5, maxval=1.5)

    emb = embedding_head(trunk_feats, lin_w.T, g, b, rm, rv)
    emb = jax.block_until_ready(emb)

    assert emb.shape == (N, EMB)
    norms = jnp.linalg.norm(emb, axis=1)
    assert bool(jnp.all(jnp.abs(norms - 1.0) < 1e-3)), "embeddings must be unit L2 norm"

    print("KERNEL_OK")
</pallas_src>

<mosaic_0001>
module attributes {stable_mosaic.version = 11 : i64} {
  func.func @_matmul_bn_relu_kernel(%arg0: i32, %arg1: memref<1x2500x27xbf16, #tpu.memory_space<vmem>>, %arg2: memref<27x32xbf16, #tpu.memory_space<vmem>>, %arg3: memref<1x32xf32, #tpu.memory_space<vmem>>, %arg4: memref<1x32xf32, #tpu.memory_space<vmem>>, %arg5: memref<1x2500x32xbf16, #tpu.memory_space<vmem>>) attributes {dimension_semantics = [#tpu.dimension_semantics<parallel>], iteration_bounds = array<i64: 2>, scalar_prefetch = 0 : i64, scratch_operands = 0 : i64, tpu.core_type = #tpu.core_type<tc>, window_params = [{transform_indices = @transform_0, window_bounds = array<i64: 1, 2500, 27>}, {pipeline_mode = #tpu.pipeline_mode<synchronous>, transform_indices = @transform_1, window_bounds = array<i64: 27, 32>}, {pipeline_mode = #tpu.pipeline_mode<synchronous>, transform_indices = @transform_2, window_bounds = array<i64: 1, 32>}, {pipeline_mode = #tpu.pipeline_mode<synchronous>, transform_indices = @transform_3, window_bounds = array<i64: 1, 32>}, {transform_indices = @transform_4, window_bounds = array<i64: 1, 2500, 32>}]} {
    %c0 = arith.constant 0 : index
    %c0_0 = arith.constant 0 : index
    %c0_1 = arith.constant 0 : index
    %0 = vector.load %arg1[%c0, %c0_0, %c0_1] : memref<1x2500x27xbf16, #tpu.memory_space<vmem>>, vector<1x2500x27xbf16>
    %1 = vector.shape_cast %0 : vector<1x2500x27xbf16> to vector<2500x27xbf16>
    %c0_2 = arith.constant 0 : index
    %c0_3 = arith.constant 0 : index
    %2 = vector.load %arg2[%c0_2, %c0_3] : memref<27x32xbf16, #tpu.memory_space<vmem>>, vector<27x32xbf16>
    %cst = arith.constant dense<0.000000e+00> : vector<2500x32xf32>
    %3 = tpu.matmul %1, %2, %cst {dimension_numbers = #tpu.dot_dimension_numbers<[1], [0], [0], [1], [0, 0, 1, 1], [], []>} : vector<2500x27xbf16>, vector<27x32xbf16>, vector<2500x32xf32> -> vector<2500x32xf32>
    %c0_4 = arith.constant 0 : index
    %c0_5 = arith.constant 0 : index
    %4 = vector.load %arg3[%c0_4, %c0_5] : memref<1x32xf32, #tpu.memory_space<vmem>>, vector<1x32xf32>
    %5 = vector.broadcast %4 : vector<1x32xf32> to vector<2500x32xf32>
    %6 = arith.mulf %3, %5 : vector<2500x32xf32>
    %c0_6 = arith.constant 0 : index
    %c0_7 = arith.constant 0 : index
    %7 = vector.load %arg4[%c0_6, %c0_7] : memref<1x32xf32, #tpu.memory_space<vmem>>, vector<1x32xf32>
    %8 = vector.broadcast %7 : vector<1x32xf32> to vector<2500x32xf32>
    %9 = arith.addf %6, %8 : vector<2500x32xf32>
    %cst_8 = arith.constant 0.000000e+00 : f32
    %10 = vector.broadcast %cst_8 : f32 to vector<2500x32xf32>
    %11 = arith.maximumf %9, %10 : vector<2500x32xf32>
    %12 = arith.truncf %11 : vector<2500x32xf32> to vector<2500x32xbf16>
    %c0_9 = arith.constant 0 : index
    %c0_10 = arith.constant 0 : index
    %c0_11 = arith.constant 0 : index
    %13 = vector.load %arg5[%c0_9, %c0_10, %c0_11] : memref<1x2500x32xbf16, #tpu.memory_space<vmem>>, vector<1x2500x32xbf16>
    %14 = vector.shape_cast %13 : vector<1x2500x32xbf16> to vector<2500x32xbf16>
    %15 = vector.shape_cast %12 : vector<2500x32xbf16> to vector<1x2500x32xbf16>
    tpu.vector_store %arg5[%c0_9, %c0_10, %c0_11], %15 {strides = array<i32>} : memref<1x2500x32xbf16, #tpu.memory_space<vmem>>, vector<1x2500x32xbf16>,
    return
  }
  func.func @transform_0(%arg0: i32) -> (i32, i32, i32) {
    %c0_i32 = arith.constant 0 : i32
    %c0_i32_0 = arith.constant 0 : i32
    %c0_i32_1 = arith.constant 0 : i32
    return %arg0, %c0_i32, %c0_i32_0 : i32, i32, i32
  }
  func.func @transform_1(%arg0: i32) -> (i32, i32) {
    %c0_i32 = arith.constant 0 : i32
    %c0_i32_0 = arith.constant 0 : i32
    %c0_i32_1 = arith.constant 0 : i32
    return %c0_i32, %c0_i32_0 : i32, i32
  }
  func.func @transform_2(%arg0: i32) -> (i32, i32) {
    %c0_i32 = arith.constant 0 : i32
    %c0_i32_0 = arith.constant 0 : i32
    %c0_i32_1 = arith.constant 0 : i32
    return %c0_i32, %c0_i32_0 : i32, i32
  }
  func.func @transform_3(%arg0: i32) -> (i32, i32) {
    %c0_i32 = arith.constant 0 : i32
    %c0_i32_0 = arith.constant 0 : i32
    %c0_i32_1 = arith.constant 0 : i32
    return %c0_i32, %c0_i32_0 : i32, i32
  }
  func.func @transform_4(%arg0: i32) -> (i32, i32, i32) {
    %c0_i32 = arith.constant 0 : i32
    %c0_i32_0 = arith.constant 0 : i32
    %c0_i32_1 = arith.constant 0 : i32
    return %arg0, %c0_i32, %c0_i32_0 : i32, i32, i32
  }
}

</mosaic_0001>

<llo_original>
// kernel: tpu_custom_call.1
$region0: #{tpu_custom_call.1}
  #allocation0 [shape = 'u32[]', space=smem, size = 0x4, offset = 0x4, fixed_abs, tag = 'smem constant byte address 0x4 - core index']
  #allocation1 [shape = 'u32[72,128]{1,0:T(1,128)}', space=vmem, size = 0x9000, scoped, tag = 'internal scratch']
  %s0 = inlined_call_operand.vmem [shape: bf16[2,2500,27], index: 0, kind: input, shape index: {}]
  %s1 = inlined_call_operand.vmem [shape: bf16[27,32], index: 1, kind: input, shape index: {}]
  %s2 = inlined_call_operand.vmem [shape: f32[1,32], index: 2, kind: input, shape index: {}]
  %s3 = inlined_call_operand.vmem [shape: f32[1,32], index: 3, kind: input, shape index: {}]
  %s4 = inlined_call_operand.vmem [shape: bf16[2,2500,32], index: 4, kind: output, shape index: {}]
  %s5 = sld [smem:[#allocation0]]
  $region49: #{tpu_custom_call.1} parent=0
    _
  %s7 = ssub.s32 1, %s5
  %s8 = scalar_select 0, %s7, %s5
  loop: start=0, step=1, limit=4
  $region2: #{tpu_custom_call.1} parent=0 // loop_pre_header
    _
  $region3: #{tpu_custom_call.1} parent=0 // loop_header
    %s10 = sphi 0, %s14
    %p11 = scmp.ge.s32.totalorder %s10, 4
    %s20 = sphi 0, %s22
    %s23 = sphi 0, %s20
    %s24 = sphi 0, %s23
    %s40 = sphi 0, %s24
    %s44 = sphi 0, %s44
    %s46 = sphi 0, %s44
    %s47 = sphi 0, %s46
    %s61 = sphi 0, %s47
    %s65 = sphi 0, %s65
    %s67 = sphi 0, %s65
    %s68 = sphi 0, %s67
    %s82 = sphi 0, %s68
    %s86 = sphi 0, %s86
    %s88 = sphi 0, %s86
    %s89 = sphi 0, %s88
    %s103 = sphi 0, %s89
    %s109 = sphi 0, %s111
    %s112 = sphi 0, %s109
    %s113 = sphi 0, %s112
    %s129 = sphi 0, %s113
  $region4: #{tpu_custom_call.1} parent=0 // loop_header_branch
    %13 = sbr.rel (%p11) target = $region8
  $region5: #{tpu_custom_call.1} parent=0 // loop_body
    %s15 = ssub.s32 %s10, 1
    %s16 = ssub.s32 %s10, 2
    %s17 = sadd.s32 %s10, 1
    %s18 = ssub.s32 %s10, %s17
    %p19 = scmp.eq.s32.totalorder %s18, 0
    %s21 = sadd.s32 %s20, 1
    %s22 = scalar_select %p19, %s20, %s21
    %p25 = pneg %p19
    %p26 = scmp.eq.s32.totalorder %s10, 1
    %p27 = por %p25, %p26
    %p28 = scmp.ne.s32.totalorder %s20, %s23
    %p29 = scmp.eq.s32.totalorder %s10, 0
    %p30 = por %p28, %p29
    %p31 = scmp.ne.s32.totalorder %s20, %s23
    %p32 = scmp.eq.s32.totalorder %s15, 1
    %p33 = por %p31, %p32
    %p34 = scmp.ne.s32.totalorder %s23, %s24
    %p35 = scmp.eq.s32.totalorder %s15, 0
    %p36 = por %p34, %p35
    %p37 = scmp.ne.s32.totalorder %s23, %s24
    %p38 = scmp.eq.s32.totalorder %s16, 1
    %p39 = por %p37, %p38
    %p41 = scmp.ne.s32.totalorder %s24, %s40
    %p42 = scmp.eq.s32.totalorder %s16, 0
    %p43 = por %p41, %p42
    %s45 = sadd.s32 %s44, 1
    %p48 = scmp.eq.s32.totalorder %s10, 1
    %p49 = scmp.ne.s32.totalorder %s44, %s46
    %p50 = scmp.eq.s32.totalorder %s10, 0
    %p51 = por %p49, %p50
    %p52 = scmp.ne.s32.totalorder %s44, %s46
    %p53 = scmp.eq.s32.totalorder %s15, 1
    %p54 = por %p52, %p53
    %p55 = scmp.ne.s32.totalorder %s46, %s47
    %p56 = scmp.eq.s32.totalorder %s15, 0
    %p57 = por %p55, %p56
    %p58 = scmp.ne.s32.totalorder %s46, %s47
    %p59 = scmp.eq.s32.totalorder %s16, 1
    %p60 = por %p58, %p59
    %p62 = scmp.ne.s32.totalorder %s47, %s61
    %p63 = scmp.eq.s32.totalorder %s16, 0
    %p64 = por %p62, %p63
    %s66 = sadd.s32 %s65, 1
    %p69 = scmp.eq.s32.totalorder %s10, 1
    %p70 = scmp.ne.s32.totalorder %s65, %s67
    %p71 = scmp.eq.s32.totalorder %s10, 0
    %p72 = por %p70, %p71
    %p73 = scmp.ne.s32.totalorder %s65, %s67
    %p74 = scmp.eq.s32.totalorder %s15, 1
    %p75 = por %p73, %p74
    %p76 = scmp.ne.s32.totalorder %s67, %s68
    %p77 = scmp.eq.s32.totalorder %s15, 0
    %p78 = por %p76, %p77
    %p79 = scmp.ne.s32.totalorder %s67, %s68
    %p80 = scmp.eq.s32.totalorder %s16, 1
    %p81 = por %p79, %p80
    %p83 = scmp.ne.s32.totalorder %s68, %s82
    %p84 = scmp.eq.s32.totalorder %s16, 0
    %p85 = por %p83, %p84
    %s87 = sadd.s32 %s86, 1
    %p90 = scmp.eq.s32.totalorder %s10, 1
    %p91 = scmp.ne.s32.totalorder %s86, %s88
    %p92 = scmp.eq.s32.totalorder %s10, 0
    %p93 = por %p91, %p92
    %p94 = scmp.ne.s32.totalorder %s86, %s88
    %p95 = scmp.eq.s32.totalorder %s15, 1
    %p96 = por %p94, %p95
    %p97 = scmp.ne.s32.totalorder %s88, %s89
    %p98 = scmp.eq.s32.totalorder %s15, 0
    %p99 = por %p97, %p98
    %p100 = scmp.ne.s32.totalorder %s88, %s89
    %p101 = scmp.eq.s32.totalorder %s16, 1
    %p102 = por %p100, %p101
    %p104 = scmp.ne.s32.totalorder %s89, %s103
    %p105 = scmp.eq.s32.totalorder %s16, 0
    %p106 = por %p104, %p105
    %s107 = ssub.s32 %s10, %s17
    %p108 = scmp.eq.s32.totalorder %s107, 0
    %s110 = sadd.s32 %s109, 1
    %s111 = scalar_select %p108, %s109, %s110
    %p114 = pneg %p108
    %p115 = scmp.eq.s32.totalorder %s10, 1
    %p116 = por %p114, %p115
    %p117 = scmp.ne.s32.totalorder %s109, %s112
    %p118 = scmp.eq.s32.totalorder %s10, 0
    %p119 = por %p117, %p118
    %p120 = scmp.ne.s32.totalorder %s109, %s112
    %p121 = scmp.eq.s32.totalorder %s15, 1
    %p122 = por %p120, %p121
    %p123 = scmp.ne.s32.totalorder %s112, %s113
    %p124 = scmp.eq.s32.totalorder %s15, 0
    %p125 = por %p123, %p124
    %p126 = scmp.ne.s32.totalorder %s112, %s113
    %p127 = scmp.eq.s32.totalorder %s16, 1
    %p128 = por %p126, %p127
    %p130 = scmp.ne.s32.totalorder %s113, %s129
    %p131 = scmp.eq.s32.totalorder %s16, 0
    %p132 = por %p130, %p131
    %p133 = scmp.le.s32.totalorder 1, %s10
    %p134 = scmp.lt.s32.totalorder %s10, 3
    %p135 = pnand %p133, %p134
    %p136 = pneg %p135
    // Predicated region
    $region9: #{tpu_custom_call.1} parent=5 // pred_check
      _
    $region10: #{tpu_custom_call.1} parent=5 // pred_check_branch
      %138 = sbr.rel (%p135) target = $region12
    $region11: #{tpu_custom_call.1} parent=5 // pred_region
      %s139 = ssub.s32 %s10, 1
      // Predicated region
      $region13: #{tpu_custom_call.1} parent=11 // pred_check
        %p140 = pneg %p57
      $region14: #{tpu_custom_call.1} parent=11 // pred_check_branch
        %142 = sbr.rel (%p140) target = $region16
      $region15: #{tpu_custom_call.1} parent=11 // pred_region
        _
      $region16: #{tpu_custom_call.1} parent=11 // pred_fallthru
        _
      // Predicated region
      $region17: #{tpu_custom_call.1} parent=11 // pred_check
        %p143 = pneg %p78
      $region18: #{tpu_custom_call.1} parent=11 // pred_check_branch
        %145 = sbr.rel (%p143) target = $region20
      $region19: #{tpu_custom_call.1} parent=11 // pred_region
        _
      $region20: #{tpu_custom_call.1} parent=11 // pred_fallthru
        _
      // Predicated region
      $region21: #{tpu_custom_call.1} parent=11 // pred_check
        %p146 = pneg %p99
      $region22: #{tpu_custom_call.1} parent=11 // pred_check_branch
        %148 = sbr.rel (%p146) target = $region24
      $region23: #{tpu_custom_call.1} parent=11 // pred_region
        _
      $region24: #{tpu_custom_call.1} parent=11 // pred_fallthru
        _
    $region12: #{tpu_custom_call.1} parent=5 // pred_fallthru
      _
    %p149 = scmp.lt.s32.totalorder %s10, 2
    // Predicated region
    $region25: #{tpu_custom_call.1} parent=5 // pred_check
      %p150 = pneg %p149
    $region26: #{tpu_custom_call.1} parent=5 // pred_check_branch
      %152 = sbr.rel (%p150) target = $region28
    $region27: #{tpu_custom_call.1} parent=5 // pred_region
      // Predicated region
      $region29: #{tpu_custom_call.1} parent=27 // pred_check
        %p153 = pneg %p30
      $region30: #{tpu_custom_call.1} parent=27 // pred_check_branch
        %155 = sbr.rel (%p153) target = $region32
      $region31: #{tpu_custom_call.1} parent=27 // pred_region
        %p156 = scmp.lt.s32.totalorder %s10, 1
        %s157 = scalar_select %p156, %s10, 1
        %s158 = smul.addr %s157, 313
        %s159 = smul.addr %s158, 4
        %s160 = scalar_lea.vmem %s0, %s159
      $region32: #{tpu_custom_call.1} parent=27 // pred_fallthru
        _
    $region28: #{tpu_custom_call.1} parent=5 // pred_fallthru
      _
    %p161 = scmp.le.s32.totalorder 1, %s10
    %p162 = scmp.lt.s32.totalorder %s10, 3
    %p163 = pnand %p161, %p162
    %p164 = pneg %p163
    // Predicated region
    $region33: #{tpu_custom_call.1} parent=5 // pred_check
      _
    $region34: #{tpu_custom_call.1} parent=5 // pred_check_branch
      %166 = sbr.rel (%p163) target = $region36
    $region35: #{tpu_custom_call.1} parent=5 // pred_region
      %s167 = ssub.s32 %s10, 1
      %p168 = scmp.lt.s32.totalorder %s15, 1
      %s169 = scalar_select %p168, %s15, 1
      %s170 = smul.addr %s169, 313
      %s171 = smul.addr %s170, 4
      %s172 = scalar_lea.vmem %s0, %s171
      %p173 = pneg %p36
      %p174 = pneg %p33
      %p175 = pneg %p57
      %p176 = pneg %p54
      %p177 = pneg %p78
      %p178 = pneg %p75
      %p179 = pneg %p99
      %p180 = pneg %p96
      %p181 = pneg %p125
      %p182 = pneg %p122
      %p183 = scmp.lt.s32.totalorder %s15, 1
      %s184 = scalar_select %p183, %s15, 1
      %s185 = smul.addr %s184, 313
      %s186 = smul.addr %s185, 4
      %s187 = scalar_lea.vmem %s4, %s186
      %p188 = scmp.lt.s32.totalorder %s15, 1
      %s189 = scalar_select %p188, %s15, 1
      %s190 = smul.addr %s189, 313
      %s191 = smul.addr %s190, 4
      %s192 = scalar_lea.vmem %s0, %s191
      %p193 = scmp.lt.s32.totalorder %s15, 1
      %s194 = scalar_select %p193, %s15, 1
      %s195 = smul.addr %s194, 313
      %s196 = smul.addr %s195, 4
      %s197 = scalar_lea.vmem %s4, %s196
      %v199 = vld [vmem:[%s192] sm:$0xf]
      %v200 = vld [vmem:[%s192 + $0x4] sm:$0xf]
      %v201 = vld [vmem:[%s192 + $0x8] sm:$0xf]
      %v202 = vld [vmem:[%s192 + $0xc] sm:$0xf]
      %v203 = vld [vmem:[%s192 + $0x10] sm:$0xf]
      %v204 = vld [vmem:[%s192 + $0x14] sm:$0xf]
      %v205 = vld [vmem:[%s192 + $0x18] sm:$0xf]
      %v206 = vld [vmem:[%s192 + $0x1c] sm:$0xf]
      %v207 = vld [vmem:[%s192 + $0x20] sm:$0xf]
      %v208 = vld [vmem:[%s192 + $0x24] sm:$0xf]
      %v209 = vld [vmem:[%s192 + $0x28] sm:$0xf]
      %v210 = vld [vmem:[%s192 + $0x2c] sm:$0xf]
      %v211 = vld [vmem:[%s192 + $0x30] sm:$0xf]
      %v212 = vld [vmem:[%s192 + $0x34] sm:$0xf]
      %v213 = vld [vmem:[%s192 + $0x38] sm:$0xf]
      %v214 = vld [vmem:[%s192 + $0x3c] sm:$0xf]
      %v215 = vld [vmem:[%s192 + $0x40] sm:$0xf]
      %v216 = vld [vmem:[%s192 + $0x44] sm:$0xf]
      %v217 = vld [vmem:[%s192 + $0x48] sm:$0xf]
      %v218 = vld [vmem:[%s192 + $0x4c] sm:$0xf]
      %v219 = vld [vmem:[%s192 + $0x50] sm:$0xf]
      %v220 = vld [vmem:[%s192 + $0x54] sm:$0xf]
      %v221 = vld [vmem:[%s192 + $0x58] sm:$0xf]
      %v222 = vld [vmem:[%s192 + $0x5c] sm:$0xf]
      %v223 = vld [vmem:[%s192 + $0x60] sm:$0xf]
      %v224 = vld [vmem:[%s192 + $0x64] sm:$0xf]
      %v225 = vld [vmem:[%s192 + $0x68] sm:$0xf]
      %v226 = vld [vmem:[%s192 + $0x6c] sm:$0xf]
      %v227 = vld [vmem:[%s192 + $0x70] sm:$0xf]
      %v228 = vld [vmem:[%s192 + $0x74] sm:$0xf]
      %v229 = vld [vmem:[%s192 + $0x78] sm:$0xf]
      %v230 = vld [vmem:[%s192 + $0x7c] sm:$0xf]
      %v231 = vld [vmem:[%s192 + $0x80] sm:$0xf]
      %v232 = vld [vmem:[%s192 + $0x84] sm:$0xf]
      %v233 = vld [vmem:[%s192 + $0x88] sm:$0xf]
      %v234 = vld [vmem:[%s192 + $0x8c] sm:$0xf]
      %v235 = vld [vmem:[%s192 + $0x90] sm:$0xf]
      %v236 = vld [vmem:[%s192 + $0x94] sm:$0xf]
      %v237 = vld [vmem:[%s192 + $0x98] sm:$0xf]
      %v238 = vld [vmem:[%s192 + $0x9c] sm:$0xf]
      %v239 = vld [vmem:[%s192 + $0xa0] sm:$0xf]
      %v240 = vld [vmem:[%s192 + $0xa4] sm:$0xf]
      %v241 = vld [vmem:[%s192 + $0xa8] sm:$0xf]
      %v242 = vld [vmem:[%s192 + $0xac] sm:$0xf]
      %v243 = vld [vmem:[%s192 + $0xb0] sm:$0xf]
      %v244 = vld [vmem:[%s192 + $0xb4] sm:$0xf]
      %v245 = vld [vmem:[%s192 + $0xb8] sm:$0xf]
      %v246 = vld [vmem:[%s192 + $0xbc] sm:$0xf]
      %v247 = vld [vmem:[%s192 + $0xc0] sm:$0xf]
      %v248 = vld [vmem:[%s192 + $0xc4] sm:$0xf]
      %v249 = vld [vmem:[%s192 + $0xc8] sm:$0xf]
      %v250 = vld [vmem:[%s192 + $0xcc] sm:$0xf]
      %v251 = vld [vmem:[%s192 + $0xd0] sm:$0xf]
      %v252 = vld [vmem:[%s192 + $0xd4] sm:$0xf]
      %v253 = vld [vmem:[%s192 + $0xd8] sm:$0xf]
      %v254 = vld [vmem:[%s192 + $0xdc] sm:$0xf]
      %v255 = vld [vmem:[%s192 + $0xe0] sm:$0xf]
      %v256 = vld [vmem:[%s192 + $0xe4] sm:$0xf]
      %v257 = vld [vmem:[%s192 + $0xe8] sm:$0xf]
      %v258 = vld [vmem:[%s192 + $0xec] sm:$0xf]
      %v259 = vld [vmem:[%s192 + $0xf0] sm:$0xf]
      %v260 = vld [vmem:[%s192 + $0xf4] sm:$0xf]
      %v261 = vld [vmem:[%s192 + $0xf8] sm:$0xf]
      %v262 = vld [vmem:[%s192 + $0xfc] sm:$0xf]
      %v263 = vld [vmem:[%s192 + $0x100] sm:$0xf]
      %v264 = vld [vmem:[%s192 + $0x104] sm:$0xf]
      %v265 = vld [vmem:[%s192 + $0x108] sm:$0xf]
      %v266 = vld [vmem:[%s192 + $0x10c] sm:$0xf]
      %v267 = vld [vmem:[%s192 + $0x110] sm:$0xf]
      %v268 = vld [vmem:[%s192 + $0x114] sm:$0xf]
      %v269 = vld [vmem:[%s192 + $0x118] sm:$0xf]
      %v270 = vld [vmem:[%s192 + $0x11c] sm:$0xf]
      %v271 = vld [vmem:[%s192 + $0x120] sm:$0xf]
      %v272 = vld [vmem:[%s192 + $0x124] sm:$0xf]
      %v273 = vld [vmem:[%s192 + $0x128] sm:$0xf]
      %v274 = vld [vmem:[%s192 + $0x12c] sm:$0xf]
      %v275 = vld [vmem:[%s192 + $0x130] sm:$0xf]
      %v276 = vld [vmem:[%s192 + $0x134] sm:$0xf]
      %v277 = vld [vmem:[%s192 + $0x138] sm:$0xf]
      %v278 = vld [vmem:[%s192 + $0x13c] sm:$0xf]
      %v279 = vld [vmem:[%s192 + $0x140] sm:$0xf]
      %v280 = vld [vmem:[%s192 + $0x144] sm:$0xf]
      %v281 = vld [vmem:[%s192 + $0x148] sm:$0xf]
      %v282 = vld [vmem:[%s192 + $0x14c] sm:$0xf]
      %v283 = vld [vmem:[%s192 + $0x150] sm:$0xf]
      %v284 = vld [vmem:[%s192 + $0x154] sm:$0xf]
      %v285 = vld [vmem:[%s192 + $0x158] sm:$0xf]
      %v286 = vld [vmem:[%s192 + $0x15c] sm:$0xf]
      %v287 = vld [vmem:[%s192 + $0x160] sm:$0xf]
      %v288 = vld [vmem:[%s192 + $0x164] sm:$0xf]
      %v289 = vld [vmem:[%s192 + $0x168] sm:$0xf]
      %v290 = vld [vmem:[%s192 + $0x16c] sm:$0xf]
      %v291 = vld [vmem:[%s192 + $0x170] sm:$0xf]
      %v292 = vld [vmem:[%s192 + $0x174] sm:$0xf]
      %v293 = vld [vmem:[%s192 + $0x178] sm:$0xf]
      %v294 = vld [vmem:[%s192 + $0x17c] sm:$0xf]
      %v295 = vld [vmem:[%s192 + $0x180] sm:$0xf]
      %v296 = vld [vmem:[%s192 + $0x184] sm:$0xf]
      %v297 = vld [vmem:[%s192 + $0x188] sm:$0xf]
      %v298 = vld [vmem:[%s192 + $0x18c] sm:$0xf]
      %v299 = vld [vmem:[%s192 + $0x190] sm:$0xf]
      %v300 = vld [vmem:[%s192 + $0x194] sm:$0xf]
      %v301 = vld [vmem:[%s192 + $0x198] sm:$0xf]
      %v302 = vld [vmem:[%s192 + $0x19c] sm:$0xf]
      %v303 = vld [vmem:[%s192 + $0x1a0] sm:$0xf]
      %v304 = vld [vmem:[%s192 + $0x1a4] sm:$0xf]
      %v305 = vld [vmem:[%s192 + $0x1a8] sm:$0xf]
      %v306 = vld [vmem:[%s192 + $0x1ac] sm:$0xf]
      %v307 = vld [vmem:[%s192 + $0x1b0] sm:$0xf]
      %v308 = vld [vmem:[%s192 + $0x1b4] sm:$0xf]
      %v309 = vld [vmem:[%s192 + $0x1b8] sm:$0xf]
      %v310 = vld [vmem:[%s192 + $0x1bc] sm:$0xf]
      %v311 = vld [vmem:[%s192 + $0x1c0] sm:$0xf]
      %v312 = vld [vmem:[%s192 + $0x1c4] sm:$0xf]
      %v313 = vld [vmem:[%s192 + $0x1c8] sm:$0xf]
      %v314 = vld [vmem:[%s192 + $0x1cc] sm:$0xf]
      %v315 = vld [vmem:[%s192 + $0x1d0] sm:$0xf]
      %v316 = vld [vmem:[%s192 + $0x1d4] sm:$0xf]
      %v317 = vld [vmem:[%s192 + $0x1d8] sm:$0xf]
      %v318 = vld [vmem:[%s192 + $0x1dc] sm:$0xf]
      %v319 = vld [vmem:[%s192 + $0x1e0] sm:$0xf]
      %v320 = vld [vmem:[%s192 + $0x1e4] sm:$0xf]
      %v321 = vld [vmem:[%s192 + $0x1e8] sm:$0xf]
      %v322 = vld [vmem:[%s192 + $0x1ec] sm:$0xf]
      %v323 = vld [vmem:[%s192 + $0x1f0] sm:$0xf]
      %v324 = vld [vmem:[%s192 + $0x1f4] sm:$0xf]
      %v325 = vld [vmem:[%s192 + $0x1f8] sm:$0xf]
      %v326 = vld [vmem:[%s192 + $0x1fc] sm:$0xf]
      %v327 = vld [vmem:[%s192 + $0x200] sm:$0xf]
      %v328 = vld [vmem:[%s192 + $0x204] sm:$0xf]
      %v329 = vld [vmem:[%s192 + $0x208] sm:$0xf]
      %v330 = vld [vmem:[%s192 + $0x20c] sm:$0xf]
      %v331 = vld [vmem:[%s192 + $0x210] sm:$0xf]
      %v332 = vld [vmem:[%s192 + $0x214] sm:$0xf]
      %v333 = vld [vmem:[%s192 + $0x218] sm:$0xf]
      %v334 = vld [vmem:[%s192 + $0x21c] sm:$0xf]
      %v335 = vld [vmem:[%s192 + $0x220] sm:$0xf]
      %v336 = vld [vmem:[%s192 + $0x224] sm:$0xf]
      %v337 = vld [vmem:[%s192 + $0x228] sm:$0xf]
      %v338 = vld [vmem:[%s192 + $0x22c] sm:$0xf]
      %v339 = vld [vmem:[%s192 + $0x230] sm:$0xf]
      %v340 = vld [vmem:[%s192 + $0x234] sm:$0xf]
      %v341 = vld [vmem:[%s192 + $0x238] sm:$0xf]
      %v342 = vld [vmem:[%s192 + $0x23c] sm:$0xf]
      %v343 = vld [vmem:[%s192 + $0x240] sm:$0xf]
      %v344 = vld [vmem:[%s192 + $0x244] sm:$0xf]
      %v345 = vld [vmem:[%s192 + $0x248] sm:$0xf]
      %v346 = vld [vmem:[%s192 + $0x24c] sm:$0xf]
      %v347 = vld [vmem:[%s192 + $0x250] sm:$0xf]
      %v348 = vld [vmem:[%s192 + $0x254] sm:$0xf]
      %v349 = vld [vmem:[%s192 + $0x258] sm:$0xf]
      %v350 = vld [vmem:[%s192 + $0x25c] sm:$0xf]
      %v351 = vld [vmem:[%s192 + $0x260] sm:$0xf]
      %v352 = vld [vmem:[%s192 + $0x264] sm:$0xf]
      %v353 = vld [vmem:[%s192 + $0x268] sm:$0xf]
      %v354 = vld [vmem:[%s192 + $0x26c] sm:$0xf]
      %v355 = vld [vmem:[%s192 + $0x270] sm:$0xf]
      %v356 = vld [vmem:[%s192 + $0x274] sm:$0xf]
      %v357 = vld [vmem:[%s192 + $0x278] sm:$0xf]
      %v358 = vld [vmem:[%s192 + $0x27c] sm:$0xf]
      %v359 = vld [vmem:[%s192 + $0x280] sm:$0xf]
      %v360 = vld [vmem:[%s192 + $0x284] sm:$0xf]
      %v361 = vld [vmem:[%s192 + $0x288] sm:$0xf]
      %v362 = vld [vmem:[%s192 + $0x28c] sm:$0xf]
      %v363 = vld [vmem:[%s192 + $0x290] sm:$0xf]
      %v364 = vld [vmem:[%s192 + $0x294] sm:$0xf]
      %v365 = vld [vmem:[%s192 + $0x298] sm:$0xf]
      %v366 = vld [vmem:[%s192 + $0x29c] sm:$0xf]
      %v367 = vld [vmem:[%s192 + $0x2a0] sm:$0xf]
      %v368 = vld [vmem:[%s192 + $0x2a4] sm:$0xf]
      %v369 = vld [vmem:[%s192 + $0x2a8] sm:$0xf]
      %v370 = vld [vmem:[%s192 + $0x2ac] sm:$0xf]
      %v371 = vld [vmem:[%s192 + $0x2b0] sm:$0xf]
      %v372 = vld [vmem:[%s192 + $0x2b4] sm:$0xf]
      %v373 = vld [vmem:[%s192 + $0x2b8] sm:$0xf]
      %v374 = vld [vmem:[%s192 + $0x2bc] sm:$0xf]
      %v375 = vld [vmem:[%s192 + $0x2c0] sm:$0xf]
      %v376 = vld [vmem:[%s192 + $0x2c4] sm:$0xf]
      %v377 = vld [vmem:[%s192 + $0x2c8] sm:$0xf]
      %v378 = vld [vmem:[%s192 + $0x2cc] sm:$0xf]
      %v379 = vld [vmem:[%s192 + $0x2d0] sm:$0xf]
      %v380 = vld [vmem:[%s192 + $0x2d4] sm:$0xf]
      %v381 = vld [vmem:[%s192 + $0x2d8] sm:$0xf]
      %v382 = vld [vmem:[%s192 + $0x2dc] sm:$0xf]
      %v383 = vld [vmem:[%s192 + $0x2e0] sm:$0xf]
      %v384 = vld [vmem:[%s192 + $0x2e4] sm:$0xf]
      %v385 = vld [vmem:[%s192 + $0x2e8] sm:$0xf]
      %v386 = vld [vmem:[%s192 + $0x2ec] sm:$0xf]
      %v387 = vld [vmem:[%s192 + $0x2f0] sm:$0xf]
      %v388 = vld [vmem:[%s192 + $0x2f4] sm:$0xf]
      %v389 = vld [vmem:[%s192 + $0x2f8] sm:$0xf]
      %v390 = vld [vmem:[%s192 + $0x2fc] sm:$0xf]
      %v391 = vld [vmem:[%s192 + $0x300] sm:$0xf]
      %v392 = vld [vmem:[%s192 + $0x304] sm:$0xf]
      %v393 = vld [vmem:[%s192 + $0x308] sm:$0xf]
      %v394 = vld [vmem:[%s192 + $0x30c] sm:$0xf]
      %v395 = vld [vmem:[%s192 + $0x310] sm:$0xf]
      %v396 = vld [vmem:[%s192 + $0x314] sm:$0xf]
      %v397 = vld [vmem:[%s192 + $0x318] sm:$0xf]
      %v398 = vld [vmem:[%s192 + $0x31c] sm:$0xf]
      %v399 = vld [vmem:[%s192 + $0x320] sm:$0xf]
      %v400 = vld [vmem:[%s192 + $0x324] sm:$0xf]
      %v401 = vld [vmem:[%s192 + $0x328] sm:$0xf]
      %v402 = vld [vmem:[%s192 + $0x32c] sm:$0xf]
      %v403 = vld [vmem:[%s192 + $0x330] sm:$0xf]
      %v404 = vld [vmem:[%s192 + $0x334] sm:$0xf]
      %v405 = vld [vmem:[%s192 + $0x338] sm:$0xf]
      %v406 = vld [vmem:[%s192 + $0x33c] sm:$0xf]
      %v407 = vld [vmem:[%s192 + $0x340] sm:$0xf]
      %v408 = vld [vmem:[%s192 + $0x344] sm:$0xf]
      %v409 = vld [vmem:[%s192 + $0x348] sm:$0xf]
      %v410 = vld [vmem:[%s192 + $0x34c] sm:$0xf]
      %v411 = vld [vmem:[%s192 + $0x350] sm:$0xf]
      %v412 = vld [vmem:[%s192 + $0x354] sm:$0xf]
      %v413 = vld [vmem:[%s192 + $0x358] sm:$0xf]
      %v414 = vld [vmem:[%s192 + $0x35c] sm:$0xf]
      %v415 = vld [vmem:[%s192 + $0x360] sm:$0xf]
      %v416 = vld [vmem:[%s192 + $0x364] sm:$0xf]
      %v417 = vld [vmem:[%s192 + $0x368] sm:$0xf]
      %v418 = vld [vmem:[%s192 + $0x36c] sm:$0xf]
      %v419 = vld [vmem:[%s192 + $0x370] sm:$0xf]
      %v420 = vld [vmem:[%s192 + $0x374] sm:$0xf]
      %v421 = vld [vmem:[%s192 + $0x378] sm:$0xf]
      %v422 = vld [vmem:[%s192 + $0x37c] sm:$0xf]
      %v423 = vld [vmem:[%s192 + $0x380] sm:$0xf]
      %v424 = vld [vmem:[%s192 + $0x384] sm:$0xf]
      %v425 = vld [vmem:[%s192 + $0x388] sm:$0xf]
      %v426 = vld [vmem:[%s192 + $0x38c] sm:$0xf]
      %v427 = vld [vmem:[%s192 + $0x390] sm:$0xf]
      %v428 = vld [vmem:[%s192 + $0x394] sm:$0xf]
      %v429 = vld [vmem:[%s192 + $0x398] sm:$0xf]
      %v430 = vld [vmem:[%s192 + $0x39c] sm:$0xf]
      %v431 = vld [vmem:[%s192 + $0x3a0] sm:$0xf]
      %v432 = vld [vmem:[%s192 + $0x3a4] sm:$0xf]
      %v433 = vld [vmem:[%s192 + $0x3a8] sm:$0xf]
      %v434 = vld [vmem:[%s192 + $0x3ac] sm:$0xf]
      %v435 = vld [vmem:[%s192 + $0x3b0] sm:$0xf]
      %v436 = vld [vmem:[%s192 + $0x3b4] sm:$0xf]
      %v437 = vld [vmem:[%s192 + $0x3b8] sm:$0xf]
      %v438 = vld [vmem:[%s192 + $0x3bc] sm:$0xf]
      %v439 = vld [vmem:[%s192 + $0x3c0] sm:$0xf]
      %v440 = vld [vmem:[%s192 + $0x3c4] sm:$0xf]
      %v441 = vld [vmem:[%s192 + $0x3c8] sm:$0xf]
      %v442 = vld [vmem:[%s192 + $0x3cc] sm:$0xf]
      %v443 = vld [vmem:[%s192 + $0x3d0] sm:$0xf]
      %v444 = vld [vmem:[%s192 + $0x3d4] sm:$0xf]
      %v445 = vld [vmem:[%s192 + $0x3d8] sm:$0xf]
      %v446 = vld [vmem:[%s192 + $0x3dc] sm:$0xf]
      %v447 = vld [vmem:[%s192 + $0x3e0] sm:$0xf]
      %v448 = vld [vmem:[%s192 + $0x3e4] sm:$0xf]
      %v449 = vld [vmem:[%s192 + $0x3e8] sm:$0xf]
      %v450 = vld [vmem:[%s192 + $0x3ec] sm:$0xf]
      %v451 = vld [vmem:[%s192 + $0x3f0] sm:$0xf]
      %v452 = vld [vmem:[%s192 + $0x3f4] sm:$0xf]
      %v453 = vld [vmem:[%s192 + $0x3f8] sm:$0xf]
      %v454 = vld [vmem:[%s192 + $0x3fc] sm:$0xf]
      %v455 = vld [vmem:[%s192 + $0x400] sm:$0xf]
      %v456 = vld [vmem:[%s192 + $0x404] sm:$0xf]
      %v457 = vld [vmem:[%s192 + $0x408] sm:$0xf]
      %v458 = vld [vmem:[%s192 + $0x40c] sm:$0xf]
      %v459 = vld [vmem:[%s192 + $0x410] sm:$0xf]
      %v460 = vld [vmem:[%s192 + $0x414] sm:$0xf]
      %v461 = vld [vmem:[%s192 + $0x418] sm:$0xf]
      %v462 = vld [vmem:[%s192 + $0x41c] sm:$0xf]
      %v463 = vld [vmem:[%s192 + $0x420] sm:$0xf]
      %v464 = vld [vmem:[%s192 + $0x424] sm:$0xf]
      %v465 = vld [vmem:[%s192 + $0x428] sm:$0xf]
      %v466 = vld [vmem:[%s192 + $0x42c] sm:$0xf]
      %v467 = vld [vmem:[%s192 + $0x430] sm:$0xf]
      %v468 = vld [vmem:[%s192 + $0x434] sm:$0xf]
      %v469 = vld [vmem:[%s192 + $0x438] sm:$0xf]
      %v470 = vld [vmem:[%s192 + $0x43c] sm:$0xf]
      %v471 = vld [vmem:[%s192 + $0x440] sm:$0xf]
      %v472 = vld [vmem:[%s192 + $0x444] sm:$0xf]
      %v473 = vld [vmem:[%s192 + $0x448] sm:$0xf]
      %v474 = vld [vmem:[%s192 + $0x44c] sm:$0xf]
      %v475 = vld [vmem:[%s192 + $0x450] sm:$0xf]
      %v476 = vld [vmem:[%s192 + $0x454] sm:$0xf]
      %v477 = vld [vmem:[%s192 + $0x458] sm:$0xf]
      %v478 = vld [vmem:[%s192 + $0x45c] sm:$0xf]
      %v479 = vld [vmem:[%s192 + $0x460] sm:$0xf]
      %v480 = vld [vmem:[%s192 + $0x464] sm:$0xf]
      %v481 = vld [vmem:[%s192 + $0x468] sm:$0xf]
      %v482 = vld [vmem:[%s192 + $0x46c] sm:$0xf]
      %v483 = vld [vmem:[%s192 + $0x470] sm:$0xf]
      %v484 = vld [vmem:[%s192 + $0x474] sm:$0xf]
      %v485 = vld [vmem:[%s192 + $0x478] sm:$0xf]
      %v486 = vld [vmem:[%s192 + $0x47c] sm:$0xf]
      %v487 = vld [vmem:[%s192 + $0x480] sm:$0xf]
      %v488 = vld [vmem:[%s192 + $0x484] sm:$0xf]
      %v489 = vld [vmem:[%s192 + $0x488] sm:$0xf]
      %v490 = vld [vmem:[%s192 + $0x48c] sm:$0xf]
      %v491 = vld [vmem:[%s192 + $0x490] sm:$0xf]
      %v492 = vld [vmem:[%s192 + $0x494] sm:$0xf]
      %v493 = vld [vmem:[%s192 + $0x498] sm:$0xf]
      %v494 = vld [vmem:[%s192 + $0x49c] sm:$0xf]
      %v495 = vld [vmem:[%s192 + $0x4a0] sm:$0xf]
      %v496 = vld [vmem:[%s192 + $0x4a4] sm:$0xf]
      %v497 = vld [vmem:[%s192 + $0x4a8] sm:$0xf]
      %v498 = vld [vmem:[%s192 + $0x4ac] sm:$0xf]
      %v499 = vld [vmem:[%s192 + $0x4b0] sm:$0xf]
      %v500 = vld [vmem:[%s192 + $0x4b4] sm:$0xf]
      %v501 = vld [vmem:[%s192 + $0x4b8] sm:$0xf]
      %v502 = vld [vmem:[%s192 + $0x4bc] sm:$0xf]
      %v503 = vld [vmem:[%s192 + $0x4c0] sm:$0xf]
      %v504 = vld [vmem:[%s192 + $0x4c4] sm:$0xf]
      %v505 = vld [vmem:[%s192 + $0x4c8] sm:$0xf]
      %v506 = vld [vmem:[%s192 + $0x4cc] sm:$0xf]
      %v507 = vld [vmem:[%s192 + $0x4d0] sm:$0xf]
      %v508 = vld [vmem:[%s192 + $0x4d4] sm:$0xf]
      %v509 = vld [vmem:[%s192 + $0x4d8] sm:$0xf]
      %v510 = vld [vmem:[%s192 + $0x4dc] sm:$0xf]
      %v511 = vld [vmem:[%s192 + $0x4e0] sm:$0x3]
      %v512 = vld [vmem:[%s1] sm:$0xf]
      %v513 = vld [vmem:[%s1 + $0x4] sm:$0xf]
      %v514 = vld [vmem:[%s1 + $0x8] sm:$0xf]
      %v515 = vld [vmem:[%s1 + $0xc] sm:$0x3]
      %v829 = vunpack.c.l.b16 %v199
      %v830 = vunpack.c.l.b16 %v200
      %v831 = vunpack.c.l.b16 %v201
      %v832 = vunpack.c.l.b16 %v202
      %v833 = vunpack.c.l.b16 %v203
      %v834 = vunpack.c.l.b16 %v204
      %v835 = vunpack.c.l.b16 %v205
      %v836 = vunpack.c.l.b16 %v206
      %v837 = vunpack.c.l.b16 %v207
      %v838 = vunpack.c.l.b16 %v208
      %v839 = vunpack.c.l.b16 %v209
      %v840 = vunpack.c.l.b16 %v210
      %v841 = vunpack.c.l.b16 %v211
      %v842 = vunpack.c.l.b16 %v212
      %v843 = vunpack.c.l.b16 %v213
      %v844 = vunpack.c.l.b16 %v214
      %v845 = vunpack.c.l.b16 %v215
      %v846 = vunpack.c.l.b16 %v216
      %v847 = vunpack.c.l.b16 %v217
      %v848 = vunpack.c.l.b16 %v218
      %v849 = vunpack.c.l.b16 %v219
      %v850 = vunpack.c.l.b16 %v220
      %v851 = vunpack.c.l.b16 %v221
      %v852 = vunpack.c.l.b16 %v222
      %v853 = vunpack.c.l.b16 %v223
      %v854 = vunpack.c.l.b16 %v224
      %v855 = vunpack.c.l.b16 %v225
      %v856 = vunpack.c.l.b16 %v226
      %v857 = vunpack.c.l.b16 %v227
      %v858 = vunpack.c.l.b16 %v228
      %v859 = vunpack.c.l.b16 %v229
      %v860 = vunpack.c.l.b16 %v230
      %v861 = vunpack.c.l.b16 %v231
      %v862 = vunpack.c.l.b16 %v232
      %v863 = vunpack.c.l.b16 %v233
      %v864 = vunpack.c.l.b16 %v234
      %v865 = vunpack.c.l.b16 %v235
      %v866 = vunpack.c.l.b16 %v236
      %v867 = vunpack.c.l.b16 %v237
      %v868 = vunpack.c.l.b16 %v238
      %v869 = vunpack.c.l.b16 %v239
      %v870 = vunpack.c.l.b16 %v240
      %v871 = vunpack.c.l.b16 %v241
      %v872 = vunpack.c.l.b16 %v242
      %v873 = vunpack.c.l.b16 %v243
      %v874 = vunpack.c.l.b16 %v244
      %v875 = vunpack.c.l.b16 %v245
      %v876 = vunpack.c.l.b16 %v246
      %v877 = vunpack.c.l.b16 %v247
      %v878 = vunpack.c.l.b16 %v248
      %v879 = vunpack.c.l.b16 %v249
      %v880 = vunpack.c.l.b16 %v250
      %v881 = vunpack.c.l.b16 %v251
      %v882 = vunpack.c.l.b16 %v252
      %v883 = vunpack.c.l.b16 %v253
      %v884 = vunpack.c.l.b16 %v254
      %v885 = vunpack.c.l.b16 %v255
      %v886 = vunpack.c.l.b16 %v256
      %v887 = vunpack.c.l.b16 %v257
      %v888 = vunpack.c.l.b16 %v258
      %v889 = vunpack.c.l.b16 %v259
      %v890 = vunpack.c.l.b16 %v260
      %v891 = vunpack.c.l.b16 %v261
      %v892 = vunpack.c.l.b16 %v262
      %v893 = vunpack.c.l.b16 %v263
      %v894 = vunpack.c.l.b16 %v264
      %v895 = vunpack.c.l.b16 %v265
      %v896 = vunpack.c.l.b16 %v266
      %v897 = vunpack.c.l.b16 %v267
      %v898 = vunpack.c.l.b16 %v268
      %v899 = vunpack.c.l.b16 %v269
      %v900 = vunpack.c.l.b16 %v270
      %v901 = vunpack.c.l.b16 %v271
      %v902 = vunpack.c.l.b16 %v272
      %v903 = vunpack.c.l.b16 %v273
      %v904 = vunpack.c.l.b16 %v274
      %v905 = vunpack.c.l.b16 %v275
      %v906 = vunpack.c.l.b16 %v276
      %v907 = vunpack.c.l.b16 %v277
      %v908 = vunpack.c.l.b16 %v278
      %v909 = vunpack.c.l.b16 %v279
      %v910 = vunpack.c.l.b16 %v280
      %v911 = vunpack.c.l.b16 %v281
      %v912 = vunpack.c.l.b16 %v282
      %v913 = vunpack.c.l.b16 %v283
      %v914 = vunpack.c.l.b16 %v284
      %v915 = vunpack.c.l.b16 %v285
      %v916 = vunpack.c.l.b16 %v286
      %v917 = vunpack.c.l.b16 %v287
      %v918 = vunpack.c.l.b16 %v288
      %v919 = vunpack.c.l.b16 %v289
      %v920 = vunpack.c.l.b16 %v290
      %v921 = vunpack.c.l.b16 %v291
      %v922 = vunpack.c.l.b16 %v292
      %v923 = vunpack.c.l.b16 %v293
      %v924 = vunpack.c.l.b16 %v294
      %v925 = vunpack.c.l.b16 %v295
      %v926 = vunpack.c.l.b16 %v296
      %v927 = vunpack.c.l.b16 %v297
      %v928 = vunpack.c.l.b16 %v298
      %v929 = vunpack.c.l.b16 %v299
      %v930 = vunpack.c.l.b16 %v300
      %v931 = vunpack.c.l.b16 %v301
      %v932 = vunpack.c.l.b16 %v302
      %v933 = vunpack.c.l.b16 %v303
      %v934 = vunpack.c.l.b16 %v304
      %v935 = vunpack.c.l.b16 %v305
      %v936 = vunpack.c.l.b16 %v306
      %v937 = vunpack.c.l.b16 %v307
      %v938 = vunpack.c.l.b16 %v308
      %v939 = vunpack.c.l.b16 %v309
      %v940 = vunpack.c.l.b16 %v310
      %v941 = vunpack.c.l.b16 %v311
      %v942 = vunpack.c.l.b16 %v312
      %v943 = vunpack.c.l.b16 %v313
      %v944 = vunpack.c.l.b16 %v314
      %v945 = vunpack.c.l.b16 %v315
      %v946 = vunpack.c.l.b16 %v316
      %v947 = vunpack.c.l.b16 %v317
      %v948 = vunpack.c.l.b16 %v318
      %v949 = vunpack.c.l.b16 %v319
      %v950 = vunpack.c.l.b16 %v320
      %v951 = vunpack.c.l.b16 %v321
      %v952 = vunpack.c.l.b16 %v322
      %v953 = vunpack.c.l.b16 %v323
      %v954 = vunpack.c.l.b16 %v324
      %v955 = vunpack.c.l.b16 %v325
      %v956 = vunpack.c.l.b16 %v326
      %v957 = vunpack.c.l.b16 %v327
      %v958 = vunpack.c.l.b16 %v328
      %v959 = vunpack.c.l.b16 %v329
      %v960 = vunpack.c.l.b16 %v330
      %v961 = vunpack.c.l.b16 %v331
      %v962 = vunpack.c.l.b16 %v332
      %v963 = vunpack.c.l.b16 %v333
      %v964 = vunpack.c.l.b16 %v334
      %v965 = vunpack.c.l.b16 %v335
      %v966 = vunpack.c.l.b16 %v336
      %v967 = vunpack.c.l.b16 %v337
      %v968 = vunpack.c.l.b16 %v338
      %v969 = vunpack.c.l.b16 %v339
      %v970 = vunpack.c.l.b16 %v340
      %v971 = vunpack.c.l.b16 %v341
      %v972 = vunpack.c.l.b16 %v342
      %v973 = vunpack.c.l.b16 %v343
      %v974 = vunpack.c.l.b16 %v344
      %v975 = vunpack.c.l.b16 %v345
      %v976 = vunpack.c.l.b16 %v346
      %v977 = vunpack.c.l.b16 %v347
      %v978 = vunpack.c.l.b16 %v348
      %v979 = vunpack.c.l.b16 %v349
      %v980 = vunpack.c.l.b16 %v350
      %v981 = vunpack.c.l.b16 %v351
      %v982 = vunpack.c.l.b16 %v352
      %v983 = vunpack.c.l.b16 %v353
      %v984 = vunpack.c.l.b16 %v354
      %v985 = vunpack.c.l.b16 %v355
      %v986 = vunpack.c.l.b16 %v356
      %v987 = vunpack.c.l.b16 %v357
      %v988 = vunpack.c.l.b16 %v358
      %v989 = vunpack.c.l.b16 %v359
      %v990 = vunpack.c.l.b16 %v360
      %v991 = vunpack.c.l.b16 %v361
      %v992 = vunpack.c.l.b16 %v362
      %v993 = vunpack.c.l.b16 %v363
      %v994 = vunpack.c.l.b16 %v364
      %v995 = vunpack.c.l.b16 %v365
      %v996 = vunpack.c.l.b16 %v366
      %v997 = vunpack.c.l.b16 %v367
      %v998 = vunpack.c.l.b16 %v368
      %v999 = vunpack.c.l.b16 %v369
      %v1000 = vunpack.c.l.b16 %v370
      %v1001 = vunpack.c.l.b16 %v371
      %v1002 = vunpack.c.l.b16 %v372
      %v1003 = vunpack.c.l.b16 %v373
      %v1004 = vunpack.c.l.b16 %v374
      %v1005 = vunpack.c.l.b16 %v375
      %v1006 = vunpack.c.l.b16 %v376
      %v1007 = vunpack.c.l.b16 %v377
      %v1008 = vunpack.c.l.b16 %v378
      %v1009 = vunpack.c.l.b16 %v379
      %v1010 = vunpack.c.l.b16 %v380
      %v1011 = vunpack.c.l.b16 %v381
      %v1012 = vunpack.c.l.b16 %v382
      %v1013 = vunpack.c.l.b16 %v383
      %v1014 = vunpack.c.l.b16 %v384
      %v1015 = vunpack.c.l.b16 %v385
      %v1016 = vunpack.c.l.b16 %v386
      %v1017 = vunpack.c.l.b16 %v387
      %v1018 = vunpack.c.l.b16 %v388
      %v1019 = vunpack.c.l.b16 %v389
      %v1020 = vunpack.c.l.b16 %v390
      %v1021 = vunpack.c.l.b16 %v391
      %v1022 = vunpack.c.l.b16 %v392
      %v1023 = vunpack.c.l.b16 %v393
      %v1024 = vunpack.c.l.b16 %v394
      %v1025 = vunpack.c.l.b16 %v395
      %v1026 = vunpack.c.l.b16 %v396
      %v1027 = vunpack.c.l.b16 %v397
      %v1028 = vunpack.c.l.b16 %v398
      %v1029 = vunpack.c.l.b16 %v399
      %v1030 = vunpack.c.l.b16 %v400
      %v1031 = vunpack.c.l.b16 %v401
      %v1032 = vunpack.c.l.b16 %v402
      %v1033 = vunpack.c.l.b16 %v403
      %v1034 = vunpack.c.l.b16 %v404
      %v1035 = vunpack.c.l.b16 %v405
      %v1036 = vunpack.c.l.b16 %v406
      %v1037 = vunpack.c.l.b16 %v407
      %v1038 = vunpack.c.l.b16 %v408
      %v1039 = vunpack.c.l.b16 %v409
      %v1040 = vunpack.c.l.b16 %v410
      %v1041 = vunpack.c.l.b16 %v411
      %v1042 = vunpack.c.l.b16 %v412
      %v1043 = vunpack.c.l.b16 %v413
      %v1044 = vunpack.c.l.b16 %v414
      %v1045 = vunpack.c.l.b16 %v415
      %v1046 = vunpack.c.l.b16 %v416
      %v1047 = vunpack.c.l.b16 %v417
      %v1048 = vunpack.c.l.b16 %v418
      %v1049 = vunpack.c.l.b16 %v419
      %v1050 = vunpack.c.l.b16 %v420
      %v1051 = vunpack.c.l.b16 %v421
      %v1052 = vunpack.c.l.b16 %v422
      %v1053 = vunpack.c.l.b16 %v423
      %v1054 = vunpack.c.l.b16 %v424
      %v1055 = vunpack.c.l.b16 %v425
      %v1056 = vunpack.c.l.b16 %v426
      %v1057 = vunpack.c.l.b16 %v427
      %v1058 = vunpack.c.l.b16 %v428
      %v1059 = vunpack.c.l.b16 %v429
      %v1060 = vunpack.c.l.b16 %v430
      %v1061 = vunpack.c.l.b16 %v431
      %v1062 = vunpack.c.l.b16 %v432
      %v1063 = vunpack.c.l.b16 %v433
      %v1064 = vunpack.c.l.b16 %v434
      %v1065 = vunpack.c.l.b16 %v435
      %v1066 = vunpack.c.l.b16 %v436
      %v1067 = vunpack.c.l.b16 %v437
      %v1068 = vunpack.c.l.b16 %v438
      %v1069 = vunpack.c.l.b16 %v439
      %v1070 = vunpack.c.l.b16 %v440
      %v1071 = vunpack.c.l.b16 %v441
      %v1072 = vunpack.c.l.b16 %v442
      %v1073 = vunpack.c.l.b16 %v443
      %v1074 = vunpack.c.l.b16 %v444
      %v1075 = vunpack.c.l.b16 %v445
      %v1076 = vunpack.c.l.b16 %v446
      %v1077 = vunpack.c.l.b16 %v447
      %v1078 = vunpack.c.l.b16 %v448
      %v1079 = vunpack.c.l.b16 %v449
      %v1080 = vunpack.c.l.b16 %v450
      %v1081 = vunpack.c.l.b16 %v451
      %v1082 = vunpack.c.l.b16 %v452
      %v1083 = vunpack.c.l.b16 %v453
      %v1084 = vunpack.c.l.b16 %v454
      %v1085 = vunpack.c.l.b16 %v455
      %v1086 = vunpack.c.l.b16 %v456
      %v1087 = vunpack.c.l.b16 %v457
      %v1088 = vunpack.c.l.b16 %v458
      %v1089 = vunpack.c.l.b16 %v459
      %v1090 = vunpack.c.l.b16 %v460
      %v1091 = vunpack.c.l.b16 %v461
      %v1092 = vunpack.c.l.b16 %v462
      %v1093 = vunpack.c.l.b16 %v463
      %v1094 = vunpack.c.l.b16 %v464
      %v1095 = vunpack.c.l.b16 %v465
      %v1096 = vunpack.c.l.b16 %v466
      %v1097 = vunpack.c.l.b16 %v467
      %v1098 = vunpack.c.l.b16 %v468
      %v1099 = vunpack.c.l.b16 %v469
      %v1100 = vunpack.c.l.b16 %v470
      %v1101 = vunpack.c.l.b16 %v471
      %v1102 = vunpack.c.l.b16 %v472
      %v1103 = vunpack.c.l.b16 %v473
      %v1104 = vunpack.c.l.b16 %v474
      %v1105 = vunpack.c.l.b16 %v475
      %v1106 = vunpack.c.l.b16 %v476
      %v1107 = vunpack.c.l.b16 %v477
      %v1108 = vunpack.c.l.b16 %v478
      %v1109 = vunpack.c.l.b16 %v479
      %v1110 = vunpack.c.l.b16 %v480
      %v1111 = vunpack.c.l.b16 %v481
      %v1112 = vunpack.c.l.b16 %v482
      %v1113 = vunpack.c.l.b16 %v483
      %v1114 = vunpack.c.l.b16 %v484
      %v1115 = vunpack.c.l.b16 %v485
      %v1116 = vunpack.c.l.b16 %v486
      %v1117 = vunpack.c.l.b16 %v487
      %v1118 = vunpack.c.l.b16 %v488
      %v1119 = vunpack.c.l.b16 %v489
      %v1120 = vunpack.c.l.b16 %v490
      %v1121 = vunpack.c.l.b16 %v491
      %v1122 = vunpack.c.l.b16 %v492
      %v1123 = vunpack.c.l.b16 %v493
      %v1124 = vunpack.c.l.b16 %v494
      %v1125 = vunpack.c.l.b16 %v495
      %v1126 = vunpack.c.l.b16 %v496
      %v1127 = vunpack.c.l.b16 %v497
      %v1128 = vunpack.c.l.b16 %v498
      %v1129 = vunpack.c.l.b16 %v499
      %v1130 = vunpack.c.l.b16 %v500
      %v1131 = vunpack.c.l.b16 %v501
      %v1132 = vunpack.c.l.b16 %v502
      %v1133 = vunpack.c.l.b16 %v503
      %v1134 = vunpack.c.l.b16 %v504
      %v1135 = vunpack.c.l.b16 %v505
      %v1136 = vunpack.c.l.b16 %v506
      %v1137 = vunpack.c.l.b16 %v507
      %v1138 = vunpack.c.l.b16 %v508
      %v1139 = vunpack.c.l.b16 %v509
      %v1140 = vunpack.c.l.b16 %v510
      %v1141 = vunpack.c.l.b16 %v511
      %v1142 = vpack.c.b16 %v830, %v829
      %v1143 = vpack.c.b16 %v832, %v831
      %v1144 = vpack.c.b16 %v834, %v833
      %v1145 = vpack.c.b16 %v836, %v835
      %v1146 = vpack.c.b16 %v838, %v837
      %v1147 = vpack.c.b16 %v840, %v839
      %v1148 = vpack.c.b16 %v842, %v841
      %v1149 = vpack.c.b16 %v844, %v843
      %v1150 = vpack.c.b16 %v846, %v845
      %v1151 = vpack.c.b16 %v848, %v847
      %v1152 = vpack.c.b16 %v850, %v849
      %v1153 = vpack.c.b16 %v852, %v851
      %v1154 = vpack.c.b16 %v854, %v853
      %v1155 = vpack.c.b16 %v856, %v855
      %v1156 = vpack.c.b16 %v858, %v857
      %v1157 = vpack.c.b16 %v860, %v859
      %v1158 = vpack.c.b16 %v862, %v861
      %v1159 = vpack.c.b16 %v864, %v863
      %v1160 = vpack.c.b16 %v866, %v865
      %v1161 = vpack.c.b16 %v868, %v867
      %v1162 = vpack.c.b16 %v870, %v869
      %v1163 = vpack.c.b16 %v872, %v871
      %v1164 = vpack.c.b16 %v874, %v873
      %v1165 = vpack.c.b16 %v876, %v875
      %v1166 = vpack.c.b16 %v878, %v877
      %v1167 = vpack.c.b16 %v880, %v879
      %v1168 = vpack.c.b16 %v882, %v881
      %v1169 = vpack.c.b16 %v884, %v883
      %v1170 = vpack.c.b16 %v886, %v885
      %v1171 = vpack.c.b16 %v888, %v887
      %v1172 = vpack.c.b16 %v890, %v889
      %v1173 = vpack.c.b16 %v892, %v891
      %v1174 = vpack.c.b16 %v894, %v893
      %v1175 = vpack.c.b16 %v896, %v895
      %v1176 = vpack.c.b16 %v898, %v897
      %v1177 = vpack.c.b16 %v900, %v899
      %v1178 = vpack.c.b16 %v902, %v901
      %v1179 = vpack.c.b16 %v904, %v903
      %v1180 = vpack.c.b16 %v906, %v905
      %v1181 = vpack.c.b16 %v908, %v907
      %v1182 = vpack.c.b16 %v910, %v909
      %v1183 = vpack.c.b16 %v912, %v911
      %v1184 = vpack.c.b16 %v914, %v913
      %v1185 = vpack.c.b16 %v916, %v915
      %v1186 = vpack.c.b16 %v918, %v917
      %v1187 = vpack.c.b16 %v920, %v919
      %v1188 = vpack.c.b16 %v922, %v921
      %v1189 = vpack.c.b16 %v924, %v923
      %v1190 = vpack.c.b16 %v926, %v925
      %v1191 = vpack.c.b16 %v928, %v927
      %v1192 = vpack.c.b16 %v930, %v929
      %v1193 = vpack.c.b16 %v932, %v931
      %v1194 = vpack.c.b16 %v934, %v933
      %v1195 = vpack.c.b16 %v936, %v935
      %v1196 = vpack.c.b16 %v938, %v937
      %v1197 = vpack.c.b16 %v940, %v939
      %v1198 = vpack.c.b16 %v942, %v941
      %v1199 = vpack.c.b16 %v944, %v943
      %v1200 = vpack.c.b16 %v946, %v945
      %v1201 = vpack.c.b16 %v948, %v947
      %v1202 = vpack.c.b16 %v950, %v949
      %v1203 = vpack.c.b16 %v952, %v951
      %v1204 = vpack.c.b16 %v954, %v953
      %v1205 = vpack.c.b16 %v956, %v955
      %v1206 = vpack.c.b16 %v958, %v957
      %v1207 = vpack.c.b16 %v960, %v959
      %v1208 = vpack.c.b16 %v962, %v961
      %v1209 = vpack.c.b16 %v964, %v963
      %v1210 = vpack.c.b16 %v966, %v965
      %v1211 = vpack.c.b16 %v968, %v967
      %v1212 = vpack.c.b16 %v970, %v969
      %v1213 = vpack.c.b16 %v972, %v971
      %v1214 = vpack.c.b16 %v974, %v973
      %v1215 = vpack.c.b16 %v976, %v975
      %v1216 = vpack.c.b16 %v978, %v977
      %v1217 = vpack.c.b16 %v980, %v979
      %v1218 = vpack.c.b16 %v982, %v981
      %v1219 = vpack.c.b16 %v984, %v983
      %v1220 = vpack.c.b16 %v986, %v985
      %v1221 = vpack.c.b16 %v988, %v987
      %v1222 = vpack.c.b16 %v990, %v989
      %v1223 = vpack.c.b16 %v992, %v991
      %v1224 = vpack.c.b16 %v994, %v993
      %v1225 = vpack.c.b16 %v996, %v995
      %v1226 = vpack.c.b16 %v998, %v997
      %v1227 = vpack.c.b16 %v1000, %v999
      %v1228 = vpack.c.b16 %v1002, %v1001
      %v1229 = vpack.c.b16 %v1004, %v1003
      %v1230 = vpack.c.b16 %v1006, %v1005
      %v1231 = vpack.c.b16 %v1008, %v1007
      %v1232 = vpack.c.b16 %v1010, %v1009
      %v1233 = vpack.c.b16 %v1012, %v1011
      %v1234 = vpack.c.b16 %v1014, %v1013
      %v1235 = vpack.c.b16 %v1016, %v1015
      %v1236 = vpack.c.b16 %v1018, %v1017
      %v1237 = vpack.c.b16 %v1020, %v1019
      %v1238 = vpack.c.b16 %v1022, %v1021
      %v1239 = vpack.c.b16 %v1024, %v1023
      %v1240 = vpack.c.b16 %v1026, %v1025
      %v1241 = vpack.c.b16 %v1028, %v1027
      %v1242 = vpack.c.b16 %v1030, %v1029
      %v1243 = vpack.c.b16 %v1032, %v1031
      %v1244 = vpack.c.b16 %v1034, %v1033
      %v1245 = vpack.c.b16 %v1036, %v1035
      %v1246 = vpack.c.b16 %v1038, %v1037
      %v1247 = vpack.c.b16 %v1040, %v1039
      %v1248 = vpack.c.b16 %v1042, %v1041
      %v1249 = vpack.c.b16 %v1044, %v1043
      %v1250 = vpack.c.b16 %v1046, %v1045
      %v1251 = vpack.c.b16 %v1048, %v1047
      %v1252 = vpack.c.b16 %v1050, %v1049
      %v1253 = vpack.c.b16 %v1052, %v1051
      %v1254 = vpack.c.b16 %v1054, %v1053
      %v1255 = vpack.c.b16 %v1056, %v1055
      %v1256 = vpack.c.b16 %v1058, %v1057
      %v1257 = vpack.c.b16 %v1060, %v1059
      %v1258 = vpack.c.b16 %v1062, %v1061
      %v1259 = vpack.c.b16 %v1064, %v1063
      %v1260 = vpack.c.b16 %v1066, %v1065
      %v1261 = vpack.c.b16 %v1068, %v1067
      %v1262 = vpack.c.b16 %v1070, %v1069
      %v1263 = vpack.c.b16 %v1072, %v1071
      %v1264 = vpack.c.b16 %v1074, %v1073
      %v1265 = vpack.c.b16 %v1076, %v1075
      %v1266 = vpack.c.b16 %v1078, %v1077
      %v1267 = vpack.c.b16 %v1080, %v1079
      %v1268 = vpack.c.b16 %v1082, %v1081
      %v1269 = vpack.c.b16 %v1084, %v1083
      %v1270 = vpack.c.b16 %v1086, %v1085
      %v1271 = vpack.c.b16 %v1088, %v1087
      %v1272 = vpack.c.b16 %v1090, %v1089
      %v1273 = vpack.c.b16 %v1092, %v1091
      %v1274 = vpack.c.b16 %v1094, %v1093
      %v1275 = vpack.c.b16 %v1096, %v1095
      %v1276 = vpack.c.b16 %v1098, %v1097
      %v1277 = vpack.c.b16 %v1100, %v1099
      %v1278 = vpack.c.b16 %v1102, %v1101
      %v1279 = vpack.c.b16 %v1104, %v1103
      %v1280 = vpack.c.b16 %v1106, %v1105
      %v1281 = vpack.c.b16 %v1108, %v1107
      %v1282 = vpack.c.b16 %v1110, %v1109
      %v1283 = vpack.c.b16 %v1112, %v1111
      %v1284 = vpack.c.b16 %v1114, %v1113
      %v1285 = vpack.c.b16 %v1116, %v1115
      %v1286 = vpack.c.b16 %v1118, %v1117
      %v1287 = vpack.c.b16 %v1120, %v1119
      %v1288 = vpack.c.b16 %v1122, %v1121
      %v1289 = vpack.c.b16 %v1124, %v1123
      %v1290 = vpack.c.b16 %v1126, %v1125
      %v1291 = vpack.c.b16 %v1128, %v1127
      %v1292 = vpack.c.b16 %v1130, %v1129
      %v1293 = vpack.c.b16 %v1132, %v1131
      %v1294 = vpack.c.b16 %v1134, %v1133
      %v1295 = vpack.c.b16 %v1136, %v1135
      %v1296 = vpack.c.b16 %v1138, %v1137
      %v1297 = vpack.c.b16 %v1140, %v1139
      %v1298 = vpack.c.b16 %v1141, %v1141
      %v1303 = vunpack.c.l.b16 %v512
      %v1304 = vunpack.c.l.b16 %v513
      %v1305 = vunpack.c.l.b16 %v514
      %v1306 = vunpack.c.l.b16 %v515
      %v1307 = vpack.c.b16 %v1304, %v1303
      %v1308 = vpack.c.b16 %v1306, %v1305
      %vm1310 = vcmask 220160
      %v1312 = vsel %vm1310, %v1142, 0
      %v1315 = vsel %vm1310, %v1143, 0
      %v1318 = vsel %vm1310, %v1144, 0
      %v1321 = vsel %vm1310, %v1145, 0
      %v1324 = vsel %vm1310, %v1146, 0
      %v1327 = vsel %vm1310, %v1147, 0
      %v1330 = vsel %vm1310, %v1148, 0
      %v1333 = vsel %vm1310, %v1149, 0
      %v1336 = vsel %vm1310, %v1150, 0
      %v1339 = vsel %vm1310, %v1151, 0
      %v1342 = vsel %vm1310, %v1152, 0
      %v1345 = vsel %vm1310, %v1153, 0
      %v1348 = vsel %vm1310, %v1154, 0
      %v1351 = vsel %vm1310, %v1155, 0
      %v1354 = vsel %vm1310, %v1156, 0
      %v1357 = vsel %vm1310, %v1157, 0
      %v1360 = vsel %vm1310, %v1158, 0
      %v1363 = vsel %vm1310, %v1159, 0
      %v1366 = vsel %vm1310, %v1160, 0
      %v1369 = vsel %vm1310, %v1161, 0
      %v1372 = vsel %vm1310, %v1162, 0
      %v1375 = vsel %vm1310, %v1163, 0
      %v1378 = vsel %vm1310, %v1164, 0
      %v1381 = vsel %vm1310, %v1165, 0
      %v1384 = vsel %vm1310, %v1166, 0
      %v1387 = vsel %vm1310, %v1167, 0
      %v1390 = vsel %vm1310, %v1168, 0
      %v1393 = vsel %vm1310, %v1169, 0
      %v1396 = vsel %vm1310, %v1170, 0
      %v1399 = vsel %vm1310, %v1171, 0
      %v1402 = vsel %vm1310, %v1172, 0
      %v1405 = vsel %vm1310, %v1173, 0
      %v1408 = vsel %vm1310, %v1174, 0
      %v1411 = vsel %vm1310, %v1175, 0
      %v1414 = vsel %vm1310, %v1176, 0
      %v1417 = vsel %vm1310, %v1177, 0
      %v1420 = vsel %vm1310, %v1178, 0
      %v1423 = vsel %vm1310, %v1179, 0
      %v1426 = vsel %vm1310, %v1180, 0
      %v1429 = vsel %vm1310, %v1181, 0
      %v1432 = vsel %vm1310, %v1182, 0
      %v1435 = vsel %vm1310, %v1183, 0
      %v1438 = vsel %vm1310, %v1184, 0
      %v1441 = vsel %vm1310, %v1185, 0
      %v1444 = vsel %vm1310, %v1186, 0
      %v1447 = vsel %vm1310, %v1187, 0
      %v1450 = vsel %vm1310, %v1188, 0
      %v1453 = vsel %vm1310, %v1189, 0
      %v1456 = vsel %vm1310, %v1190, 0
      %v1459 = vsel %vm1310, %v1191, 0
      %v1462 = vsel %vm1310, %v1192, 0
      %v1465 = vsel %vm1310, %v1193, 0
      %v1468 = vsel %vm1310, %v1194, 0
      %v1471 = vsel %vm1310, %v1195, 0
      %v1474 = vsel %vm1310, %v1196, 0
      %v1477 = vsel %vm1310, %v1197, 0
      %v1480 = vsel %vm1310, %v1198, 0
      %v1483 = vsel %vm1310, %v1199, 0
      %v1486 = vsel %vm1310, %v1200, 0
      %v1489 = vsel %vm1310, %v1201, 0
      %v1492 = vsel %vm1310, %v1202, 0
      %v1495 = vsel %vm1310, %v1203, 0
      %v1498 = vsel %vm1310, %v1204, 0
      %v1501 = vsel %vm1310, %v1205, 0
      %v1504 = vsel %vm1310, %v1206, 0
      %v1507 = vsel %vm1310, %v1207, 0
      %v1510 = vsel %vm1310, %v1208, 0
      %v1513 = vsel %vm1310, %v1209, 0
      %v1516 = vsel %vm1310, %v1210, 0
      %v1519 = vsel %vm1310, %v1211, 0
      %v1522 = vsel %vm1310, %v1212, 0
      %v1525 = vsel %vm1310, %v1213, 0
      %v1528 = vsel %vm1310, %v1214, 0
      %v1531 = vsel %vm1310, %v1215, 0
      %v1534 = vsel %vm1310, %v1216, 0
      %v1537 = vsel %vm1310, %v1217, 0
      %v1540 = vsel %vm1310, %v1218, 0
      %v1543 = vsel %vm1310, %v1219, 0
      %v1546 = vsel %vm1310, %v1220, 0
      %v1549 = vsel %vm1310, %v1221, 0
      %v1552 = vsel %vm1310, %v1222, 0
      %v1555 = vsel %vm1310, %v1223, 0
      %v1558 = vsel %vm1310, %v1224, 0
      %v1561 = vsel %vm1310, %v1225, 0
      %v1564 = vsel %vm1310, %v1226, 0
      %v1567 = vsel %vm1310, %v1227, 0
      %v1570 = vsel %vm1310, %v1228, 0
      %v1573 = vsel %vm1310, %v1229, 0
      %v1576 = vsel %vm1310, %v1230, 0
      %v1579 = vsel %vm1310, %v1231, 0
      %v1582 = vsel %vm1310, %v1232, 0
      %v1585 = vsel %vm1310, %v1233, 0
      %v1588 = vsel %vm1310, %v1234, 0
      %v1591 = vsel %vm1310, %v1235, 0
      %v1594 = vsel %vm1310, %v1236, 0
      %v1597 = vsel %vm1310, %v1237, 0
      %v1600 = vsel %vm1310, %v1238, 0
      %v1603 = vsel %vm1310, %v1239, 0
      %v1606 = vsel %vm1310, %v1240, 0
      %v1609 = vsel %vm1310, %v1241, 0
      %v1612 = vsel %vm1310, %v1242, 0
      %v1615 = vsel %vm1310, %v1243, 0
      %v1618 = vsel %vm1310, %v1244, 0
      %v1621 = vsel %vm1310, %v1245, 0
      %v1624 = vsel %vm1310, %v1246, 0
      %v1627 = vsel %vm1310, %v1247, 0
      %v1630 = vsel %vm1310, %v1248, 0
      %v1633 = vsel %vm1310, %v1249, 0
      %v1636 = vsel %vm1310, %v1250, 0
      %v1639 = vsel %vm1310, %v1251, 0
      %v1642 = vsel %vm1310, %v1252, 0
      %v1645 = vsel %vm1310, %v1253, 0
      %v1648 = vsel %vm1310, %v1254, 0
      %v1651 = vsel %vm1310, %v1255, 0
      %v1654 = vsel %vm1310, %v1256, 0
      %v1657 = vsel %vm1310, %v1257, 0
      %v1660 = vsel %vm1310, %v1258, 0
      %v1663 = vsel %vm1310, %v1259, 0
      %v1666 = vsel %vm1310, %v1260, 0
      %v1669 = vsel %vm1310, %v1261, 0
      %v1672 = vsel %vm1310, %v1262, 0
      %v1675 = vsel %vm1310, %v1263, 0
      %v1678 = vsel %vm1310, %v1264, 0
      %v1681 = vsel %vm1310, %v1265, 0
      %v1684 = vsel %vm1310, %v1266, 0
      %v1687 = vsel %vm1310, %v1267, 0
      %v1690 = vsel %vm1310, %v1268, 0
      %v1693 = vsel %vm1310, %v1269, 0
      %v1696 = vsel %vm1310, %v1270, 0
      %v1699 = vsel %vm1310, %v1271, 0
      %v1702 = vsel %vm1310, %v1272, 0
      %v1705 = vsel %vm1310, %v1273, 0
      %v1708 = vsel %vm1310, %v1274, 0
      %v1711 = vsel %vm1310, %v1275, 0
      %v1714 = vsel %vm1310, %v1276, 0
      %v1717 = vsel %vm1310, %v1277, 0
      %v1720 = vsel %vm1310, %v1278, 0
      %v1723 = vsel %vm1310, %v1279, 0
      %v1726 = vsel %vm1310, %v1280, 0
      %v1729 = vsel %vm1310, %v1281, 0
      %v1732 = vsel %vm1310, %v1282, 0
      %v1735 = vsel %vm1310, %v1283, 0
      %v1738 = vsel %vm1310, %v1284, 0
      %v1741 = vsel %vm1310, %v1285, 0
      %v1744 = vsel %vm1310, %v1286, 0
      %v1747 = vsel %vm1310, %v1287, 0
      %v1750 = vsel %vm1310, %v1288, 0
      %v1753 = vsel %vm1310, %v1289, 0
      %v1756 = vsel %vm1310, %v1290, 0
      %v1759 = vsel %vm1310, %v1291, 0
      %v1762 = vsel %vm1310, %v1292, 0
      %v1765 = vsel %vm1310, %v1293, 0
      %v1768 = vsel %vm1310, %v1294, 0
      %v1771 = vsel %vm1310, %v1295, 0
      %v1774 = vsel %vm1310, %v1296, 0
      %v1777 = vsel %vm1310, %v1297, 0
      %v1780 = vsel %vm1310, %v1298, 0
      %vm1782 = vcmask 1044480
      %vm1783 = vcmask 1045504
      %v1784 = vsel %vm1782, 4294967295, 65535
      %v1785 = vsel %vm1783, %v1784, 0
      %v1787 = vand.u32 %v1308, %v1785
      %1789 = vmatpush.bf16.msra.mxu0 0
      %1790 = vmatpush.bf16.msra.mxu0 0
      %1791 = vmatpush.bf16.msra.mxu0 0
      %1792 = vmatpush.bf16.msra.mxu0 0
      %1793 = vmatpush.bf16.msra.mxu0 0
      %1794 = vmatpush.bf16.msra.mxu0 0
      %1795 = vmatpush.bf16.msra.mxu0 %v1787
      %1796 = vmatpush.bf16.msra.mxu0 %v1307
      %1797 = vmatmul.bf16.gmra.mxu0 %v1312
      %v1798 = vpop.f32.mrf.mxu0
      %v1799 = vadd.f32 0.0, %v1798
      %v1800 = vpop.f32.mrf.mxu0
      %v1801 = vadd.f32 0.0, %v1800
      %1802 = vmatmul.bf16.gmra.mxu0 %v1315
      %v1803 = vpop.f32.mrf.mxu0
      %v1804 = vadd.f32 0.0, %v1803
      %v1805 = vpop.f32.mrf.mxu0
      %v1806 = vadd.f32 0.0, %v1805
      %1807 = vmatmul.bf16.gmra.mxu0 %v1318
      %v1808 = vpop.f32.mrf.mxu0
      %v1809 = vadd.f32 0.0, %v1808
      %v1810 = vpop.f32.mrf.mxu0
      %v1811 = vadd.f32 0.0, %v1810
      %1812 = vmatmul.bf16.gmra.mxu0 %v1321
      %v1813 = vpop.f32.mrf.mxu0
      %v1814 = vadd.f32 0.0, %v1813
      %v1815 = vpop.f32.mrf.mxu0
      %v1816 = vadd.f32 0.0, %v1815
      %1817 = vmatmul.bf16.gmra.mxu0 %v1324
      %v1818 = vpop.f32.mrf.mxu0
      %v1819 = vadd.f32 0.0, %v1818
      %v1820 = vpop.f32.mrf.mxu0
      %v1821 = vadd.f32 0.0, %v1820
      %1822 = vmatmul.bf16.gmra.mxu0 %v1327
      %v1823 = vpop.f32.mrf.mxu0
      %v1824 = vadd.f32 0.0, %v1823
      %v1825 = vpop.f32.mrf.mxu0
      %v1826 = vadd.f32 0.0, %v1825
      %1827 = vmatmul.bf16.gmra.mxu0 %v1330
      %v1828 = vpop.f32.mrf.mxu0
      %v1829 = vadd.f32 0.0, %v1828
      %v1830 = vpop.f32.mrf.mxu0
      %v1831 = vadd.f32 0.0, %v1830
      %1832 = vmatmul.bf16.gmra.mxu0 %v1333
      %v1833 = vpop.f32.mrf.mxu0
      %v1834 = vadd.f32 0.0, %v1833
      %v1835 = vpop.f32.mrf.mxu0
      %v1836 = vadd.f32 0.0, %v1835
      %1837 = vmatmul.bf16.gmra.mxu0 %v1336
      %v1838 = vpop.f32.mrf.mxu0
      %v1839 = vadd.f32 0.0, %v1838
      %v1840 = vpop.f32.mrf.mxu0
      %v1841 = vadd.f32 0.0, %v1840
      %1842 = vmatmul.bf16.gmra.mxu0 %v1339
      %v1843 = vpop.f32.mrf.mxu0
      %v1844 = vadd.f32 0.0, %v1843
      %v1845 = vpop.f32.mrf.mxu0
      %v1846 = vadd.f32 0.0, %v1845
      %1847 = vmatmul.bf16.gmra.mxu0 %v1342
      %v1848 = vpop.f32.mrf.mxu0
      %v1849 = vadd.f32 0.0, %v1848
      %v1850 = vpop.f32.mrf.mxu0
      %v1851 = vadd.f32 0.0, %v1850
      %1852 = vmatmul.bf16.gmra.mxu0 %v1345
      %v1853 = vpop.f32.mrf.mxu0
      %v1854 = vadd.f32 0.0, %v1853
      %v1855 = vpop.f32.mrf.mxu0
      %v1856 = vadd.f32 0.0, %v1855
      %1857 = vmatmul.bf16.gmra.mxu0 %v1348
      %v1858 = vpop.f32.mrf.mxu0
      %v1859 = vadd.f32 0.0, %v1858
      %v1860 = vpop.f32.mrf.mxu0
      %v1861 = vadd.f32 0.0, %v1860
      %1862 = vmatmul.bf16.gmra.mxu0 %v1351
      %v1863 = vpop.f32.mrf.mxu0
      %v1864 = vadd.f32 0.0, %v1863
      %v1865 = vpop.f32.mrf.mxu0
      %v1866 = vadd.f32 0.0, %v1865
      %1867 = vmatmul.bf16.gmra.mxu0 %v1354
      %v1868 = vpop.f32.mrf.mxu0
      %v1869 = vadd.f32 0.0, %v1868
      %v1870 = vpop.f32.mrf.mxu0
      %v1871 = vadd.f32 0.0, %v1870
      %1872 = vmatmul.bf16.gmra.mxu0 %v1357
      %v1873 = vpop.f32.mrf.mxu0
      %v1874 = vadd.f32 0.0, %v1873
      %v1875 = vpop.f32.mrf.mxu0
      %v1876 = vadd.f32 0.0, %v1875
      %1877 = vmatmul.bf16.gmra.mxu0 %v1360
      %v1878 = vpop.f32.mrf.mxu0
      %v1879 = vadd.f32 0.0, %v1878
      %v1880 = vpop.f32.mrf.mxu0
      %v1881 = vadd.f32 0.0, %v1880
      %1882 = vmatmul.bf16.gmra.mxu0 %v1363
      %v1883 = vpop.f32.mrf.mxu0
      %v1884 = vadd.f32 0.0, %v1883
      %v1885 = vpop.f32.mrf.mxu0
      %v1886 = vadd.f32 0.0, %v1885
      %1887 = vmatmul.bf16.gmra.mxu0 %v1366
      %v1888 = vpop.f32.mrf.mxu0
      %v1889 = vadd.f32 0.0, %v1888
      %v1890 = vpop.f32.mrf.mxu0
      %v1891 = vadd.f32 0.0, %v1890
      %1892 = vmatmul.bf16.gmra.mxu0 %v1369
      %v1893 = vpop.f32.mrf.mxu0
      %v1894 = vadd.f32 0.0, %v1893
      %v1895 = vpop.f32.mrf.mxu0
      %v1896 = vadd.f32 0.0, %v1895
      %1897 = vmatmul.bf16.gmra.mxu0 %v1372
      %v1898 = vpop.f32.mrf.mxu0
      %v1899 = vadd.f32 0.0, %v1898
      %v1900 = vpop.f32.mrf.mxu0
      %v1901 = vadd.f32 0.0, %v1900
      %1902 = vmatmul.bf16.gmra.mxu0 %v1375
      %v1903 = vpop.f32.mrf.mxu0
      %v1904 = vadd.f32 0.0, %v1903
      %v1905 = vpop.f32.mrf.mxu0
      %v1906 = vadd.f32 0.0, %v1905
      %1907 = vmatmul.bf16.gmra.mxu0 %v1378
      %v1908 = vpop.f32.mrf.mxu0
      %v1909 = vadd.f32 0.0, %v1908
      %v1910 = vpop.f32.mrf.mxu0
      %v1911 = vadd.f32 0.0, %v1910
      %1912 = vmatmul.bf16.gmra.mxu0 %v1381
      %v1913 = vpop.f32.mrf.mxu0
      %v1914 = vadd.f32 0.0, %v1913
      %v1915 = vpop.f32.mrf.mxu0
      %v1916 = vadd.f32 0.0, %v1915
      %1917 = vmatmul.bf16.gmra.mxu0 %v1384
      %v1918 = vpop.f32.mrf.mxu0
      %v1919 = vadd.f32 0.0, %v1918
      %v1920 = vpop.f32.mrf.mxu0
      %v1921 = vadd.f32 0.0, %v1920
      %1922 = vmatmul.bf16.gmra.mxu0 %v1387
      %v1923 = vpop.f32.mrf.mxu0
      %v1924 = vadd.f32 0.0, %v1923
      %v1925 = vpop.f32.mrf.mxu0
      %v1926 = vadd.f32 0.0, %v1925
      %1927 = vmatmul.bf16.gmra.mxu0 %v1390
      %v1928 = vpop.f32.mrf.mxu0
      %v1929 = vadd.f32 0.0, %v1928
      %v1930 = vpop.f32.mrf.mxu0
      %v1931 = vadd.f32 0.0, %v1930
      %1932 = vmatmul.bf16.gmra.mxu0 %v1393
      %v1933 = vpop.f32.mrf.mxu0
      %v1934 = vadd.f32 0.0, %v1933
      %v1935 = vpop.f32.mrf.mxu0
      %v1936 = vadd.f32 0.0, %v1935
      %1937 = vmatmul.bf16.gmra.mxu0 %v1396
      %v1938 = vpop.f32.mrf.mxu0
      %v1939 = vadd.f32 0.0, %v1938
      %v1940 = vpop.f32.mrf.mxu0
      %v1941 = vadd.f32 0.0, %v1940
      %1942 = vmatmul.bf16.gmra.mxu0 %v1399
      %v1943 = vpop.f32.mrf.mxu0
      %v1944 = vadd.f32 0.0, %v1943
      %v1945 = vpop.f32.mrf.mxu0
      %v1946 = vadd.f32 0.0, %v1945
      %1947 = vmatmul.bf16.gmra.mxu0 %v1402
      %v1948 = vpop.f32.mrf.mxu0
      %v1949 = vadd.f32 0.0, %v1948
      %v1950 = vpop.f32.mrf.mxu0
      %v1951 = vadd.f32 0.0, %v1950
      %1952 = vmatmul.bf16.gmra.mxu0 %v1405
      %v1953 = vpop.f32.mrf.mxu0
      %v1954 = vadd.f32 0.0, %v1953
      %v1955 = vpop.f32.mrf.mxu0
      %v1956 = vadd.f32 0.0, %v1955
      %1957 = vmatmul.bf16.gmra.mxu0 %v1408
      %v1958 = vpop.f32.mrf.mxu0
      %v1959 = vadd.f32 0.0, %v1958
      %v1960 = vpop.f32.mrf.mxu0
      %v1961 = vadd.f32 0.0, %v1960
      %1962 = vmatmul.bf16.gmra.mxu0 %v1411
      %v1963 = vpop.f32.mrf.mxu0
      %v1964 = vadd.f32 0.0, %v1963
      %v1965 = vpop.f32.mrf.mxu0
      %v1966 = vadd.f32 0.0, %v1965
      %1967 = vmatmul.bf16.gmra.mxu0 %v1414
      %v1968 = vpop.f32.mrf.mxu0
      %v1969 = vadd.f32 0.0, %v1968
      %v1970 = vpop.f32.mrf.mxu0
      %v1971 = vadd.f32 0.0, %v1970
      %1972 = vmatmul.bf16.gmra.mxu0 %v1417
      %v1973 = vpop.f32.mrf.mxu0
      %v1974 = vadd.f32 0.0, %v1973
      %v1975 = vpop.f32.mrf.mxu0
      %v1976 = vadd.f32 0.0, %v1975
      %1977 = vmatmul.bf16.gmra.mxu0 %v1420
      %v1978 = vpop.f32.mrf.mxu0
      %v1979 = vadd.f32 0.0, %v1978
      %v1980 = vpop.f32.mrf.mxu0
      %v1981 = vadd.f32 0.0, %v1980
      %1982 = vmatmul.bf16.gmra.mxu0 %v1423
      %v1983 = vpop.f32.mrf.mxu0
      %v1984 = vadd.f32 0.0, %v1983
      %v1985 = vpop.f32.mrf.mxu0
      %v1986 = vadd.f32 0.0, %v1985
      %1987 = vmatmul.bf16.gmra.mxu0 %v1426
      %v1988 = vpop.f32.mrf.mxu0
      %v1989 = vadd.f32 0.0, %v1988
      %v1990 = vpop.f32.mrf.mxu0
      %v1991 = vadd.f32 0.0, %v1990
      %1992 = vmatmul.bf16.gmra.mxu0 %v1429
      %v1993 = vpop.f32.mrf.mxu0
      %v1994 = vadd.f32 0.0, %v1993
      %v1995 = vpop.f32.mrf.mxu0
      %v1996 = vadd.f32 0.0, %v1995
      %1997 = vmatmul.bf16.gmra.mxu0 %v1432
      %v1998 = vpop.f32.mrf.mxu0
      %v1999 = vadd.f32 0.0, %v1998
      %v2000 = vpop.f32.mrf.mxu0
      %v2001 = vadd.f32 0.0, %v2000
      %2002 = vmatmul.bf16.gmra.mxu0 %v1435
      %v2003 = vpop.f32.mrf.mxu0
      %v2004 = vadd.f32 0.0, %v2003
      %v2005 = vpop.f32.mrf.mxu0
      %v2006 = vadd.f32 0.0, %v2005
      %2007 = vmatmul.bf16.gmra.mxu0 %v1438
      %v2008 = vpop.f32.mrf.mxu0
      %v2009 = vadd.f32 0.0, %v2008
      %v2010 = vpop.f32.mrf.mxu0
      %v2011 = vadd.f32 0.0, %v2010
      %2012 = vmatmul.bf16.gmra.mxu0 %v1441
      %v2013 = vpop.f32.mrf.mxu0
      %v2014 = vadd.f32 0.0, %v2013
      %v2015 = vpop.f32.mrf.mxu0
      %v2016 = vadd.f32 0.0, %v2015
      %2017 = vmatmul.bf16.gmra.mxu0 %v1444
      %v2018 = vpop.f32.mrf.mxu0
      %v2019 = vadd.f32 0.0, %v2018
      %v2020 = vpop.f32.mrf.mxu0
      %v2021 = vadd.f32 0.0, %v2020
      %2022 = vmatmul.bf16.gmra.mxu0 %v1447
      %v2023 = vpop.f32.mrf.mxu0
      %v2024 = vadd.f32 0.0, %v2023
      %v2025 = vpop.f32.mrf.mxu0
      %v2026 = vadd.f32 0.0, %v2025
      %2027 = vmatmul.bf16.gmra.mxu0 %v1450
      %v2028 = vpop.f32.mrf.mxu0
      %v2029 = vadd.f32 0.0, %v2028
      %v2030 = vpop.f32.mrf.mxu0
      %v2031 = vadd.f32 0.0, %v2030
      %2032 = vmatmul.bf16.gmra.mxu0 %v1453
      %v2033 = vpop.f32.mrf.mxu0
      %v2034 = vadd.f32 0.0, %v2033
      %v2035 = vpop.f32.mrf.mxu0
      %v2036 = vadd.f32 0.0, %v2035
      %2037 = vmatmul.bf16.gmra.mxu0 %v1456
      %v2038 = vpop.f32.mrf.mxu0
      %v2039 = vadd.f32 0.0, %v2038
      %v2040 = vpop.f32.mrf.mxu0
      %v2041 = vadd.f32 0.0, %v2040
      %2042 = vmatmul.bf16.gmra.mxu0 %v1459
      %v2043 = vpop.f32.mrf.mxu0
      %v2044 = vadd.f32 0.0, %v2043
      %v2045 = vpop.f32.mrf.mxu0
      %v2046 = vadd.f32 0.0, %v2045
      %2047 = vmatmul.bf16.gmra.mxu0 %v1462
      %v2048 = vpop.f32.mrf.mxu0
      %v2049 = vadd.f32 0.0, %v2048
      %v2050 = vpop.f32.mrf.mxu0
      %v2051 = vadd.f32 0.0, %v2050
      %2052 = vmatmul.bf16.gmra.mxu0 %v1465
      %v2053 = vpop.f32.mrf.mxu0
      %v2054 = vadd.f32 0.0, %v2053
      %v2055 = vpop.f32.mrf.mxu0
      %v2056 = vadd.f32 0.0, %v2055
      %2057 = vmatmul.bf16.gmra.mxu0 %v1468
      %v2058 = vpop.f32.mrf.mxu0
      %v2059 = vadd.f32 0.0, %v2058
      %v2060 = vpop.f32.mrf.mxu0
      %v2061 = vadd.f32 0.0, %v2060
      %2062 = vmatmul.bf16.gmra.mxu0 %v1471
      %v2063 = vpop.f32.mrf.mxu0
      %v2064 = vadd.f32 0.0, %v2063
      %v2065 = vpop.f32.mrf.mxu0
      %v2066 = vadd.f32 0.0, %v2065
      %2067 = vmatmul.bf16.gmra.mxu0 %v1474
      %v2068 = vpop.f32.mrf.mxu0
      %v2069 = vadd.f32 0.0, %v2068
      %v2070 = vpop.f32.mrf.mxu0
      %v2071 = vadd.f32 0.0, %v2070
      %2072 = vmatmul.bf16.gmra.mxu0 %v1477
      %v2073 = vpop.f32.mrf.mxu0
      %v2074 = vadd.f32 0.0, %v2073
      %v2075 = vpop.f32.mrf.mxu0
      %v2076 = vadd.f32 0.0, %v2075
      %2077 = vmatmul.bf16.gmra.mxu0 %v1480
      %v2078 = vpop.f32.mrf.mxu0
      %v2079 = vadd.f32 0.0, %v2078
      %v2080 = vpop.f32.mrf.mxu0
      %v2081 = vadd.f32 0.0, %v2080
      %2082 = vmatmul.bf16.gmra.mxu0 %v1483
      %v2083 = vpop.f32.mrf.mxu0
      %v2084 = vadd.f32 0.0, %v2083
      %v2085 = vpop.f32.mrf.mxu0
      %v2086 = vadd.f32 0.0, %v2085
      %2087 = vmatmul.bf16.gmra.mxu0 %v1486
      %v2088 = vpop.f32.mrf.mxu0
      %v2089 = vadd.f32 0.0, %v2088
      %v2090 = vpop.f32.mrf.mxu0
      %v2091 = vadd.f32 0.0, %v2090
      %2092 = vmatmul.bf16.gmra.mxu0 %v1489
      %v2093 = vpop.f32.mrf.mxu0
      %v2094 = vadd.f32 0.0, %v2093
      %v2095 = vpop.f32.mrf.mxu0
      %v2096 = vadd.f32 0.0, %v2095
      %2097 = vmatmul.bf16.gmra.mxu0 %v1492
      %v2098 = vpop.f32.mrf.mxu0
      %v2099 = vadd.f32 0.0, %v2098
      %v2100 = vpop.f32.mrf.mxu0
      %v2101 = vadd.f32 0.0, %v2100
      %2102 = vmatmul.bf16.gmra.mxu0 %v1495
      %v2103 = vpop.f32.mrf.mxu0
      %v2104 = vadd.f32 0.0, %v2103
      %v2105 = vpop.f32.mrf.mxu0
      %v2106 = vadd.f32 0.0, %v2105
      %2107 = vmatmul.bf16.gmra.mxu0 %v1498
      %v2108 = vpop.f32.mrf.mxu0
      %v2109 = vadd.f32 0.0, %v2108
      %v2110 = vpop.f32.mrf.mxu0
      %v2111 = vadd.f32 0.0, %v2110
      %2112 = vmatmul.bf16.gmra.mxu0 %v1501
      %v2113 = vpop.f32.mrf.mxu0
      %v2114 = vadd.f32 0.0, %v2113
      %v2115 = vpop.f32.mrf.mxu0
      %v2116 = vadd.f32 0.0, %v2115
      %2117 = vmatmul.bf16.gmra.mxu0 %v1504
      %v2118 = vpop.f32.mrf.mxu0
      %v2119 = vadd.f32 0.0, %v2118
      %v2120 = vpop.f32.mrf.mxu0
      %v2121 = vadd.f32 0.0, %v2120
      %2122 = vmatmul.bf16.gmra.mxu0 %v1507
      %v2123 = vpop.f32.mrf.mxu0
      %v2124 = vadd.f32 0.0, %v2123
      %v2125 = vpop.f32.mrf.mxu0
      %v2126 = vadd.f32 0.0, %v2125
      %2127 = vmatmul.bf16.gmra.mxu0 %v1510
      %v2128 = vpop.f32.mrf.mxu0
      %v2129 = vadd.f32 0.0, %v2128
      %v2130 = vpop.f32.mrf.mxu0
      %v2131 = vadd.f32 0.0, %v2130
      %2132 = vmatmul.bf16.gmra.mxu0 %v1513
      %v2133 = vpop.f32.mrf.mxu0
      %v2134 = vadd.f32 0.0, %v2133
      %v2135 = vpop.f32.mrf.mxu0
      %v2136 = vadd.f32 0.0, %v2135
      %2137 = vmatmul.bf16.gmra.mxu0 %v1516
      %v2138 = vpop.f32.mrf.mxu0
      %v2139 = vadd.f32 0.0, %v2138
      %v2140 = vpop.f32.mrf.mxu0
      %v2141 = vadd.f32 0.0, %v2140
      %2142 = vmatmul.bf16.gmra.mxu0 %v1519
      %v2143 = vpop.f32.mrf.mxu0
      %v2144 = vadd.f32 0.0, %v2143
      %v2145 = vpop.f32.mrf.mxu0
      %v2146 = vadd.f32 0.0, %v2145
      %2147 = vmatmul.bf16.gmra.mxu0 %v1522
      %v2148 = vpop.f32.mrf.mxu0
      %v2149 = vadd.f32 0.0, %v2148
      %v2150 = vpop.f32.mrf.mxu0
      %v2151 = vadd.f32 0.0, %v2150
      %2152 = vmatmul.bf16.gmra.mxu0 %v1525
      %v2153 = vpop.f32.mrf.mxu0
      %v2154 = vadd.f32 0.0, %v2153
      %v2155 = vpop.f32.mrf.mxu0
      %v2156 = vadd.f32 0.0, %v2155
      %2157 = vmatmul.bf16.gmra.mxu0 %v1528
      %v2158 = vpop.f32.mrf.mxu0
      %v2159 = vadd.f32 0.0, %v2158
      %v2160 = vpop.f32.mrf.mxu0
      %v2161 = vadd.f32 0.0, %v2160
      %2162 = vmatmul.bf16.gmra.mxu0 %v1531
      %v2163 = vpop.f32.mrf.mxu0
      %v2164 = vadd.f32 0.0, %v2163
      %v2165 = vpop.f32.mrf.mxu0
      %v2166 = vadd.f32 0.0, %v2165
      %2167 = vmatmul.bf16.gmra.mxu0 %v1534
      %v2168 = vpop.f32.mrf.mxu0
      %v2169 = vadd.f32 0.0, %v2168
      %v2170 = vpop.f32.mrf.mxu0
      %v2171 = vadd.f32 0.0, %v2170
      %2172 = vmatmul.bf16.gmra.mxu0 %v1537
      %v2173 = vpop.f32.mrf.mxu0
      %v2174 = vadd.f32 0.0, %v2173
      %v2175 = vpop.f32.mrf.mxu0
      %v2176 = vadd.f32 0.0, %v2175
      %2177 = vmatmul.bf16.gmra.mxu0 %v1540
      %v2178 = vpop.f32.mrf.mxu0
      %v2179 = vadd.f32 0.0, %v2178
      %v2180 = vpop.f32.mrf.mxu0
      %v2181 = vadd.f32 0.0, %v2180
      %2182 = vmatmul.bf16.gmra.mxu0 %v1543
      %v2183 = vpop.f32.mrf.mxu0
      %v2184 = vadd.f32 0.0, %v2183
      %v2185 = vpop.f32.mrf.mxu0
      %v2186 = vadd.f32 0.0, %v2185
      %2187 = vmatmul.bf16.gmra.mxu0 %v1546
      %v2188 = vpop.f32.mrf.mxu0
      %v2189 = vadd.f32 0.0, %v2188
      %v2190 = vpop.f32.mrf.mxu0
      %v2191 = vadd.f32 0.0, %v2190
      %2192 = vmatmul.bf16.gmra.mxu0 %v1549
      %v2193 = vpop.f32.mrf.mxu0
      %v2194 = vadd.f32 0.0, %v2193
      %v2195 = vpop.f32.mrf.mxu0
      %v2196 = vadd.f32 0.0, %v2195
      %2197 = vmatmul.bf16.gmra.mxu0 %v1552
      %v2198 = vpop.f32.mrf.mxu0
      %v2199 = vadd.f32 0.0, %v2198
      %v2200 = vpop.f32.mrf.mxu0
      %v2201 = vadd.f32 0.0, %v2200
      %2202 = vmatmul.bf16.gmra.mxu0 %v1555
      %v2203 = vpop.f32.mrf.mxu0
      %v2204 = vadd.f32 0.0, %v2203
      %v2205 = vpop.f32.mrf.mxu0
      %v2206 = vadd.f32 0.0, %v2205
      %2207 = vmatmul.bf16.gmra.mxu0 %v1558
      %v2208 = vpop.f32.mrf.mxu0
      %v2209 = vadd.f32 0.0, %v2208
      %v2210 = vpop.f32.mrf.mxu0
      %v2211 = vadd.f32 0.0, %v2210
      %2212 = vmatmul.bf16.gmra.mxu0 %v1561
      %v2213 = vpop.f32.mrf.mxu0
      %v2214 = vadd.f32 0.0, %v2213
      %v2215 = vpop.f32.mrf.mxu0
      %v2216 = vadd.f32 0.0, %v2215
      %2217 = vmatmul.bf16.gmra.mxu0 %v1564
      %v2218 = vpop.f32.mrf.mxu0
      %v2219 = vadd.f32 0.0, %v2218
      %v2220 = vpop.f32.mrf.mxu0
      %v2221 = vadd.f32 0.0, %v2220
      %2222 = vmatmul.bf16.gmra.mxu0 %v1567
      %v2223 = vpop.f32.mrf.mxu0
      %v2224 = vadd.f32 0.0, %v2223
      %v2225 = vpop.f32.mrf.mxu0
      %v2226 = vadd.f32 0.0, %v2225
      %2227 = vmatmul.bf16.gmra.mxu0 %v1570
      %v2228 = vpop.f32.mrf.mxu0
      %v2229 = vadd.f32 0.0, %v2228
      %v2230 = vpop.f32.mrf.mxu0
      %v2231 = vadd.f32 0.0, %v2230
      %2232 = vmatmul.bf16.gmra.mxu0 %v1573
      %v2233 = vpop.f32.mrf.mxu0
      %v2234 = vadd.f32 0.0, %v2233
      %v2235 = vpop.f32.mrf.mxu0
      %v2236 = vadd.f32 0.0, %v2235
      %2237 = vmatmul.bf16.gmra.mxu0 %v1576
      %v2238 = vpop.f32.mrf.mxu0
      %v2239 = vadd.f32 0.0, %v2238
      %v2240 = vpop.f32.mrf.mxu0
      %v2241 = vadd.f32 0.0, %v2240
      %2242 = vmatmul.bf16.gmra.mxu0 %v1579
      %v2243 = vpop.f32.mrf.mxu0
      %v2244 = vadd.f32 0.0, %v2243
      %v2245 = vpop.f32.mrf.mxu0
      %v2246 = vadd.f32 0.0, %v2245
      %2247 = vmatmul.bf16.gmra.mxu0 %v1582
      %v2248 = vpop.f32.mrf.mxu0
      %v2249 = vadd.f32 0.0, %v2248
      %v2250 = vpop.f32.mrf.mxu0
      %v2251 = vadd.f32 0.0, %v2250
      %2252 = vmatmul.bf16.gmra.mxu0 %v1585
      %v2253 = vpop.f32.mrf.mxu0
      %v2254 = vadd.f32 0.0, %v2253
      %v2255 = vpop.f32.mrf.mxu0
      %v2256 = vadd.f32 0.0, %v2255
      %2257 = vmatmul.bf16.gmra.mxu0 %v1588
      %v2258 = vpop.f32.mrf.mxu0
      %v2259 = vadd.f32 0.0, %v2258
      %v2260 = vpop.f32.mrf.mxu0
      %v2261 = vadd.f32 0.0, %v2260
      %2262 = vmatmul.bf16.gmra.mxu0 %v1591
      %v2263 = vpop.f32.mrf.mxu0
      %v2264 = vadd.f32 0.0, %v2263
      %v2265 = vpop.f32.mrf.mxu0
      %v2266 = vadd.f32 0.0, %v2265
      %2267 = vmatmul.bf16.gmra.mxu0 %v1594
      %v2268 = vpop.f32.mrf.mxu0
      %v2269 = vadd.f32 0.0, %v2268
      %v2270 = vpop.f32.mrf.mxu0
      %v2271 = vadd.f32 0.0, %v2270
      %2272 = vmatmul.bf16.gmra.mxu0 %v1597
      %v2273 = vpop.f32.mrf.mxu0
      %v2274 = vadd.f32 0.0, %v2273
      %v2275 = vpop.f32.mrf.mxu0
      %v2276 = vadd.f32 0.0, %v2275
      %2277 = vmatmul.bf16.gmra.mxu0 %v1600
      %v2278 = vpop.f32.mrf.mxu0
      %v2279 = vadd.f32 0.0, %v2278
      %v2280 = vpop.f32.mrf.mxu0
      %v2281 = vadd.f32 0.0, %v2280
      %2282 = vmatmul.bf16.gmra.mxu0 %v1603
      %v2283 = vpop.f32.mrf.mxu0
      %v2284 = vadd.f32 0.0, %v2283
      %v2285 = vpop.f32.mrf.mxu0
      %v2286 = vadd.f32 0.0, %v2285
      %2287 = vmatmul.bf16.gmra.mxu0 %v1606
      %v2288 = vpop.f32.mrf.mxu0
      %v2289 = vadd.f32 0.0, %v2288
      %v2290 = vpop.f32.mrf.mxu0
      %v2291 = vadd.f32 0.0, %v2290
      %2292 = vmatmul.bf16.gmra.mxu0 %v1609
      %v2293 = vpop.f32.mrf.mxu0
      %v2294 = vadd.f32 0.0, %v2293
      %v2295 = vpop.f32.mrf.mxu0
      %v2296 = vadd.f32 0.0, %v2295
      %2297 = vmatmul.bf16.gmra.mxu0 %v1612
      %v2298 = vpop.f32.mrf.mxu0
      %v2299 = vadd.f32 0.0, %v2298
      %v2300 = vpop.f32.mrf.mxu0
      %v2301 = vadd.f32 0.0, %v2300
      %2302 = vmatmul.bf16.gmra.mxu0 %v1615
      %v2303 = vpop.f32.mrf.mxu0
      %v2304 = vadd.f32 0.0, %v2303
      %v2305 = vpop.f32.mrf.mxu0
      %v2306 = vadd.f32 0.0, %v2305
      %2307 = vmatmul.bf16.gmra.mxu0 %v1618
      %v2308 = vpop.f32.mrf.mxu0
      %v2309 = vadd.f32 0.0, %v2308
      %v2310 = vpop.f32.mrf.mxu0
      %v2311 = vadd.f32 0.0, %v2310
      %2312 = vmatmul.bf16.gmra.mxu0 %v1621
      %v2313 = vpop.f32.mrf.mxu0
      %v2314 = vadd.f32 0.0, %v2313
      %v2315 = vpop.f32.mrf.mxu0
      %v2316 = vadd.f32 0.0, %v2315
      %2317 = vmatmul.bf16.gmra.mxu0 %v1624
      %v2318 = vpop.f32.mrf.mxu0
      %v2319 = vadd.f32 0.0, %v2318
      %v2320 = vpop.f32.mrf.mxu0
      %v2321 = vadd.f32 0.0, %v2320
      %2322 = vmatmul.bf16.gmra.mxu0 %v1627
      %v2323 = vpop.f32.mrf.mxu0
      %v2324 = vadd.f32 0.0, %v2323
      %v2325 = vpop.f32.mrf.mxu0
      %v2326 = vadd.f32 0.0, %v2325
      %2327 = vmatmul.bf16.gmra.mxu0 %v1630
      %v2328 = vpop.f32.mrf.mxu0
      %v2329 = vadd.f32 0.0, %v2328
      %v2330 = vpop.f32.mrf.mxu0
      %v2331 = vadd.f32 0.0, %v2330
      %2332 = vmatmul.bf16.gmra.mxu0 %v1633
      %v2333 = vpop.f32.mrf.mxu0
      %v2334 = vadd.f32 0.0, %v2333
      %v2335 = vpop.f32.mrf.mxu0
      %v2336 = vadd.f32 0.0, %v2335
      %2337 = vmatmul.bf16.gmra.mxu0 %v1636
      %v2338 = vpop.f32.mrf.mxu0
      %v2339 = vadd.f32 0.0, %v2338
      %v2340 = vpop.f32.mrf.mxu0
      %v2341 = vadd.f32 0.0, %v2340
      %2342 = vmatmul.bf16.gmra.mxu0 %v1639
      %v2343 = vpop.f32.mrf.mxu0
      %v2344 = vadd.f32 0.0, %v2343
      %v2345 = vpop.f32.mrf.mxu0
      %v2346 = vadd.f32 0.0, %v2345
      %2347 = vmatmul.bf16.gmra.mxu0 %v1642
      %v2348 = vpop.f32.mrf.mxu0
      %v2349 = vadd.f32 0.0, %v2348
      %v2350 = vpop.f32.mrf.mxu0
      %v2351 = vadd.f32 0.0, %v2350
      %2352 = vmatmul.bf16.gmra.mxu0 %v1645
      %v2353 = vpop.f32.mrf.mxu0
      %v2354 = vadd.f32 0.0, %v2353
      %v2355 = vpop.f32.mrf.mxu0
      %v2356 = vadd.f32 0.0, %v2355
      %2357 = vmatmul.bf16.gmra.mxu0 %v1648
      %v2358 = vpop.f32.mrf.mxu0
      %v2359 = vadd.f32 0.0, %v2358
      %v2360 = vpop.f32.mrf.mxu0
      %v2361 = vadd.f32 0.0, %v2360
      %2362 = vmatmul.bf16.gmra.mxu0 %v1651
      %v2363 = vpop.f32.mrf.mxu0
      %v2364 = vadd.f32 0.0, %v2363
      %v2365 = vpop.f32.mrf.mxu0
      %v2366 = vadd.f32 0.0, %v2365
      %2367 = vmatmul.bf16.gmra.mxu0 %v1654
      %v2368 = vpop.f32.mrf.mxu0
      %v2369 = vadd.f32 0.0, %v2368
      %v2370 = vpop.f32.mrf.mxu0
      %v2371 = vadd.f32 0.0, %v2370
      %2372 = vmatmul.bf16.gmra.mxu0 %v1657
      %v2373 = vpop.f32.mrf.mxu0
      %v2374 = vadd.f32 0.0, %v2373
      %v2375 = vpop.f32.mrf.mxu0
      %v2376 = vadd.f32 0.0, %v2375
      %2377 = vmatmul.bf16.gmra.mxu0 %v1660
      %v2378 = vpop.f32.mrf.mxu0
      %v2379 = vadd.f32 0.0, %v2378
      %v2380 = vpop.f32.mrf.mxu0
      %v2381 = vadd.f32 0.0, %v2380
      %2382 = vmatmul.bf16.gmra.mxu0 %v1663
      %v2383 = vpop.f32.mrf.mxu0
      %v2384 = vadd.f32 0.0, %v2383
      %v2385 = vpop.f32.mrf.mxu0
      %v2386 = vadd.f32 0.0, %v2385
      %2387 = vmatmul.bf16.gmra.mxu0 %v1666
      %v2388 = vpop.f32.mrf.mxu0
      %v2389 = vadd.f32 0.0, %v2388
      %v2390 = vpop.f32.mrf.mxu0
      %v2391 = vadd.f32 0.0, %v2390
      %2392 = vmatmul.bf16.gmra.mxu0 %v1669
      %v2393 = vpop.f32.mrf.mxu0
      %v2394 = vadd.f32 0.0, %v2393
      %v2395 = vpop.f32.mrf.mxu0
      %v2396 = vadd.f32 0.0, %v2395
      %2397 = vmatmul.bf16.gmra.mxu0 %v1672
      %v2398 = vpop.f32.mrf.mxu0
      %v2399 = vadd.f32 0.0, %v2398
      %v2400 = vpop.f32.mrf.mxu0
      %v2401 = vadd.f32 0.0, %v2400
      %2402 = vmatmul.bf16.gmra.mxu0 %v1675
      %v2403 = vpop.f32.mrf.mxu0
      %v2404 = vadd.f32 0.0, %v2403
      %v2405 = vpop.f32.mrf.mxu0
      %v2406 = vadd.f32 0.0, %v2405
      %2407 = vmatmul.bf16.gmra.mxu0 %v1678
      %v2408 = vpop.f32.mrf.mxu0
      %v2409 = vadd.f32 0.0, %v2408
      %v2410 = vpop.f32.mrf.mxu0
      %v2411 = vadd.f32 0.0, %v2410
      %2412 = vmatmul.bf16.gmra.mxu0 %v1681
      %v2413 = vpop.f32.mrf.mxu0
      %v2414 = vadd.f32 0.0, %v2413
      %v2415 = vpop.f32.mrf.mxu0
      %v2416 = vadd.f32 0.0, %v2415
      %2417 = vmatmul.bf16.gmra.mxu0 %v1684
      %v2418 = vpop.f32.mrf.mxu0
      %v2419 = vadd.f32 0.0, %v2418
      %v2420 = vpop.f32.mrf.mxu0
      %v2421 = vadd.f32 0.0, %v2420
      %2422 = vmatmul.bf16.gmra.mxu0 %v1687
      %v2423 = vpop.f32.mrf.mxu0
      %v2424 = vadd.f32 0.0, %v2423
      %v2425 = vpop.f32.mrf.mxu0
      %v2426 = vadd.f32 0.0, %v2425
      %2427 = vmatmul.bf16.gmra.mxu0 %v1690
      %v2428 = vpop.f32.mrf.mxu0
      %v2429 = vadd.f32 0.0, %v2428
      %v2430 = vpop.f32.mrf.mxu0
      %v2431 = vadd.f32 0.0, %v2430
      %2432 = vmatmul.bf16.gmra.mxu0 %v1693
      %v2433 = vpop.f32.mrf.mxu0
      %v2434 = vadd.f32 0.0, %v2433
      %v2435 = vpop.f32.mrf.mxu0
      %v2436 = vadd.f32 0.0, %v2435
      %2437 = vmatmul.bf16.gmra.mxu0 %v1696
      %v2438 = vpop.f32.mrf.mxu0
      %v2439 = vadd.f32 0.0, %v2438
      %v2440 = vpop.f32.mrf.mxu0
      %v2441 = vadd.f32 0.0, %v2440
      %2442 = vmatmul.bf16.gmra.mxu0 %v1699
      %v2443 = vpop.f32.mrf.mxu0
      %v2444 = vadd.f32 0.0, %v2443
      %v2445 = vpop.f32.mrf.mxu0
      %v2446 = vadd.f32 0.0, %v2445
      %2447 = vmatmul.bf16.gmra.mxu0 %v1702
      %v2448 = vpop.f32.mrf.mxu0
      %v2449 = vadd.f32 0.0, %v2448
      %v2450 = vpop.f32.mrf.mxu0
      %v2451 = vadd.f32 0.0, %v2450
      %2452 = vmatmul.bf16.gmra.mxu0 %v1705
      %v2453 = vpop.f32.mrf.mxu0
      %v2454 = vadd.f32 0.0, %v2453
      %v2455 = vpop.f32.mrf.mxu0
      %v2456 = vadd.f32 0.0, %v2455
      %2457 = vmatmul.bf16.gmra.mxu0 %v1708
      %v2458 = vpop.f32.mrf.mxu0
      %v2459 = vadd.f32 0.0, %v2458
      %v2460 = vpop.f32.mrf.mxu0
      %v2461 = vadd.f32 0.0, %v2460
      %2462 = vmatmul.bf16.gmra.mxu0 %v1711
      %v2463 = vpop.f32.mrf.mxu0
      %v2464 = vadd.f32 0.0, %v2463
      %v2465 = vpop.f32.mrf.mxu0
      %v2466 = vadd.f32 0.0, %v2465
      %2467 = vmatmul.bf16.gmra.mxu0 %v1714
      %v2468 = vpop.f32.mrf.mxu0
      %v2469 = vadd.f32 0.0, %v2468
      %v2470 = vpop.f32.mrf.mxu0
      %v2471 = vadd.f32 0.0, %v2470
      %2472 = vmatmul.bf16.gmra.mxu0 %v1717
      %v2473 = vpop.f32.mrf.mxu0
      %v2474 = vadd.f32 0.0, %v2473
      %v2475 = vpop.f32.mrf.mxu0
      %v2476 = vadd.f32 0.0, %v2475
      %2477 = vmatmul.bf16.gmra.mxu0 %v1720
      %v2478 = vpop.f32.mrf.mxu0
      %v2479 = vadd.f32 0.0, %v2478
      %v2480 = vpop.f32.mrf.mxu0
      %v2481 = vadd.f32 0.0, %v2480
      %2482 = vmatmul.bf16.gmra.mxu0 %v1723
      %v2483 = vpop.f32.mrf.mxu0
      %v2484 = vadd.f32 0.0, %v2483
      %v2485 = vpop.f32.mrf.mxu0
      %v2486 = vadd.f32 0.0, %v2485
      %2487 = vmatmul.bf16.gmra.mxu0 %v1726
      %v2488 = vpop.f32.mrf.mxu0
      %v2489 = vadd.f32 0.0, %v2488
      %v2490 = vpop.f32.mrf.mxu0
      %v2491 = vadd.f32 0.0, %v2490
      %2492 = vmatmul.bf16.gmra.mxu0 %v1729
      %v2493 = vpop.f32.mrf.mxu0
      %v2494 = vadd.f32 0.0, %v2493
      %v2495 = vpop.f32.mrf.mxu0
      %v2496 = vadd.f32 0.0, %v2495
      %2497 = vmatmul.bf16.gmra.mxu0 %v1732
      %v2498 = vpop.f32.mrf.mxu0
      %v2499 = vadd.f32 0.0, %v2498
      %v2500 = vpop.f32.mrf.mxu0
      %v2501 = vadd.f32 0.0, %v2500
      %2502 = vmatmul.bf16.gmra.mxu0 %v1735
      %v2503 = vpop.f32.mrf.mxu0
      %v2504 = vadd.f32 0.0, %v2503
      %v2505 = vpop.f32.mrf.mxu0
      %v2506 = vadd.f32 0.0, %v2505
      %2507 = vmatmul.bf16.gmra.mxu0 %v1738
      %v2508 = vpop.f32.mrf.mxu0
      %v2509 = vadd.f32 0.0, %v2508
      %v2510 = vpop.f32.mrf.mxu0
      %v2511 = vadd.f32 0.0, %v2510
      %2512 = vmatmul.bf16.gmra.mxu0 %v1741
      %v2513 = vpop.f32.mrf.mxu0
      %v2514 = vadd.f32 0.0, %v2513
      %v2515 = vpop.f32.mrf.mxu0
      %v2516 = vadd.f32 0.0, %v2515
      %2517 = vmatmul.bf16.gmra.mxu0 %v1744
      %v2518 = vpop.f32.mrf.mxu0
      %v2519 = vadd.f32 0.0, %v2518
      %v2520 = vpop.f32.mrf.mxu0
      %v2521 = vadd.f32 0.0, %v2520
      %2522 = vmatmul.bf16.gmra.mxu0 %v1747
      %v2523 = vpop.f32.mrf.mxu0
      %v2524 = vadd.f32 0.0, %v2523
      %v2525 = vpop.f32.mrf.mxu0
      %v2526 = vadd.f32 0.0, %v2525
      %2527 = vmatmul.bf16.gmra.mxu0 %v1750
      %v2528 = vpop.f32.mrf.mxu0
      %v2529 = vadd.f32 0.0, %v2528
      %v2530 = vpop.f32.mrf.mxu0
      %v2531 = vadd.f32 0.0, %v2530
      %2532 = vmatmul.bf16.gmra.mxu0 %v1753
      %v2533 = vpop.f32.mrf.mxu0
      %v2534 = vadd.f32 0.0, %v2533
      %v2535 = vpop.f32.mrf.mxu0
      %v2536 = vadd.f32 0.0, %v2535
      %2537 = vmatmul.bf16.gmra.mxu0 %v1756
      %v2538 = vpop.f32.mrf.mxu0
      %v2539 = vadd.f32 0.0, %v2538
      %v2540 = vpop.f32.mrf.mxu0
      %v2541 = vadd.f32 0.0, %v2540
      %2542 = vmatmul.bf16.gmra.mxu0 %v1759
      %v2543 = vpop.f32.mrf.mxu0
      %v2544 = vadd.f32 0.0, %v2543
      %v2545 = vpop.f32.mrf.mxu0
      %v2546 = vadd.f32 0.0, %v2545
      %2547 = vmatmul.bf16.gmra.mxu0 %v1762
      %v2548 = vpop.f32.mrf.mxu0
      %v2549 = vadd.f32 0.0, %v2548
      %v2550 = vpop.f32.mrf.mxu0
      %v2551 = vadd.f32 0.0, %v2550
      %2552 = vmatmul.bf16.gmra.mxu0 %v1765
      %v2553 = vpop.f32.mrf.mxu0
      %v2554 = vadd.f32 0.0, %v2553
      %v2555 = vpop.f32.mrf.mxu0
      %v2556 = vadd.f32 0.0, %v2555
      %2557 = vmatmul.bf16.gmra.mxu0 %v1768
      %v2558 = vpop.f32.mrf.mxu0
      %v2559 = vadd.f32 0.0, %v2558
      %v2560 = vpop.f32.mrf.mxu0
      %v2561 = vadd.f32 0.0, %v2560
      %2562 = vmatmul.bf16.gmra.mxu0 %v1771
      %v2563 = vpop.f32.mrf.mxu0
      %v2564 = vadd.f32 0.0, %v2563
      %v2565 = vpop.f32.mrf.mxu0
      %v2566 = vadd.f32 0.0, %v2565
      %2567 = vmatmul.bf16.gmra.mxu0 %v1774
      %v2568 = vpop.f32.mrf.mxu0
      %v2569 = vadd.f32 0.0, %v2568
      %v2570 = vpop.f32.mrf.mxu0
      %v2571 = vadd.f32 0.0, %v2570
      %2572 = vmatmul.bf16.gmra.mxu0 %v1777
      %v2573 = vpop.f32.mrf.mxu0
      %v2574 = vadd.f32 0.0, %v2573
      %v2575 = vpop.f32.mrf.mxu0
      %v2576 = vadd.f32 0.0, %v2575
      %2577 = vmatmul.bf16.gmra.mxu0 %v1780
      %v2578 = vpop.f32.mrf.mxu0
      %v2579 = vadd.f32 0.0, %v2578
      %v2580 = vpop.f32.mrf.mxu0
      %2581 = vdwg.mxu0
      %v2582 = vld [vmem:[%s2] sm:$0x1]
      %v2584 = vperm.slane %v2582, 0
      %v2586 = vmul.f32 %v1799, %v2584
      %v2587 = vmul.f32 %v1801, %v2584
      %v2588 = vmul.f32 %v1804, %v2584
      %v2589 = vmul.f32 %v1806, %v2584
      %v2590 = vmul.f32 %v1809, %v2584
      %v2591 = vmul.f32 %v1811, %v2584
      %v2592 = vmul.f32 %v1814, %v2584
      %v2593 = vmul.f32 %v1816, %v2584
      %v2594 = vmul.f32 %v1819, %v2584
      %v2595 = vmul.f32 %v1821, %v2584
      %v2596 = vmul.f32 %v1824, %v2584
      %v2597 = vmul.f32 %v1826, %v2584
      %v2598 = vmul.f32 %v1829, %v2584
      %v2599 = vmul.f32 %v1831, %v2584
      %v2600 = vmul.f32 %v1834, %v2584
      %v2601 = vmul.f32 %v1836, %v2584
      %v2602 = vmul.f32 %v1839, %v2584
      %v2603 = vmul.f32 %v1841, %v2584
      %v2604 = vmul.f32 %v1844, %v2584
      %v2605 = vmul.f32 %v1846, %v2584
      %v2606 = vmul.f32 %v1849, %v2584
      %v2607 = vmul.f32 %v1851, %v2584
      %v2608 = vmul.f32 %v1854, %v2584
      %v2609 = vmul.f32 %v1856, %v2584
      %v2610 = vmul.f32 %v1859, %v2584
      %v2611 = vmul.f32 %v1861, %v2584
      %v2612 = vmul.f32 %v1864, %v2584
      %v2613 = vmul.f32 %v1866, %v2584
      %v2614 = vmul.f32 %v1869, %v2584
      %v2615 = vmul.f32 %v1871, %v2584
      %v2616 = vmul.f32 %v1874, %v2584
      %v2617 = vmul.f32 %v1876, %v2584
      %v2618 = vmul.f32 %v1879, %v2584
      %v2619 = vmul.f32 %v1881, %v2584
      %v2620 = vmul.f32 %v1884, %v2584
      %v2621 = vmul.f32 %v1886, %v2584
      %v2622 = vmul.f32 %v1889, %v2584
      %v2623 = vmul.f32 %v1891, %v2584
      %v2624 = vmul.f32 %v1894, %v2584
      %v2625 = vmul.f32 %v1896, %v2584
      %v2626 = vmul.f32 %v1899, %v2584
      %v2627 = vmul.f32 %v1901, %v2584
      %v2628 = vmul.f32 %v1904, %v2584
      %v2629 = vmul.f32 %v1906, %v2584
      %v2630 = vmul.f32 %v1909, %v2584
      %v2631 = vmul.f32 %v1911, %v2584
      %v2632 = vmul.f32 %v1914, %v2584
      %v2633 = vmul.f32 %v1916, %v2584
      %v2634 = vmul.f32 %v1919, %v2584
      %v2635 = vmul.f32 %v1921, %v2584
      %v2636 = vmul.f32 %v1924, %v2584
      %v2637 = vmul.f32 %v1926, %v2584
      %v2638 = vmul.f32 %v1929, %v2584
      %v2639 = vmul.f32 %v1931, %v2584
      %v2640 = vmul.f32 %v1934, %v2584
      %v2641 = vmul.f32 %v1936, %v2584
      %v2642 = vmul.f32 %v1939, %v2584
      %v2643 = vmul.f32 %v1941, %v2584
      %v2644 = vmul.f32 %v1944, %v2584
      %v2645 = vmul.f32 %v1946, %v2584
      %v2646 = vmul.f32 %v1949, %v2584
      %v2647 = vmul.f32 %v1951, %v2584
      %v2648 = vmul.f32 %v1954, %v2584
      %v2649 = vmul.f32 %v1956, %v2584
      %v2650 = vmul.f32 %v1959, %v2584
      %v2651 = vmul.f32 %v1961, %v2584
      %v2652 = vmul.f32 %v1964, %v2584
      %v2653 = vmul.f32 %v1966, %v2584
      %v2654 = vmul.f32 %v1969, %v2584
      %v2655 = vmul.f32 %v1971, %v2584
      %v2656 = vmul.f32 %v1974, %v2584
      %v2657 = vmul.f32 %v1976, %v2584
      %v2658 = vmul.f32 %v1979, %v2584
      %v2659 = vmul.f32 %v1981, %v2584
      %v2660 = vmul.f32 %v1984, %v2584
      %v2661 = vmul.f32 %v1986, %v2584
      %v2662 = vmul.f32 %v1989, %v2584
      %v2663 = vmul.f32 %v1991, %v2584
      %v2664 = vmul.f32 %v1994, %v2584
      %v2665 = vmul.f32 %v1996, %v2584
      %v2666 = vmul.f32 %v1999, %v2584
      %v2667 = vmul.f32 %v2001, %v2584
      %v2668 = vmul.f32 %v2004, %v2584
      %v2669 = vmul.f32 %v2006, %v2584
      %v2670 = vmul.f32 %v2009, %v2584
      %v2671 = vmul.f32 %v2011, %v2584
      %v2672 = vmul.f32 %v2014, %v2584
      %v2673 = vmul.f32 %v2016, %v2584
      %v2674 = vmul.f32 %v2019, %v2584
      %v2675 = vmul.f32 %v2021, %v2584
      %v2676 = vmul.f32 %v2024, %v2584
      %v2677 = vmul.f32 %v2026, %v2584
      %v2678 = vmul.f32 %v2029, %v2584
      %v2679 = vmul.f32 %v2031, %v2584
      %v2680 = vmul.f32 %v2034, %v2584
      %v2681 = vmul.f32 %v2036, %v2584
      %v2682 = vmul.f32 %v2039, %v2584
      %v2683 = vmul.f32 %v2041, %v2584
      %v2684 = vmul.f32 %v2044, %v2584
      %v2685 = vmul.f32 %v2046, %v2584
      %v2686 = vmul.f32 %v2049, %v2584
      %v2687 = vmul.f32 %v2051, %v2584
      %v2688 = vmul.f32 %v2054, %v2584
      %v2689 = vmul.f32 %v2056, %v2584
      %v2690 = vmul.f32 %v2059, %v2584
      %v2691 = vmul.f32 %v2061, %v2584
      %v2692 = vmul.f32 %v2064, %v2584
      %v2693 = vmul.f32 %v2066, %v2584
      %v2694 = vmul.f32 %v2069, %v2584
      %v2695 = vmul.f32 %v2071, %v2584
      %v2696 = vmul.f32 %v2074, %v2584
      %v2697 = vmul.f32 %v2076, %v2584
      %v2698 = vmul.f32 %v2079, %v2584
      %v2699 = vmul.f32 %v2081, %v2584
      %v2700 = vmul.f32 %v2084, %v2584
      %v2701 = vmul.f32 %v2086, %v2584
      %v2702 = vmul.f32 %v2089, %v2584
      %v2703 = vmul.f32 %v2091, %v2584
      %v2704 = vmul.f32 %v2094, %v2584
      %v2705 = vmul.f32 %v2096, %v2584
      %v2706 = vmul.f32 %v2099, %v2584
      %v2707 = vmul.f32 %v2101, %v2584
      %v2708 = vmul.f32 %v2104, %v2584
      %v2709 = vmul.f32 %v2106, %v2584
      %v2710 = vmul.f32 %v2109, %v2584
      %v2711 = vmul.f32 %v2111, %v2584
      %v2712 = vmul.f32 %v2114, %v2584
      %v2713 = vmul.f32 %v2116, %v2584
      %v2714 = vmul.f32 %v2119, %v2584
      %v2715 = vmul.f32 %v2121, %v2584
      %v2716 = vmul.f32 %v2124, %v2584
      %v2717 = vmul.f32 %v2126, %v2584
      %v2718 = vmul.f32 %v2129, %v2584
      %v2719 = vmul.f32 %v2131, %v2584
      %v2720 = vmul.f32 %v2134, %v2584
      %v2721 = vmul.f32 %v2136, %v2584
      %v2722 = vmul.f32 %v2139, %v2584
      %v2723 = vmul.f32 %v2141, %v2584
      %v2724 = vmul.f32 %v2144, %v2584
      %v2725 = vmul.f32 %v2146, %v2584
      %v2726 = vmul.f32 %v2149, %v2584
      %v2727 = vmul.f32 %v2151, %v2584
      %v2728 = vmul.f32 %v2154, %v2584
      %v2729 = vmul.f32 %v2156, %v2584
      %v2730 = vmul.f32 %v2159, %v2584
      %v2731 = vmul.f32 %v2161, %v2584
      %v2732 = vmul.f32 %v2164, %v2584
      %v2733 = vmul.f32 %v2166, %v2584
      %v2734 = vmul.f32 %v2169, %v2584
      %v2735 = vmul.f32 %v2171, %v2584
      %v2736 = vmul.f32 %v2174, %v2584
      %v2737 = vmul.f32 %v2176, %v2584
      %v2738 = vmul.f32 %v2179, %v2584
      %v2739 = vmul.f32 %v2181, %v2584
      %v2740 = vmul.f32 %v2184, %v2584
      %v2741 = vmul.f32 %v2186, %v2584
      %v2742 = vmul.f32 %v2189, %v2584
      %v2743 = vmul.f32 %v2191, %v2584
      %v2744 = vmul.f32 %v2194, %v2584
      %v2745 = vmul.f32 %v2196, %v2584
      %v2746 = vmul.f32 %v2199, %v2584
      %v2747 = vmul.f32 %v2201, %v2584
      %v2748 = vmul.f32 %v2204, %v2584
      %v2749 = vmul.f32 %v2206, %v2584
      %v2750 = vmul.f32 %v2209, %v2584
      %v2751 = vmul.f32 %v2211, %v2584
      %v2752 = vmul.f32 %v2214, %v2584
      %v2753 = vmul.f32 %v2216, %v2584
      %v2754 = vmul.f32 %v2219, %v2584
      %v2755 = vmul.f32 %v2221, %v2584
      %v2756 = vmul.f32 %v2224, %v2584
      %v2757 = vmul.f32 %v2226, %v2584
      %v2758 = vmul.f32 %v2229, %v2584
      %v2759 = vmul.f32 %v2231, %v2584
      %v2760 = vmul.f32 %v2234, %v2584
      %v2761 = vmul.f32 %v2236, %v2584
      %v2762 = vmul.f32 %v2239, %v2584
      %v2763 = vmul.f32 %v2241, %v2584
      %v2764 = vmul.f32 %v2244, %v2584
      %v2765 = vmul.f32 %v2246, %v2584
      %v2766 = vmul.f32 %v2249, %v2584
      %v2767 = vmul.f32 %v2251, %v2584
      %v2768 = vmul.f32 %v2254, %v2584
      %v2769 = vmul.f32 %v2256, %v2584
      %v2770 = vmul.f32 %v2259, %v2584
      %v2771 = vmul.f32 %v2261, %v2584
      %v2772 = vmul.f32 %v2264, %v2584
      %v2773 = vmul.f32 %v2266, %v2584
      %v2774 = vmul.f32 %v2269, %v2584
      %v2775 = vmul.f32 %v2271, %v2584
      %v2776 = vmul.f32 %v2274, %v2584
      %v2777 = vmul.f32 %v2276, %v2584
      %v2778 = vmul.f32 %v2279, %v2584
      %v2779 = vmul.f32 %v2281, %v2584
      %v2780 = vmul.f32 %v2284, %v2584
      %v2781 = vmul.f32 %v2286, %v2584
      %v2782 = vmul.f32 %v2289, %v2584
      %v2783 = vmul.f32 %v2291, %v2584
      %v2784 = vmul.f32 %v2294, %v2584
      %v2785 = vmul.f32 %v2296, %v2584
      %v2786 = vmul.f32 %v2299, %v2584
      %v2787 = vmul.f32 %v2301, %v2584
      %v2788 = vmul.f32 %v2304, %v2584
      %v2789 = vmul.f32 %v2306, %v2584
      %v2790 = vmul.f32 %v2309, %v2584
      %v2791 = vmul.f32 %v2311, %v2584
      %v2792 = vmul.f32 %v2314, %v2584
      %v2793 = vmul.f32 %v2316, %v2584
      %v2794 = vmul.f32 %v2319, %v2584
      %v2795 = vmul.f32 %v2321, %v2584
      %v2796 = vmul.f32 %v2324, %v2584
      %v2797 = vmul.f32 %v2326, %v2584
      %v2798 = vmul.f32 %v2329, %v2584
      %v2799 = vmul.f32 %v2331, %v2584
      %v2800 = vmul.f32 %v2334, %v2584
      %v2801 = vmul.f32 %v2336, %v2584
      %v2802 = vmul.f32 %v2339, %v2584
      %v2803 = vmul.f32 %v2341, %v2584
      %v2804 = vmul.f32 %v2344, %v2584
      %v2805 = vmul.f32 %v2346, %v2584
      %v2806 = vmul.f32 %v2349, %v2584
      %v2807 = vmul.f32 %v2351, %v2584
      %v2808 = vmul.f32 %v2354, %v2584
      %v2809 = vmul.f32 %v2356, %v2584
      %v2810 = vmul.f32 %v2359, %v2584
      %v2811 = vmul.f32 %v2361, %v2584
      %v2812 = vmul.f32 %v2364, %v2584
      %v2813 = vmul.f32 %v2366, %v2584
      %v2814 = vmul.f32 %v2369, %v2584
      %v2815 = vmul.f32 %v2371, %v2584
      %v2816 = vmul.f32 %v2374, %v2584
      %v2817 = vmul.f32 %v2376, %v2584
      %v2818 = vmul.f32 %v2379, %v2584
      %v2819 = vmul.f32 %v2381, %v2584
      %v2820 = vmul.f32 %v2384, %v2584
      %v2821 = vmul.f32 %v2386, %v2584
      %v2822 = vmul.f32 %v2389, %v2584
      %v2823 = vmul.f32 %v2391, %v2584
      %v2824 = vmul.f32 %v2394, %v2584
      %v2825 = vmul.f32 %v2396, %v2584
      %v2826 = vmul.f32 %v2399, %v2584
      %v2827 = vmul.f32 %v2401, %v2584
      %v2828 = vmul.f32 %v2404, %v2584
      %v2829 = vmul.f32 %v2406, %v2584
      %v2830 = vmul.f32 %v2409, %v2584
      %v2831 = vmul.f32 %v2411, %v2584
      %v2832 = vmul.f32 %v2414, %v2584
      %v2833 = vmul.f32 %v2416, %v2584
      %v2834 = vmul.f32 %v2419, %v2584
      %v2835 = vmul.f32 %v2421, %v2584
      %v2836 = vmul.f32 %v2424, %v2584
      %v2837 = vmul.f32 %v2426, %v2584
      %v2838 = vmul.f32 %v2429, %v2584
      %v2839 = vmul.f32 %v2431, %v2584
      %v2840 = vmul.f32 %v2434, %v2584
      %v2841 = vmul.f32 %v2436, %v2584
      %v2842 = vmul.f32 %v2439, %v2584
      %v2843 = vmul.f32 %v2441, %v2584
      %v2844 = vmul.f32 %v2444, %v2584
      %v2845 = vmul.f32 %v2446, %v2584
      %v2846 = vmul.f32 %v2449, %v2584
      %v2847 = vmul.f32 %v2451, %v2584
      %v2848 = vmul.f32 %v2454, %v2584
      %v2849 = vmul.f32 %v2456, %v2584
      %v2850 = vmul.f32 %v2459, %v2584
      %v2851 = vmul.f32 %v2461, %v2584
      %v2852 = vmul.f32 %v2464, %v2584
      %v2853 = vmul.f32 %v2466, %v2584
      %v2854 = vmul.f32 %v2469, %v2584
      %v2855 = vmul.f32 %v2471, %v2584
      %v2856 = vmul.f32 %v2474, %v2584
      %v2857 = vmul.f32 %v2476, %v2584
      %v2858 = vmul.f32 %v2479, %v2584
      %v2859 = vmul.f32 %v2481, %v2584
      %v2860 = vmul.f32 %v2484, %v2584
      %v2861 = vmul.f32 %v2486, %v2584
      %v2862 = vmul.f32 %v2489, %v2584
      %v2863 = vmul.f32 %v2491, %v2584
      %v2864 = vmul.f32 %v2494, %v2584
      %v2865 = vmul.f32 %v2496, %v2584
      %v2866 = vmul.f32 %v2499, %v2584
      %v2867 = vmul.f32 %v2501, %v2584
      %v2868 = vmul.f32 %v2504, %v2584
      %v2869 = vmul.f32 %v2506, %v2584
      %v2870 = vmul.f32 %v2509, %v2584
      %v2871 = vmul.f32 %v2511, %v2584
      %v2872 = vmul.f32 %v2514, %v2584
      %v2873 = vmul.f32 %v2516, %v2584
      %v2874 = vmul.f32 %v2519, %v2584
      %v2875 = vmul.f32 %v2521, %v2584
      %v2876 = vmul.f32 %v2524, %v2584
      %v2877 = vmul.f32 %v2526, %v2584
      %v2878 = vmul.f32 %v2529, %v2584
      %v2879 = vmul.f32 %v2531, %v2584
      %v2880 = vmul.f32 %v2534, %v2584
      %v2881 = vmul.f32 %v2536, %v2584
      %v2882 = vmul.f32 %v2539, %v2584
      %v2883 = vmul.f32 %v2541, %v2584
      %v2884 = vmul.f32 %v2544, %v2584
      %v2885 = vmul.f32 %v2546, %v2584
      %v2886 = vmul.f32 %v2549, %v2584
      %v2887 = vmul.f32 %v2551, %v2584
      %v2888 = vmul.f32 %v2554, %v2584
      %v2889 = vmul.f32 %v2556, %v2584
      %v2890 = vmul.f32 %v2559, %v2584
      %v2891 = vmul.f32 %v2561, %v2584
      %v2892 = vmul.f32 %v2564, %v2584
      %v2893 = vmul.f32 %v2566, %v2584
      %v2894 = vmul.f32 %v2569, %v2584
      %v2895 = vmul.f32 %v2571, %v2584
      %v2896 = vmul.f32 %v2574, %v2584
      %v2897 = vmul.f32 %v2576, %v2584
      %v2898 = vmul.f32 %v2579, %v2584
      %v2899 = vld [vmem:[%s3] sm:$0x1]
      %v2901 = vperm.slane %v2899, 0
      %v2903 = vadd.f32 %v2586, %v2901
      %v2904 = vadd.f32 %v2587, %v2901
      %v2905 = vadd.f32 %v2588, %v2901
      %v2906 = vadd.f32 %v2589, %v2901
      %v2907 = vadd.f32 %v2590, %v2901
      %v2908 = vadd.f32 %v2591, %v2901
      %v2909 = vadd.f32 %v2592, %v2901
      %v2910 = vadd.f32 %v2593, %v2901
      %v2911 = vadd.f32 %v2594, %v2901
      %v2912 = vadd.f32 %v2595, %v2901
      %v2913 = vadd.f32 %v2596, %v2901
      %v2914 = vadd.f32 %v2597, %v2901
      %v2915 = vadd.f32 %v2598, %v2901
      %v2916 = vadd.f32 %v2599, %v2901
      %v2917 = vadd.f32 %v2600, %v2901
      %v2918 = vadd.f32 %v2601, %v2901
      %v2919 = vadd.f32 %v2602, %v2901
      %v2920 = vadd.f32 %v2603, %v2901
      %v2921 = vadd.f32 %v2604, %v2901
      %v2922 = vadd.f32 %v2605, %v2901
      %v2923 = vadd.f32 %v2606, %v2901
      %v2924 = vadd.f32 %v2607, %v2901
      %v2925 = vadd.f32 %v2608, %v2901
      %v2926 = vadd.f32 %v2609, %v2901
      %v2927 = vadd.f32 %v2610, %v2901
      %v2928 = vadd.f32 %v2611, %v2901
      %v2929 = vadd.f32 %v2612, %v2901
      %v2930 = vadd.f32 %v2613, %v2901
      %v2931 = vadd.f32 %v2614, %v2901
      %v2932 = vadd.f32 %v2615, %v2901
      %v2933 = vadd.f32 %v2616, %v2901
      %v2934 = vadd.f32 %v2617, %v2901
      %v2935 = vadd.f32 %v2618, %v2901
      %v2936 = vadd.f32 %v2619, %v2901
      %v2937 = vadd.f32 %v2620, %v2901
      %v2938 = vadd.f32 %v2621, %v2901
      %v2939 = vadd.f32 %v2622, %v2901
      %v2940 = vadd.f32 %v2623, %v2901
      %v2941 = vadd.f32 %v2624, %v2901
      %v2942 = vadd.f32 %v2625, %v2901
      %v2943 = vadd.f32 %v2626, %v2901
      %v2944 = vadd.f32 %v2627, %v2901
      %v2945 = vadd.f32 %v2628, %v2901
      %v2946 = vadd.f32 %v2629, %v2901
      %v2947 = vadd.f32 %v2630, %v2901
      %v2948 = vadd.f32 %v2631, %v2901
      %v2949 = vadd.f32 %v2632, %v2901
      %v2950 = vadd.f32 %v2633, %v2901
      %v2951 = vadd.f32 %v2634, %v2901
      %v2952 = vadd.f32 %v2635, %v2901
      %v2953 = vadd.f32 %v2636, %v2901
      %v2954 = vadd.f32 %v2637, %v2901
      %v2955 = vadd.f32 %v2638, %v2901
      %v2956 = vadd.f32 %v2639, %v2901
      %v2957 = vadd.f32 %v2640, %v2901
      %v2958 = vadd.f32 %v2641, %v2901
      %v2959 = vadd.f32 %v2642, %v2901
      %v2960 = vadd.f32 %v2643, %v2901
      %v2961 = vadd.f32 %v2644, %v2901
      %v2962 = vadd.f32 %v2645, %v2901
      %v2963 = vadd.f32 %v2646, %v2901
      %v2964 = vadd.f32 %v2647, %v2901
      %v2965 = vadd.f32 %v2648, %v2901
      %v2966 = vadd.f32 %v2649, %v2901
      %v2967 = vadd.f32 %v2650, %v2901
      %v2968 = vadd.f32 %v2651, %v2901
      %v2969 = vadd.f32 %v2652, %v2901
      %v2970 = vadd.f32 %v2653, %v2901
      %v2971 = vadd.f32 %v2654, %v2901
      %v2972 = vadd.f32 %v2655, %v2901
      %v2973 = vadd.f32 %v2656, %v2901
      %v2974 = vadd.f32 %v2657, %v2901
      %v2975 = vadd.f32 %v2658, %v2901
      %v2976 = vadd.f32 %v2659, %v2901
      %v2977 = vadd.f32 %v2660, %v2901
      %v2978 = vadd.f32 %v2661, %v2901
      %v2979 = vadd.f32 %v2662, %v2901
      %v2980 = vadd.f32 %v2663, %v2901
      %v2981 = vadd.f32 %v2664, %v2901
      %v2982 = vadd.f32 %v2665, %v2901
      %v2983 = vadd.f32 %v2666, %v2901
      %v2984 = vadd.f32 %v2667, %v2901
      %v2985 = vadd.f32 %v2668, %v2901
      %v2986 = vadd.f32 %v2669, %v2901
      %v2987 = vadd.f32 %v2670, %v2901
      %v2988 = vadd.f32 %v2671, %v2901
      %v2989 = vadd.f32 %v2672, %v2901
      %v2990 = vadd.f32 %v2673, %v2901
      %v2991 = vadd.f32 %v2674, %v2901
      %v2992 = vadd.f32 %v2675, %v2901
      %v2993 = vadd.f32 %v2676, %v2901
      %v2994 = vadd.f32 %v2677, %v2901
      %v2995 = vadd.f32 %v2678, %v2901
      %v2996 = vadd.f32 %v2679, %v2901
      %v2997 = vadd.f32 %v2680, %v2901
      %v2998 = vadd.f32 %v2681, %v2901
      %v2999 = vadd.f32 %v2682, %v2901
      %v3000 = vadd.f32 %v2683, %v2901
      %v3001 = vadd.f32 %v2684, %v2901
      %v3002 = vadd.f32 %v2685, %v2901
      %v3003 = vadd.f32 %v2686, %v2901
      %v3004 = vadd.f32 %v2687, %v2901
      %v3005 = vadd.f32 %v2688, %v2901
      %v3006 = vadd.f32 %v2689, %v2901
      %v3007 = vadd.f32 %v2690, %v2901
      %v3008 = vadd.f32 %v2691, %v2901
      %v3009 = vadd.f32 %v2692, %v2901
      %v3010 = vadd.f32 %v2693, %v2901
      %v3011 = vadd.f32 %v2694, %v2901
      %v3012 = vadd.f32 %v2695, %v2901
      %v3013 = vadd.f32 %v2696, %v2901
      %v3014 = vadd.f32 %v2697, %v2901
      %v3015 = vadd.f32 %v2698, %v2901
      %v3016 = vadd.f32 %v2699, %v2901
      %v3017 = vadd.f32 %v2700, %v2901
      %v3018 = vadd.f32 %v2701, %v2901
      %v3019 = vadd.f32 %v2702, %v2901
      %v3020 = vadd.f32 %v2703, %v2901
      %v3021 = vadd.f32 %v2704, %v2901
      %v3022 = vadd.f32 %v2705, %v2901
      %v3023 = vadd.f32 %v2706, %v2901
      %v3024 = vadd.f32 %v2707, %v2901
      %v3025 = vadd.f32 %v2708, %v2901
      %v3026 = vadd.f32 %v2709, %v2901
      %v3027 = vadd.f32 %v2710, %v2901
      %v3028 = vadd.f32 %v2711, %v2901
      %v3029 = vadd.f32 %v2712, %v2901
      %v3030 = vadd.f32 %v2713, %v2901
      %v3031 = vadd.f32 %v2714, %v2901
      %v3032 = vadd.f32 %v2715, %v2901
      %v3033 = vadd.f32 %v2716, %v2901
      %v3034 = vadd.f32 %v2717, %v2901
      %v3035 = vadd.f32 %v2718, %v2901
      %v3036 = vadd.f32 %v2719, %v2901
      %v3037 = vadd.f32 %v2720, %v2901
      %v3038 = vadd.f32 %v2721, %v2901
      %v3039 = vadd.f32 %v2722, %v2901
      %v3040 = vadd.f32 %v2723, %v2901
      %v3041 = vadd.f32 %v2724, %v2901
      %v3042 = vadd.f32 %v2725, %v2901
      %v3043 = vadd.f32 %v2726, %v2901
      %v3044 = vadd.f32 %v2727, %v2901
      %v3045 = vadd.f32 %v2728, %v2901
      %v3046 = vadd.f32 %v2729, %v2901
      %v3047 = vadd.f32 %v2730, %v2901
      %v3048 = vadd.f32 %v2731, %v2901
      %v3049 = vadd.f32 %v2732, %v2901
      %v3050 = vadd.f32 %v2733, %v2901
      %v3051 = vadd.f32 %v2734, %v2901
      %v3052 = vadd.f32 %v2735, %v2901
      %v3053 = vadd.f32 %v2736, %v2901
      %v3054 = vadd.f32 %v2737, %v2901
      %v3055 = vadd.f32 %v2738, %v2901
      %v3056 = vadd.f32 %v2739, %v2901
      %v3057 = vadd.f32 %v2740, %v2901
      %v3058 = vadd.f32 %v2741, %v2901
      %v3059 = vadd.f32 %v2742, %v2901
      %v3060 = vadd.f32 %v2743, %v2901
      %v3061 = vadd.f32 %v2744, %v2901
      %v3062 = vadd.f32 %v2745, %v2901
      %v3063 = vadd.f32 %v2746, %v2901
      %v3064 = vadd.f32 %v2747, %v2901
      %v3065 = vadd.f32 %v2748, %v2901
      %v3066 = vadd.f32 %v2749, %v2901
      %v3067 = vadd.f32 %v2750, %v2901
      %v3068 = vadd.f32 %v2751, %v2901
      %v3069 = vadd.f32 %v2752, %v2901
      %v3070 = vadd.f32 %v2753, %v2901
      %v3071 = vadd.f32 %v2754, %v2901
      %v3072 = vadd.f32 %v2755, %v2901
      %v3073 = vadd.f32 %v2756, %v2901
      %v3074 = vadd.f32 %v2757, %v2901
      %v3075 = vadd.f32 %v2758, %v2901
      %v3076 = vadd.f32 %v2759, %v2901
      %v3077 = vadd.f32 %v2760, %v2901
      %v3078 = vadd.f32 %v2761, %v2901
      %v3079 = vadd.f32 %v2762, %v2901
      %v3080 = vadd.f32 %v2763, %v2901
      %v3081 = vadd.f32 %v2764, %v2901
      %v3082 = vadd.f32 %v2765, %v2901
      %v3083 = vadd.f32 %v2766, %v2901
      %v3084 = vadd.f32 %v2767, %v2901
      %v3085 = vadd.f32 %v2768, %v2901
      %v3086 = vadd.f32 %v2769, %v2901
      %v3087 = vadd.f32 %v2770, %v2901
      %v3088 = vadd.f32 %v2771, %v2901
      %v3089 = vadd.f32 %v2772, %v2901
      %v3090 = vadd.f32 %v2773, %v2901
      %v3091 = vadd.f32 %v2774, %v2901
      %v3092 = vadd.f32 %v2775, %v2901
      %v3093 = vadd.f32 %v2776, %v2901
      %v3094 = vadd.f32 %v2777, %v2901
      %v3095 = vadd.f32 %v2778, %v2901
      %v3096 = vadd.f32 %v2779, %v2901
      %v3097 = vadd.f32 %v2780, %v2901
      %v3098 = vadd.f32 %v2781, %v2901
      %v3099 = vadd.f32 %v2782, %v2901
      %v3100 = vadd.f32 %v2783, %v2901
      %v3101 = vadd.f32 %v2784, %v2901
      %v3102 = vadd.f32 %v2785, %v2901
      %v3103 = vadd.f32 %v2786, %v2901
      %v3104 = vadd.f32 %v2787, %v2901
      %v3105 = vadd.f32 %v2788, %v2901
      %v3106 = vadd.f32 %v2789, %v2901
      %v3107 = vadd.f32 %v2790, %v2901
      %v3108 = vadd.f32 %v2791, %v2901
      %v3109 = vadd.f32 %v2792, %v2901
      %v3110 = vadd.f32 %v2793, %v2901
      %v3111 = vadd.f32 %v2794, %v2901
      %v3112 = vadd.f32 %v2795, %v2901
      %v3113 = vadd.f32 %v2796, %v2901
      %v3114 = vadd.f32 %v2797, %v2901
      %v3115 = vadd.f32 %v2798, %v2901
      %v3116 = vadd.f32 %v2799, %v2901
      %v3117 = vadd.f32 %v2800, %v2901
      %v3118 = vadd.f32 %v2801, %v2901
      %v3119 = vadd.f32 %v2802, %v2901
      %v3120 = vadd.f32 %v2803, %v2901
      %v3121 = vadd.f32 %v2804, %v2901
      %v3122 = vadd.f32 %v2805, %v2901
      %v3123 = vadd.f32 %v2806, %v2901
      %v3124 = vadd.f32 %v2807, %v2901
      %v3125 = vadd.f32 %v2808, %v2901
      %v3126 = vadd.f32 %v2809, %v2901
      %v3127 = vadd.f32 %v2810, %v2901
      %v3128 = vadd.f32 %v2811, %v2901
      %v3129 = vadd.f32 %v2812, %v2901
      %v3130 = vadd.f32 %v2813, %v2901
      %v3131 = vadd.f32 %v2814, %v2901
      %v3132 = vadd.f32 %v2815, %v2901
      %v3133 = vadd.f32 %v2816, %v2901
      %v3134 = vadd.f32 %v2817, %v2901
      %v3135 = vadd.f32 %v2818, %v2901
      %v3136 = vadd.f32 %v2819, %v2901
      %v3137 = vadd.f32 %v2820, %v2901
      %v3138 = vadd.f32 %v2821, %v2901
      %v3139 = vadd.f32 %v2822, %v2901
      %v3140 = vadd.f32 %v2823, %v2901
      %v3141 = vadd.f32 %v2824, %v2901
      %v3142 = vadd.f32 %v2825, %v2901
      %v3143 = vadd.f32 %v2826, %v2901
      %v3144 = vadd.f32 %v2827, %v2901
      %v3145 = vadd.f32 %v2828, %v2901
      %v3146 = vadd.f32 %v2829, %v2901
      %v3147 = vadd.f32 %v2830, %v2901
      %v3148 = vadd.f32 %v2831, %v2901
      %v3149 = vadd.f32 %v2832, %v2901
      %v3150 = vadd.f32 %v2833, %v2901
      %v3151 = vadd.f32 %v2834, %v2901
      %v3152 = vadd.f32 %v2835, %v2901
      %v3153 = vadd.f32 %v2836, %v2901
      %v3154 = vadd.f32 %v2837, %v2901
      %v3155 = vadd.f32 %v2838, %v2901
      %v3156 = vadd.f32 %v2839, %v2901
      %v3157 = vadd.f32 %v2840, %v2901
      %v3158 = vadd.f32 %v2841, %v2901
      %v3159 = vadd.f32 %v2842, %v2901
      %v3160 = vadd.f32 %v2843, %v2901
      %v3161 = vadd.f32 %v2844, %v2901
      %v3162 = vadd.f32 %v2845, %v2901
      %v3163 = vadd.f32 %v2846, %v2901
      %v3164 = vadd.f32 %v2847, %v2901
      %v3165 = vadd.f32 %v2848, %v2901
      %v3166 = vadd.f32 %v2849, %v2901
      %v3167 = vadd.f32 %v2850, %v2901
      %v3168 = vadd.f32 %v2851, %v2901
      %v3169 = vadd.f32 %v2852, %v2901
      %v3170 = vadd.f32 %v2853, %v2901
      %v3171 = vadd.f32 %v2854, %v2901
      %v3172 = vadd.f32 %v2855, %v2901
      %v3173 = vadd.f32 %v2856, %v2901
      %v3174 = vadd.f32 %v2857, %v2901
      %v3175 = vadd.f32 %v2858, %v2901
      %v3176 = vadd.f32 %v2859, %v2901
      %v3177 = vadd.f32 %v2860, %v2901
      %v3178 = vadd.f32 %v2861, %v2901
      %v3179 = vadd.f32 %v2862, %v2901
      %v3180 = vadd.f32 %v2863, %v2901
      %v3181 = vadd.f32 %v2864, %v2901
      %v3182 = vadd.f32 %v2865, %v2901
      %v3183 = vadd.f32 %v2866, %v2901
      %v3184 = vadd.f32 %v2867, %v2901
      %v3185 = vadd.f32 %v2868, %v2901
      %v3186 = vadd.f32 %v2869, %v2901
      %v3187 = vadd.f32 %v2870, %v2901
      %v3188 = vadd.f32 %v2871, %v2901
      %v3189 = vadd.f32 %v2872, %v2901
      %v3190 = vadd.f32 %v2873, %v2901
      %v3191 = vadd.f32 %v2874, %v2901
      %v3192 = vadd.f32 %v2875, %v2901
      %v3193 = vadd.f32 %v2876, %v2901
      %v3194 = vadd.f32 %v2877, %v2901
      %v3195 = vadd.f32 %v2878, %v2901
      %v3196 = vadd.f32 %v2879, %v2901
      %v3197 = vadd.f32 %v2880, %v2901
      %v3198 = vadd.f32 %v2881, %v2901
      %v3199 = vadd.f32 %v2882, %v2901
      %v3200 = vadd.f32 %v2883, %v2901
      %v3201 = vadd.f32 %v2884, %v2901
      %v3202 = vadd.f32 %v2885, %v2901
      %v3203 = vadd.f32 %v2886, %v2901
      %v3204 = vadd.f32 %v2887, %v2901
      %v3205 = vadd.f32 %v2888, %v2901
      %v3206 = vadd.f32 %v2889, %v2901
      %v3207 = vadd.f32 %v2890, %v2901
      %v3208 = vadd.f32 %v2891, %v2901
      %v3209 = vadd.f32 %v2892, %v2901
      %v3210 = vadd.f32 %v2893, %v2901
      %v3211 = vadd.f32 %v2894, %v2901
      %v3212 = vadd.f32 %v2895, %v2901
      %v3213 = vadd.f32 %v2896, %v2901
      %v3214 = vadd.f32 %v2897, %v2901
      %v3215 = vadd.f32 %v2898, %v2901
      %v3216 = vmax.f32 %v2903, 0.0
      %v3217 = vmax.f32 %v2904, 0.0
      %v3218 = vmax.f32 %v2905, 0.0
      %v3219 = vmax.f32 %v2906, 0.0
      %v3220 = vmax.f32 %v2907, 0.0
      %v3221 = vmax.f32 %v2908, 0.0
      %v3222 = vmax.f32 %v2909, 0.0
      %v3223 = vmax.f32 %v2910, 0.0
      %v3224 = vmax.f32 %v2911, 0.0
      %v3225 = vmax.f32 %v2912, 0.0
      %v3226 = vmax.f32 %v2913, 0.0
      %v3227 = vmax.f32 %v2914, 0.0
      %v3228 = vmax.f32 %v2915, 0.0
      %v3229 = vmax.f32 %v2916, 0.0
      %v3230 = vmax.f32 %v2917, 0.0
      %v3231 = vmax.f32 %v2918, 0.0
      %v3232 = vmax.f32 %v2919, 0.0
      %v3233 = vmax.f32 %v2920, 0.0
      %v3234 = vmax.f32 %v2921, 0.0
      %v3235 = vmax.f32 %v2922, 0.0
      %v3236 = vmax.f32 %v2923, 0.0
      %v3237 = vmax.f32 %v2924, 0.0
      %v3238 = vmax.f32 %v2925, 0.0
      %v3239 = vmax.f32 %v2926, 0.0
      %v3240 = vmax.f32 %v2927, 0.0
      %v3241 = vmax.f32 %v2928, 0.0
      %v3242 = vmax.f32 %v2929, 0.0
      %v3243 = vmax.f32 %v2930, 0.0
      %v3244 = vmax.f32 %v2931, 0.0
      %v3245 = vmax.f32 %v2932, 0.0
      %v3246 = vmax.f32 %v2933, 0.0
      %v3247 = vmax.f32 %v2934, 0.0
      %v3248 = vmax.f32 %v2935, 0.0
      %v3249 = vmax.f32 %v2936, 0.0
      %v3250 = vmax.f32 %v2937, 0.0
      %v3251 = vmax.f32 %v2938, 0.0
      %v3252 = vmax.f32 %v2939, 0.0
      %v3253 = vmax.f32 %v2940, 0.0
      %v3254 = vmax.f32 %v2941, 0.0
      %v3255 = vmax.f32 %v2942, 0.0
      %v3256 = vmax.f32 %v2943, 0.0
      %v3257 = vmax.f32 %v2944, 0.0
      %v3258 = vmax.f32 %v2945, 0.0
      %v3259 = vmax.f32 %v2946, 0.0
      %v3260 = vmax.f32 %v2947, 0.0
      %v3261 = vmax.f32 %v2948, 0.0
      %v3262 = vmax.f32 %v2949, 0.0
      %v3263 = vmax.f32 %v2950, 0.0
      %v3264 = vmax.f32 %v2951, 0.0
      %v3265 = vmax.f32 %v2952, 0.0
      %v3266 = vmax.f32 %v2953, 0.0
      %v3267 = vmax.f32 %v2954, 0.0
      %v3268 = vmax.f32 %v2955, 0.0
      %v3269 = vmax.f32 %v2956, 0.0
      %v3270 = vmax.f32 %v2957, 0.0
      %v3271 = vmax.f32 %v2958, 0.0
      %v3272 = vmax.f32 %v2959, 0.0
      %v3273 = vmax.f32 %v2960, 0.0
      %v3274 = vmax.f32 %v2961, 0.0
      %v3275 = vmax.f32 %v2962, 0.0
      %v3276 = vmax.f32 %v2963, 0.0
      %v3277 = vmax.f32 %v2964, 0.0
      %v3278 = vmax.f32 %v2965, 0.0
      %v3279 = vmax.f32 %v2966, 0.0
      %v3280 = vmax.f32 %v2967, 0.0
      %v3281 = vmax.f32 %v2968, 0.0
      %v3282 = vmax.f32 %v2969, 0.0
      %v3283 = vmax.f32 %v2970, 0.0
      %v3284 = vmax.f32 %v2971, 0.0
      %v3285 = vmax.f32 %v2972, 0.0
      %v3286 = vmax.f32 %v2973, 0.0
      %v3287 = vmax.f32 %v2974, 0.0
      %v3288 = vmax.f32 %v2975, 0.0
      %v3289 = vmax.f32 %v2976, 0.0
      %v3290 = vmax.f32 %v2977, 0.0
      %v3291 = vmax.f32 %v2978, 0.0
      %v3292 = vmax.f32 %v2979, 0.0
      %v3293 = vmax.f32 %v2980, 0.0
      %v3294 = vmax.f32 %v2981, 0.0
      %v3295 = vmax.f32 %v2982, 0.0
      %v3296 = vmax.f32 %v2983, 0.0
      %v3297 = vmax.f32 %v2984, 0.0
      %v3298 = vmax.f32 %v2985, 0.0
      %v3299 = vmax.f32 %v2986, 0.0
      %v3300 = vmax.f32 %v2987, 0.0
      %v3301 = vmax.f32 %v2988, 0.0
      %v3302 = vmax.f32 %v2989, 0.0
      %v3303 = vmax.f32 %v2990, 0.0
      %v3304 = vmax.f32 %v2991, 0.0
      %v3305 = vmax.f32 %v2992, 0.0
      %v3306 = vmax.f32 %v2993, 0.0
      %v3307 = vmax.f32 %v2994, 0.0
      %v3308 = vmax.f32 %v2995, 0.0
      %v3309 = vmax.f32 %v2996, 0.0
      %v3310 = vmax.f32 %v2997, 0.0
      %v3311 = vmax.f32 %v2998, 0.0
      %v3312 = vmax.f32 %v2999, 0.0
      %v3313 = vmax.f32 %v3000, 0.0
      %v3314 = vmax.f32 %v3001, 0.0
      %v3315 = vmax.f32 %v3002, 0.0
      %v3316 = vmax.f32 %v3003, 0.0
      %v3317 = vmax.f32 %v3004, 0.0
      %v3318 = vmax.f32 %v3005, 0.0
      %v3319 = vmax.f32 %v3006, 0.0
      %v3320 = vmax.f32 %v3007, 0.0
      %v3321 = vmax.f32 %v3008, 0.0
      %v3322 = vmax.f32 %v3009, 0.0
      %v3323 = vmax.f32 %v3010, 0.0
      %v3324 = vmax.f32 %v3011, 0.0
      %v3325 = vmax.f32 %v3012, 0.0
      %v3326 = vmax.f32 %v3013, 0.0
      %v3327 = vmax.f32 %v3014, 0.0
      %v3328 = vmax.f32 %v3015, 0.0
      %v3329 = vmax.f32 %v3016, 0.0
      %v3330 = vmax.f32 %v3017, 0.0
      %v3331 = vmax.f32 %v3018, 0.0
      %v3332 = vmax.f32 %v3019, 0.0
      %v3333 = vmax.f32 %v3020, 0.0
      %v3334 = vmax.f32 %v3021, 0.0
      %v3335 = vmax.f32 %v3022, 0.0
      %v3336 = vmax.f32 %v3023, 0.0
      %v3337 = vmax.f32 %v3024, 0.0
      %v3338 = vmax.f32 %v3025, 0.0
      %v3339 = vmax.f32 %v3026, 0.0
      %v3340 = vmax.f32 %v3027, 0.0
      %v3341 = vmax.f32 %v3028, 0.0
      %v3342 = vmax.f32 %v3029, 0.0
      %v3343 = vmax.f32 %v3030, 0.0
      %v3344 = vmax.f32 %v3031, 0.0
      %v3345 = vmax.f32 %v3032, 0.0
      %v3346 = vmax.f32 %v3033, 0.0
      %v3347 = vmax.f32 %v3034, 0.0
      %v3348 = vmax.f32 %v3035, 0.0
      %v3349 = vmax.f32 %v3036, 0.0
      %v3350 = vmax.f32 %v3037, 0.0
      %v3351 = vmax.f32 %v3038, 0.0
      %v3352 = vmax.f32 %v3039, 0.0
      %v3353 = vmax.f32 %v3040, 0.0
      %v3354 = vmax.f32 %v3041, 0.0
      %v3355 = vmax.f32 %v3042, 0.0
      %v3356 = vmax.f32 %v3043, 0.0
      %v3357 = vmax.f32 %v3044, 0.0
      %v3358 = vmax.f32 %v3045, 0.0
      %v3359 = vmax.f32 %v3046, 0.0
      %v3360 = vmax.f32 %v3047, 0.0
      %v3361 = vmax.f32 %v3048, 0.0
      %v3362 = vmax.f32 %v3049, 0.0
      %v3363 = vmax.f32 %v3050, 0.0
      %v3364 = vmax.f32 %v3051, 0.0
      %v3365 = vmax.f32 %v3052, 0.0
      %v3366 = vmax.f32 %v3053, 0.0
      %v3367 = vmax.f32 %v3054, 0.0
      %v3368 = vmax.f32 %v3055, 0.0
      %v3369 = vmax.f32 %v3056, 0.0
      %v3370 = vmax.f32 %v3057, 0.0
      %v3371 = vmax.f32 %v3058, 0.0
      %v3372 = vmax.f32 %v3059, 0.0
      %v3373 = vmax.f32 %v3060, 0.0
      %v3374 = vmax.f32 %v3061, 0.0
      %v3375 = vmax.f32 %v3062, 0.0
      %v3376 = vmax.f32 %v3063, 0.0
      %v3377 = vmax.f32 %v3064, 0.0
      %v3378 = vmax.f32 %v3065, 0.0
      %v3379 = vmax.f32 %v3066, 0.0
      %v3380 = vmax.f32 %v3067, 0.0
      %v3381 = vmax.f32 %v3068, 0.0
      %v3382 = vmax.f32 %v3069, 0.0
      %v3383 = vmax.f32 %v3070, 0.0
      %v3384 = vmax.f32 %v3071, 0.0
      %v3385 = vmax.f32 %v3072, 0.0
      %v3386 = vmax.f32 %v3073, 0.0
      %v3387 = vmax.f32 %v3074, 0.0
      %v3388 = vmax.f32 %v3075, 0.0
      %v3389 = vmax.f32 %v3076, 0.0
      %v3390 = vmax.f32 %v3077, 0.0
      %v3391 = vmax.f32 %v3078, 0.0
      %v3392 = vmax.f32 %v3079, 0.0
      %v3393 = vmax.f32 %v3080, 0.0
      %v3394 = vmax.f32 %v3081, 0.0
      %v3395 = vmax.f32 %v3082, 0.0
      %v3396 = vmax.f32 %v3083, 0.0
      %v3397 = vmax.f32 %v3084, 0.0
      %v3398 = vmax.f32 %v3085, 0.0
      %v3399 = vmax.f32 %v3086, 0.0
      %v3400 = vmax.f32 %v3087, 0.0
      %v3401 = vmax.f32 %v3088, 0.0
      %v3402 = vmax.f32 %v3089, 0.0
      %v3403 = vmax.f32 %v3090, 0.0
      %v3404 = vmax.f32 %v3091, 0.0
      %v3405 = vmax.f32 %v3092, 0.0
      %v3406 = vmax.f32 %v3093, 0.0
      %v3407 = vmax.f32 %v3094, 0.0
      %v3408 = vmax.f32 %v3095, 0.0
      %v3409 = vmax.f32 %v3096, 0.0
      %v3410 = vmax.f32 %v3097, 0.0
      %v3411 = vmax.f32 %v3098, 0.0
      %v3412 = vmax.f32 %v3099, 0.0
      %v3413 = vmax.f32 %v3100, 0.0
      %v3414 = vmax.f32 %v3101, 0.0
      %v3415 = vmax.f32 %v3102, 0.0
      %v3416 = vmax.f32 %v3103, 0.0
      %v3417 = vmax.f32 %v3104, 0.0
      %v3418 = vmax.f32 %v3105, 0.0
      %v3419 = vmax.f32 %v3106, 0.0
      %v3420 = vmax.f32 %v3107, 0.0
      %v3421 = vmax.f32 %v3108, 0.0
      %v3422 = vmax.f32 %v3109, 0.0
      %v3423 = vmax.f32 %v3110, 0.0
      %v3424 = vmax.f32 %v3111, 0.0
      %v3425 = vmax.f32 %v3112, 0.0
      %v3426 = vmax.f32 %v3113, 0.0
      %v3427 = vmax.f32 %v3114, 0.0
      %v3428 = vmax.f32 %v3115, 0.0
      %v3429 = vmax.f32 %v3116, 0.0
      %v3430 = vmax.f32 %v3117, 0.0
      %v3431 = vmax.f32 %v3118, 0.0
      %v3432 = vmax.f32 %v3119, 0.0
      %v3433 = vmax.f32 %v3120, 0.0
      %v3434 = vmax.f32 %v3121, 0.0
      %v3435 = vmax.f32 %v3122, 0.0
      %v3436 = vmax.f32 %v3123, 0.0
      %v3437 = vmax.f32 %v3124, 0.0
      %v3438 = vmax.f32 %v3125, 0.0
      %v3439 = vmax.f32 %v3126, 0.0
      %v3440 = vmax.f32 %v3127, 0.0
      %v3441 = vmax.f32 %v3128, 0.0
      %v3442 = vmax.f32 %v3129, 0.0
      %v3443 = vmax.f32 %v3130, 0.0
      %v3444 = vmax.f32 %v3131, 0.0
      %v3445 = vmax.f32 %v3132, 0.0
      %v3446 = vmax.f32 %v3133, 0.0
      %v3447 = vmax.f32 %v3134, 0.0
      %v3448 = vmax.f32 %v3135, 0.0
      %v3449 = vmax.f32 %v3136, 0.0
      %v3450 = vmax.f32 %v3137, 0.0
      %v3451 = vmax.f32 %v3138, 0.0
      %v3452 = vmax.f32 %v3139, 0.0
      %v3453 = vmax.f32 %v3140, 0.0
      %v3454 = vmax.f32 %v3141, 0.0
      %v3455 = vmax.f32 %v3142, 0.0
      %v3456 = vmax.f32 %v3143, 0.0
      %v3457 = vmax.f32 %v3144, 0.0
      %v3458 = vmax.f32 %v3145, 0.0
      %v3459 = vmax.f32 %v3146, 0.0
      %v3460 = vmax.f32 %v3147, 0.0
      %v3461 = vmax.f32 %v3148, 0.0
      %v3462 = vmax.f32 %v3149, 0.0
      %v3463 = vmax.f32 %v3150, 0.0
      %v3464 = vmax.f32 %v3151, 0.0
      %v3465 = vmax.f32 %v3152, 0.0
      %v3466 = vmax.f32 %v3153, 0.0
      %v3467 = vmax.f32 %v3154, 0.0
      %v3468 = vmax.f32 %v3155, 0.0
      %v3469 = vmax.f32 %v3156, 0.0
      %v3470 = vmax.f32 %v3157, 0.0
      %v3471 = vmax.f32 %v3158, 0.0
      %v3472 = vmax.f32 %v3159, 0.0
      %v3473 = vmax.f32 %v3160, 0.0
      %v3474 = vmax.f32 %v3161, 0.0
      %v3475 = vmax.f32 %v3162, 0.0
      %v3476 = vmax.f32 %v3163, 0.0
      %v3477 = vmax.f32 %v3164, 0.0
      %v3478 = vmax.f32 %v3165, 0.0
      %v3479 = vmax.f32 %v3166, 0.0
      %v3480 = vmax.f32 %v3167, 0.0
      %v3481 = vmax.f32 %v3168, 0.0
      %v3482 = vmax.f32 %v3169, 0.0
      %v3483 = vmax.f32 %v3170, 0.0
      %v3484 = vmax.f32 %v3171, 0.0
      %v3485 = vmax.f32 %v3172, 0.0
      %v3486 = vmax.f32 %v3173, 0.0
      %v3487 = vmax.f32 %v3174, 0.0
      %v3488 = vmax.f32 %v3175, 0.0
      %v3489 = vmax.f32 %v3176, 0.0
      %v3490 = vmax.f32 %v3177, 0.0
      %v3491 = vmax.f32 %v3178, 0.0
      %v3492 = vmax.f32 %v3179, 0.0
      %v3493 = vmax.f32 %v3180, 0.0
      %v3494 = vmax.f32 %v3181, 0.0
      %v3495 = vmax.f32 %v3182, 0.0
      %v3496 = vmax.f32 %v3183, 0.0
      %v3497 = vmax.f32 %v3184, 0.0
      %v3498 = vmax.f32 %v3185, 0.0
      %v3499 = vmax.f32 %v3186, 0.0
      %v3500 = vmax.f32 %v3187, 0.0
      %v3501 = vmax.f32 %v3188, 0.0
      %v3502 = vmax.f32 %v3189, 0.0
      %v3503 = vmax.f32 %v3190, 0.0
      %v3504 = vmax.f32 %v3191, 0.0
      %v3505 = vmax.f32 %v3192, 0.0
      %v3506 = vmax.f32 %v3193, 0.0
      %v3507 = vmax.f32 %v3194, 0.0
      %v3508 = vmax.f32 %v3195, 0.0
      %v3509 = vmax.f32 %v3196, 0.0
      %v3510 = vmax.f32 %v3197, 0.0
      %v3511 = vmax.f32 %v3198, 0.0
      %v3512 = vmax.f32 %v3199, 0.0
      %v3513 = vmax.f32 %v3200, 0.0
      %v3514 = vmax.f32 %v3201, 0.0
      %v3515 = vmax.f32 %v3202, 0.0
      %v3516 = vmax.f32 %v3203, 0.0
      %v3517 = vmax.f32 %v3204, 0.0
      %v3518 = vmax.f32 %v3205, 0.0
      %v3519 = vmax.f32 %v3206, 0.0
      %v3520 = vmax.f32 %v3207, 0.0
      %v3521 = vmax.f32 %v3208, 0.0
      %v3522 = vmax.f32 %v3209, 0.0
      %v3523 = vmax.f32 %v3210, 0.0
      %v3524 = vmax.f32 %v3211, 0.0
      %v3525 = vmax.f32 %v3212, 0.0
      %v3526 = vmax.f32 %v3213, 0.0
      %v3527 = vmax.f32 %v3214, 0.0
      %v3528 = vmax.f32 %v3215, 0.0
      %v3529 = vpack.c.bf16 %v3216, %v3216
      %v3530 = vpack.c.bf16 %v3217, %v3217
      %v3531 = vpack.c.bf16 %v3218, %v3218
      %v3532 = vpack.c.bf16 %v3219, %v3219
      %v3533 = vpack.c.bf16 %v3220, %v3220
      %v3534 = vpack.c.bf16 %v3221, %v3221
      %v3535 = vpack.c.bf16 %v3222, %v3222
      %v3536 = vpack.c.bf16 %v3223, %v3223
      %v3537 = vpack.c.bf16 %v3224, %v3224
      %v3538 = vpack.c.bf16 %v3225, %v3225
      %v3539 = vpack.c.bf16 %v3226, %v3226
      %v3540 = vpack.c.bf16 %v3227, %v3227
      %v3541 = vpack.c.bf16 %v3228, %v3228
      %v3542 = vpack.c.bf16 %v3229, %v3229
      %v3543 = vpack.c.bf16 %v3230, %v3230
      %v3544 = vpack.c.bf16 %v3231, %v3231
      %v3545 = vpack.c.bf16 %v3232, %v3232
      %v3546 = vpack.c.bf16 %v3233, %v3233
      %v3547 = vpack.c.bf16 %v3234, %v3234
      %v3548 = vpack.c.bf16 %v3235, %v3235
      %v3549 = vpack.c.bf16 %v3236, %v3236
      %v3550 = vpack.c.bf16 %v3237, %v3237
      %v3551 = vpack.c.bf16 %v3238, %v3238
      %v3552 = vpack.c.bf16 %v3239, %v3239
      %v3553 = vpack.c.bf16 %v3240, %v3240
      %v3554 = vpack.c.bf16 %v3241, %v3241
      %v3555 = vpack.c.bf16 %v3242, %v3242
      %v3556 = vpack.c.bf16 %v3243, %v3243
      %v3557 = vpack.c.bf16 %v3244, %v3244
      %v3558 = vpack.c.bf16 %v3245, %v3245
      %v3559 = vpack.c.bf16 %v3246, %v3246
      %v3560 = vpack.c.bf16 %v3247, %v3247
      %v3561 = vpack.c.bf16 %v3248, %v3248
      %v3562 = vpack.c.bf16 %v3249, %v3249
      %v3563 = vpack.c.bf16 %v3250, %v3250
      %v3564 = vpack.c.bf16 %v3251, %v3251
      %v3565 = vpack.c.bf16 %v3252, %v3252
      %v3566 = vpack.c.bf16 %v3253, %v3253
      %v3567 = vpack.c.bf16 %v3254, %v3254
      %v3568 = vpack.c.bf16 %v3255, %v3255
      %v3569 = vpack.c.bf16 %v3256, %v3256
      %v3570 = vpack.c.bf16 %v3257, %v3257
      %v3571 = vpack.c.bf16 %v3258, %v3258
      %v3572 = vpack.c.bf16 %v3259, %v3259
      %v3573 = vpack.c.bf16 %v3260, %v3260
      %v3574 = vpack.c.bf16 %v3261, %v3261
      %v3575 = vpack.c.bf16 %v3262, %v3262
      %v3576 = vpack.c.bf16 %v3263, %v3263
      %v3577 = vpack.c.bf16 %v3264, %v3264
      %v3578 = vpack.c.bf16 %v3265, %v3265
      %v3579 = vpack.c.bf16 %v3266, %v3266
      %v3580 = vpack.c.bf16 %v3267, %v3267
      %v3581 = vpack.c.bf16 %v3268, %v3268
      %v3582 = vpack.c.bf16 %v3269, %v3269
      %v3583 = vpack.c.bf16 %v3270, %v3270
      %v3584 = vpack.c.bf16 %v3271, %v3271
      %v3585 = vpack.c.bf16 %v3272, %v3272
      %v3586 = vpack.c.bf16 %v3273, %v3273
      %v3587 = vpack.c.bf16 %v3274, %v3274
      %v3588 = vpack.c.bf16 %v3275, %v3275
      %v3589 = vpack.c.bf16 %v3276, %v3276
      %v3590 = vpack.c.bf16 %v3277, %v3277
      %v3591 = vpack.c.bf16 %v3278, %v3278
      %v3592 = vpack.c.bf16 %v3279, %v3279
      %v3593 = vpack.c.bf16 %v3280, %v3280
      %v3594 = vpack.c.bf16 %v3281, %v3281
      %v3595 = vpack.c.bf16 %v3282, %v3282
      %v3596 = vpack.c.bf16 %v3283, %v3283
      %v3597 = vpack.c.bf16 %v3284, %v3284
      %v3598 = vpack.c.bf16 %v3285, %v3285
      %v3599 = vpack.c.bf16 %v3286, %v3286
      %v3600 = vpack.c.bf16 %v3287, %v3287
      %v3601 = vpack.c.bf16 %v3288, %v3288
      %v3602 = vpack.c.bf16 %v3289, %v3289
      %v3603 = vpack.c.bf16 %v3290, %v3290
      %v3604 = vpack.c.bf16 %v3291, %v3291
      %v3605 = vpack.c.bf16 %v3292, %v3292
      %v3606 = vpack.c.bf16 %v3293, %v3293
      %v3607 = vpack.c.bf16 %v3294, %v3294
      %v3608 = vpack.c.bf16 %v3295, %v3295
      %v3609 = vpack.c.bf16 %v3296, %v3296
      %v3610 = vpack.c.bf16 %v3297, %v3297
      %v3611 = vpack.c.bf16 %v3298, %v3298
      %v3612 = vpack.c.bf16 %v3299, %v3299
      %v3613 = vpack.c.bf16 %v3300, %v3300
      %v3614 = vpack.c.bf16 %v3301, %v3301
      %v3615 = vpack.c.bf16 %v3302, %v3302
      %v3616 = vpack.c.bf16 %v3303, %v3303
      %v3617 = vpack.c.bf16 %v3304, %v3304
      %v3618 = vpack.c.bf16 %v3305, %v3305
      %v3619 = vpack.c.bf16 %v3306, %v3306
      %v3620 = vpack.c.bf16 %v3307, %v3307
      %v3621 = vpack.c.bf16 %v3308, %v3308
      %v3622 = vpack.c.bf16 %v3309, %v3309
      %v3623 = vpack.c.bf16 %v3310, %v3310
      %v3624 = vpack.c.bf16 %v3311, %v3311
      %v3625 = vpack.c.bf16 %v3312, %v3312
      %v3626 = vpack.c.bf16 %v3313, %v3313
      %v3627 = vpack.c.bf16 %v3314, %v3314
      %v3628 = vpack.c.bf16 %v3315, %v3315
      %v3629 = vpack.c.bf16 %v3316, %v3316
      %v3630 = vpack.c.bf16 %v3317, %v3317
      %v3631 = vpack.c.bf16 %v3318, %v3318
      %v3632 = vpack.c.bf16 %v3319, %v3319
      %v3633 = vpack.c.bf16 %v3320, %v3320
      %v3634 = vpack.c.bf16 %v3321, %v3321
      %v3635 = vpack.c.bf16 %v3322, %v3322
      %v3636 = vpack.c.bf16 %v3323, %v3323
      %v3637 = vpack.c.bf16 %v3324, %v3324
      %v3638 = vpack.c.bf16 %v3325, %v3325
      %v3639 = vpack.c.bf16 %v3326, %v3326
      %v3640 = vpack.c.bf16 %v3327, %v3327
      %v3641 = vpack.c.bf16 %v3328, %v3328
      %v3642 = vpack.c.bf16 %v3329, %v3329
      %v3643 = vpack.c.bf16 %v3330, %v3330
      %v3644 = vpack.c.bf16 %v3331, %v3331
      %v3645 = vpack.c.bf16 %v3332, %v3332
      %v3646 = vpack.c.bf16 %v3333, %v3333
      %v3647 = vpack.c.bf16 %v3334, %v3334
      %v3648 = vpack.c.bf16 %v3335, %v3335
      %v3649 = vpack.c.bf16 %v3336, %v3336
      %v3650 = vpack.c.bf16 %v3337, %v3337
      %v3651 = vpack.c.bf16 %v3338, %v3338
      %v3652 = vpack.c.bf16 %v3339, %v3339
      %v3653 = vpack.c.bf16 %v3340, %v3340
      %v3654 = vpack.c.bf16 %v3341, %v3341
      %v3655 = vpack.c.bf16 %v3342, %v3342
      %v3656 = vpack.c.bf16 %v3343, %v3343
      %v3657 = vpack.c.bf16 %v3344, %v3344
      %v3658 = vpack.c.bf16 %v3345, %v3345
      %v3659 = vpack.c.bf16 %v3346, %v3346
      %v3660 = vpack.c.bf16 %v3347, %v3347
      %v3661 = vpack.c.bf16 %v3348, %v3348
      %v3662 = vpack.c.bf16 %v3349, %v3349
      %v3663 = vpack.c.bf16 %v3350, %v3350
      %v3664 = vpack.c.bf16 %v3351, %v3351
      %v3665 = vpack.c.bf16 %v3352, %v3352
      %v3666 = vpack.c.bf16 %v3353, %v3353
      %v3667 = vpack.c.bf16 %v3354, %v3354
      %v3668 = vpack.c.bf16 %v3355, %v3355
      %v3669 = vpack.c.bf16 %v3356, %v3356
      %v3670 = vpack.c.bf16 %v3357, %v3357
      %v3671 = vpack.c.bf16 %v3358, %v3358
      %v3672 = vpack.c.bf16 %v3359, %v3359
      %v3673 = vpack.c.bf16 %v3360, %v3360
      %v3674 = vpack.c.bf16 %v3361, %v3361
      %v3675 = vpack.c.bf16 %v3362, %v3362
      %v3676 = vpack.c.bf16 %v3363, %v3363
      %v3677 = vpack.c.bf16 %v3364, %v3364
      %v3678 = vpack.c.bf16 %v3365, %v3365
      %v3679 = vpack.c.bf16 %v3366, %v3366
      %v3680 = vpack.c.bf16 %v3367, %v3367
      %v3681 = vpack.c.bf16 %v3368, %v3368
      %v3682 = vpack.c.bf16 %v3369, %v3369
      %v3683 = vpack.c.bf16 %v3370, %v3370
      %v3684 = vpack.c.bf16 %v3371, %v3371
      %v3685 = vpack.c.bf16 %v3372, %v3372
      %v3686 = vpack.c.bf16 %v3373, %v3373
      %v3687 = vpack.c.bf16 %v3374, %v3374
      %v3688 = vpack.c.bf16 %v3375, %v3375
      %v3689 = vpack.c.bf16 %v3376, %v3376
      %v3690 = vpack.c.bf16 %v3377, %v3377
      %v3691 = vpack.c.bf16 %v3378, %v3378
      %v3692 = vpack.c.bf16 %v3379, %v3379
      %v3693 = vpack.c.bf16 %v3380, %v3380
      %v3694 = vpack.c.bf16 %v3381, %v3381
      %v3695 = vpack.c.bf16 %v3382, %v3382
      %v3696 = vpack.c.bf16 %v3383, %v3383
      %v3697 = vpack.c.bf16 %v3384, %v3384
      %v3698 = vpack.c.bf16 %v3385, %v3385
      %v3699 = vpack.c.bf16 %v3386, %v3386
      %v3700 = vpack.c.bf16 %v3387, %v3387
      %v3701 = vpack.c.bf16 %v3388, %v3388
      %v3702 = vpack.c.bf16 %v3389, %v3389
      %v3703 = vpack.c.bf16 %v3390, %v3390
      %v3704 = vpack.c.bf16 %v3391, %v3391
      %v3705 = vpack.c.bf16 %v3392, %v3392
      %v3706 = vpack.c.bf16 %v3393, %v3393
      %v3707 = vpack.c.bf16 %v3394, %v3394
      %v3708 = vpack.c.bf16 %v3395, %v3395
      %v3709 = vpack.c.bf16 %v3396, %v3396
      %v3710 = vpack.c.bf16 %v3397, %v3397
      %v3711 = vpack.c.bf16 %v3398, %v3398
      %v3712 = vpack.c.bf16 %v3399, %v3399
      %v3713 = vpack.c.bf16 %v3400, %v3400
      %v3714 = vpack.c.bf16 %v3401, %v3401
      %v3715 = vpack.c.bf16 %v3402, %v3402
      %v3716 = vpack.c.bf16 %v3403, %v3403
      %v3717 = vpack.c.bf16 %v3404, %v3404
      %v3718 = vpack.c.bf16 %v3405, %v3405
      %v3719 = vpack.c.bf16 %v3406, %v3406
      %v3720 = vpack.c.bf16 %v3407, %v3407
      %v3721 = vpack.c.bf16 %v3408, %v3408
      %v3722 = vpack.c.bf16 %v3409, %v3409
      %v3723 = vpack.c.bf16 %v3410, %v3410
      %v3724 = vpack.c.bf16 %v3411, %v3411
      %v3725 = vpack.c.bf16 %v3412, %v3412
      %v3726 = vpack.c.bf16 %v3413, %v3413
      %v3727 = vpack.c.bf16 %v3414, %v3414
      %v3728 = vpack.c.bf16 %v3415, %v3415
      %v3729 = vpack.c.bf16 %v3416, %v3416
      %v3730 = vpack.c.bf16 %v3417, %v3417
      %v3731 = vpack.c.bf16 %v3418, %v3418
      %v3732 = vpack.c.bf16 %v3419, %v3419
      %v3733 = vpack.c.bf16 %v3420, %v3420
      %v3734 = vpack.c.bf16 %v3421, %v3421
      %v3735 = vpack.c.bf16 %v3422, %v3422
      %v3736 = vpack.c.bf16 %v3423, %v3423
      %v3737 = vpack.c.bf16 %v3424, %v3424
      %v3738 = vpack.c.bf16 %v3425, %v3425
      %v3739 = vpack.c.bf16 %v3426, %v3426
      %v3740 = vpack.c.bf16 %v3427, %v3427
      %v3741 = vpack.c.bf16 %v3428, %v3428
      %v3742 = vpack.c.bf16 %v3429, %v3429
      %v3743 = vpack.c.bf16 %v3430, %v3430
      %v3744 = vpack.c.bf16 %v3431, %v3431
      %v3745 = vpack.c.bf16 %v3432, %v3432
      %v3746 = vpack.c.bf16 %v3433, %v3433
      %v3747 = vpack.c.bf16 %v3434, %v3434
      %v3748 = vpack.c.bf16 %v3435, %v3435
      %v3749 = vpack.c.bf16 %v3436, %v3436
      %v3750 = vpack.c.bf16 %v3437, %v3437
      %v3751 = vpack.c.bf16 %v3438, %v3438
      %v3752 = vpack.c.bf16 %v3439, %v3439
      %v3753 = vpack.c.bf16 %v3440, %v3440
      %v3754 = vpack.c.bf16 %v3441, %v3441
      %v3755 = vpack.c.bf16 %v3442, %v3442
      %v3756 = vpack.c.bf16 %v3443, %v3443
      %v3757 = vpack.c.bf16 %v3444, %v3444
      %v3758 = vpack.c.bf16 %v3445, %v3445
      %v3759 = vpack.c.bf16 %v3446, %v3446
      %v3760 = vpack.c.bf16 %v3447, %v3447
      %v3761 = vpack.c.bf16 %v3448, %v3448
      %v3762 = vpack.c.bf16 %v3449, %v3449
      %v3763 = vpack.c.bf16 %v3450, %v3450
      %v3764 = vpack.c.bf16 %v3451, %v3451
      %v3765 = vpack.c.bf16 %v3452, %v3452
      %v3766 = vpack.c.bf16 %v3453, %v3453
      %v3767 = vpack.c.bf16 %v3454, %v3454
      %v3768 = vpack.c.bf16 %v3455, %v3455
      %v3769 = vpack.c.bf16 %v3456, %v3456
      %v3770 = vpack.c.bf16 %v3457, %v3457
      %v3771 = vpack.c.bf16 %v3458, %v3458
      %v3772 = vpack.c.bf16 %v3459, %v3459
      %v3773 = vpack.c.bf16 %v3460, %v3460
      %v3774 = vpack.c.bf16 %v3461, %v3461
      %v3775 = vpack.c.bf16 %v3462, %v3462
      %v3776 = vpack.c.bf16 %v3463, %v3463
      %v3777 = vpack.c.bf16 %v3464, %v3464
      %v3778 = vpack.c.bf16 %v3465, %v3465
      %v3779 = vpack.c.bf16 %v3466, %v3466
      %v3780 = vpack.c.bf16 %v3467, %v3467
      %v3781 = vpack.c.bf16 %v3468, %v3468
      %v3782 = vpack.c.bf16 %v3469, %v3469
      %v3783 = vpack.c.bf16 %v3470, %v3470
      %v3784 = vpack.c.bf16 %v3471, %v3471
      %v3785 = vpack.c.bf16 %v3472, %v3472
      %v3786 = vpack.c.bf16 %v3473, %v3473
      %v3787 = vpack.c.bf16 %v3474, %v3474
      %v3788 = vpack.c.bf16 %v3475, %v3475
      %v3789 = vpack.c.bf16 %v3476, %v3476
      %v3790 = vpack.c.bf16 %v3477, %v3477
      %v3791 = vpack.c.bf16 %v3478, %v3478
      %v3792 = vpack.c.bf16 %v3479, %v3479
      %v3793 = vpack.c.bf16 %v3480, %v3480
      %v3794 = vpack.c.bf16 %v3481, %v3481
      %v3795 = vpack.c.bf16 %v3482, %v3482
      %v3796 = vpack.c.bf16 %v3483, %v3483
      %v3797 = vpack.c.bf16 %v3484, %v3484
      %v3798 = vpack.c.bf16 %v3485, %v3485
      %v3799 = vpack.c.bf16 %v3486, %v3486
      %v3800 = vpack.c.bf16 %v3487, %v3487
      %v3801 = vpack.c.bf16 %v3488, %v3488
      %v3802 = vpack.c.bf16 %v3489, %v3489
      %v3803 = vpack.c.bf16 %v3490, %v3490
      %v3804 = vpack.c.bf16 %v3491, %v3491
      %v3805 = vpack.c.bf16 %v3492, %v3492
      %v3806 = vpack.c.bf16 %v3493, %v3493
      %v3807 = vpack.c.bf16 %v3494, %v3494
      %v3808 = vpack.c.bf16 %v3495, %v3495
      %v3809 = vpack.c.bf16 %v3496, %v3496
      %v3810 = vpack.c.bf16 %v3497, %v3497
      %v3811 = vpack.c.bf16 %v3498, %v3498
      %v3812 = vpack.c.bf16 %v3499, %v3499
      %v3813 = vpack.c.bf16 %v3500, %v3500
      %v3814 = vpack.c.bf16 %v3501, %v3501
      %v3815 = vpack.c.bf16 %v3502, %v3502
      %v3816 = vpack.c.bf16 %v3503, %v3503
      %v3817 = vpack.c.bf16 %v3504, %v3504
      %v3818 = vpack.c.bf16 %v3505, %v3505
      %v3819 = vpack.c.bf16 %v3506, %v3506
      %v3820 = vpack.c.bf16 %v3507, %v3507
      %v3821 = vpack.c.bf16 %v3508, %v3508
      %v3822 = vpack.c.bf16 %v3509, %v3509
      %v3823 = vpack.c.bf16 %v3510, %v3510
      %v3824 = vpack.c.bf16 %v3511, %v3511
      %v3825 = vpack.c.bf16 %v3512, %v3512
      %v3826 = vpack.c.bf16 %v3513, %v3513
      %v3827 = vpack.c.bf16 %v3514, %v3514
      %v3828 = vpack.c.bf16 %v3515, %v3515
      %v3829 = vpack.c.bf16 %v3516, %v3516
      %v3830 = vpack.c.bf16 %v3517, %v3517
      %v3831 = vpack.c.bf16 %v3518, %v3518
      %v3832 = vpack.c.bf16 %v3519, %v3519
      %v3833 = vpack.c.bf16 %v3520, %v3520
      %v3834 = vpack.c.bf16 %v3521, %v3521
      %v3835 = vpack.c.bf16 %v3522, %v3522
      %v3836 = vpack.c.bf16 %v3523, %v3523
      %v3837 = vpack.c.bf16 %v3524, %v3524
      %v3838 = vpack.c.bf16 %v3525, %v3525
      %v3839 = vpack.c.bf16 %v3526, %v3526
      %v3840 = vpack.c.bf16 %v3527, %v3527
      %v3841 = vpack.c.bf16 %v3528, %v3528
      %vm3842 = vcmask 257024
      %3843 = vst.msk [vmem:[%s197] sm:$0xf] %vm3842, %v3529
      %3844 = vst.msk [vmem:[%s197 + $0x4] sm:$0xf] %vm3842, %v3530
      %3845 = vst.msk [vmem:[%s197 + $0x8] sm:$0xf] %vm3842, %v3531
      %3846 = vst.msk [vmem:[%s197 + $0xc] sm:$0xf] %vm3842, %v3532
      %3847 = vst.msk [vmem:[%s197 + $0x10] sm:$0xf] %vm3842, %v3533
      %3848 = vst.msk [vmem:[%s197 + $0x14] sm:$0xf] %vm3842, %v3534
      %3849 = vst.msk [vmem:[%s197 + $0x18] sm:$0xf] %vm3842, %v3535
      %3850 = vst.msk [vmem:[%s197 + $0x1c] sm:$0xf] %vm3842, %v3536
      %3851 = vst.msk [vmem:[%s197 + $0x20] sm:$0xf] %vm3842, %v3537
      %3852 = vst.msk [vmem:[%s197 + $0x24] sm:$0xf] %vm3842, %v3538
      %3853 = vst.msk [vmem:[%s197 + $0x28] sm:$0xf] %vm3842, %v3539
      %3854 = vst.msk [vmem:[%s197 + $0x2c] sm:$0xf] %vm3842, %v3540
      %3855 = vst.msk [vmem:[%s197 + $0x30] sm:$0xf] %vm3842, %v3541
      %3856 = vst.msk [vmem:[%s197 + $0x34] sm:$0xf] %vm3842, %v3542
      %3857 = vst.msk [vmem:[%s197 + $0x38] sm:$0xf] %vm3842, %v3543
      %3858 = vst.msk [vmem:[%s197 + $0x3c] sm:$0xf] %vm3842, %v3544
      %3859 = vst.msk [vmem:[%s197 + $0x40] sm:$0xf] %vm3842, %v3545
      %3860 = vst.msk [vmem:[%s197 + $0x44] sm:$0xf] %vm3842, %v3546
      %3861 = vst.msk [vmem:[%s197 + $0x48] sm:$0xf] %vm3842, %v3547
      %3862 = vst.msk [vmem:[%s197 + $0x4c] sm:$0xf] %vm3842, %v3548
      %3863 = vst.msk [vmem:[%s197 + $0x50] sm:$0xf] %vm3842, %v3549
      %3864 = vst.msk [vmem:[%s197 + $0x54] sm:$0xf] %vm3842, %v3550
      %3865 = vst.msk [vmem:[%s197 + $0x58] sm:$0xf] %vm3842, %v3551
      %3866 = vst.msk [vmem:[%s197 + $0x5c] sm:$0xf] %vm3842, %v3552
      %3867 = vst.msk [vmem:[%s197 + $0x60] sm:$0xf] %vm3842, %v3553
      %3868 = vst.msk [vmem:[%s197 + $0x64] sm:$0xf] %vm3842, %v3554
      %3869 = vst.msk [vmem:[%s197 + $0x68] sm:$0xf] %vm3842, %v3555
      %3870 = vst.msk [vmem:[%s197 + $0x6c] sm:$0xf] %vm3842, %v3556
      %3871 = vst.msk [vmem:[%s197 + $0x70] sm:$0xf] %vm3842, %v3557
      %3872 = vst.msk [vmem:[%s197 + $0x74] sm:$0xf] %vm3842, %v3558
      %3873 = vst.msk [vmem:[%s197 + $0x78] sm:$0xf] %vm3842, %v3559
      %3874 = vst.msk [vmem:[%s197 + $0x7c] sm:$0xf] %vm3842, %v3560
      %3875 = vst.msk [vmem:[%s197 + $0x80] sm:$0xf] %vm3842, %v3561
      %3876 = vst.msk [vmem:[%s197 + $0x84] sm:$0xf] %vm3842, %v3562
      %3877 = vst.msk [vmem:[%s197 + $0x88] sm:$0xf] %vm3842, %v3563
      %3878 = vst.msk [vmem:[%s197 + $0x8c] sm:$0xf] %vm3842, %v3564
      %3879 = vst.msk [vmem:[%s197 + $0x90] sm:$0xf] %vm3842, %v3565
      %3880 = vst.msk [vmem:[%s197 + $0x94] sm:$0xf] %vm3842, %v3566
      %3881 = vst.msk [vmem:[%s197 + $0x98] sm:$0xf] %vm3842, %v3567
      %3882 = vst.msk [vmem:[%s197 + $0x9c] sm:$0xf] %vm3842, %v3568
      %3883 = vst.msk [vmem:[%s197 + $0xa0] sm:$0xf] %vm3842, %v3569
      %3884 = vst.msk [vmem:[%s197 + $0xa4] sm:$0xf] %vm3842, %v3570
      %3885 = vst.msk [vmem:[%s197 + $0xa8] sm:$0xf] %vm3842, %v3571
      %3886 = vst.msk [vmem:[%s197 + $0xac] sm:$0xf] %vm3842, %v3572
      %3887 = vst.msk [vmem:[%s197 + $0xb0] sm:$0xf] %vm3842, %v3573
      %3888 = vst.msk [vmem:[%s197 + $0xb4] sm:$0xf] %vm3842, %v3574
      %3889 = vst.msk [vmem:[%s197 + $0xb8] sm:$0xf] %vm3842, %v3575
      %3890 = vst.msk [vmem:[%s197 + $0xbc] sm:$0xf] %vm3842, %v3576
      %3891 = vst.msk [vmem:[%s197 + $0xc0] sm:$0xf] %vm3842, %v3577
      %3892 = vst.msk [vmem:[%s197 + $0xc4] sm:$0xf] %vm3842, %v3578
      %3893 = vst.msk [vmem:[%s197 + $0xc8] sm:$0xf] %vm3842, %v3579
      %3894 = vst.msk [vmem:[%s197 + $0xcc] sm:$0xf] %vm3842, %v3580
      %3895 = vst.msk [vmem:[%s197 + $0xd0] sm:$0xf] %vm3842, %v3581
      %3896 = vst.msk [vmem:[%s197 + $0xd4] sm:$0xf] %vm3842, %v3582
      %3897 = vst.msk [vmem:[%s197 + $0xd8] sm:$0xf] %vm3842, %v3583
      %3898 = vst.msk [vmem:[%s197 + $0xdc] sm:$0xf] %vm3842, %v3584
      %3899 = vst.msk [vmem:[%s197 + $0xe0] sm:$0xf] %vm3842, %v3585
      %3900 = vst.msk [vmem:[%s197 + $0xe4] sm:$0xf] %vm3842, %v3586
      %3901 = vst.msk [vmem:[%s197 + $0xe8] sm:$0xf] %vm3842, %v3587
      %3902 = vst.msk [vmem:[%s197 + $0xec] sm:$0xf] %vm3842, %v3588
      %3903 = vst.msk [vmem:[%s197 + $0xf0] sm:$0xf] %vm3842, %v3589
      %3904 = vst.msk [vmem:[%s197 + $0xf4] sm:$0xf] %vm3842, %v3590
      %3905 = vst.msk [vmem:[%s197 + $0xf8] sm:$0xf] %vm3842, %v3591
      %3906 = vst.msk [vmem:[%s197 + $0xfc] sm:$0xf] %vm3842, %v3592
      %3907 = vst.msk [vmem:[%s197 + $0x100] sm:$0xf] %vm3842, %v3593
      %3908 = vst.msk [vmem:[%s197 + $0x104] sm:$0xf] %vm3842, %v3594
      %3909 = vst.msk [vmem:[%s197 + $0x108] sm:$0xf] %vm3842, %v3595
      %3910 = vst.msk [vmem:[%s197 + $0x10c] sm:$0xf] %vm3842, %v3596
      %3911 = vst.msk [vmem:[%s197 + $0x110] sm:$0xf] %vm3842, %v3597
      %3912 = vst.msk [vmem:[%s197 + $0x114] sm:$0xf] %vm3842, %v3598
      %3913 = vst.msk [vmem:[%s197 + $0x118] sm:$0xf] %vm3842, %v3599
      %3914 = vst.msk [vmem:[%s197 + $0x11c] sm:$0xf] %vm3842, %v3600
      %3915 = vst.msk [vmem:[%s197 + $0x120] sm:$0xf] %vm3842, %v3601
      %3916 = vst.msk [vmem:[%s197 + $0x124] sm:$0xf] %vm3842, %v3602
      %3917 = vst.msk [vmem:[%s197 + $0x128] sm:$0xf] %vm3842, %v3603
      %3918 = vst.msk [vmem:[%s197 + $0x12c] sm:$0xf] %vm3842, %v3604
      %3919 = vst.msk [vmem:[%s197 + $0x130] sm:$0xf] %vm3842, %v3605
      %3920 = vst.msk [vmem:[%s197 + $0x134] sm:$0xf] %vm3842, %v3606
      %3921 = vst.msk [vmem:[%s197 + $0x138] sm:$0xf] %vm3842, %v3607
      %3922 = vst.msk [vmem:[%s197 + $0x13c] sm:$0xf] %vm3842, %v3608
      %3923 = vst.msk [vmem:[%s197 + $0x140] sm:$0xf] %vm3842, %v3609
      %3924 = vst.msk [vmem:[%s197 + $0x144] sm:$0xf] %vm3842, %v3610
      %3925 = vst.msk [vmem:[%s197 + $0x148] sm:$0xf] %vm3842, %v3611
      %3926 = vst.msk [vmem:[%s197 + $0x14c] sm:$0xf] %vm3842, %v3612
      %3927 = vst.msk [vmem:[%s197 + $0x150] sm:$0xf] %vm3842, %v3613
      %3928 = vst.msk [vmem:[%s197 + $0x154] sm:$0xf] %vm3842, %v3614
      %3929 = vst.msk [vmem:[%s197 + $0x158] sm:$0xf] %vm3842, %v3615
      %3930 = vst.msk [vmem:[%s197 + $0x15c] sm:$0xf] %vm3842, %v3616
      %3931 = vst.msk [vmem:[%s197 + $0x160] sm:$0xf] %vm3842, %v3617
      %3932 = vst.msk [vmem:[%s197 + $0x164] sm:$0xf] %vm3842, %v3618
      %3933 = vst.msk [vmem:[%s197 + $0x168] sm:$0xf] %vm3842, %v3619
      %3934 = vst.msk [vmem:[%s197 + $0x16c] sm:$0xf] %vm3842, %v3620
      %3935 = vst.msk [vmem:[%s197 + $0x170] sm:$0xf] %vm3842, %v3621
      %3936 = vst.msk [vmem:[%s197 + $0x174] sm:$0xf] %vm3842, %v3622
      %3937 = vst.msk [vmem:[%s197 + $0x178] sm:$0xf] %vm3842, %v3623
      %3938 = vst.msk [vmem:[%s197 + $0x17c] sm:$0xf] %vm3842, %v3624
      %3939 = vst.msk [vmem:[%s197 + $0x180] sm:$0xf] %vm3842, %v3625
      %3940 = vst.msk [vmem:[%s197 + $0x184] sm:$0xf] %vm3842, %v3626
      %3941 = vst.msk [vmem:[%s197 + $0x188] sm:$0xf] %vm3842, %v3627
      %3942 = vst.msk [vmem:[%s197 + $0x18c] sm:$0xf] %vm3842, %v3628
      %3943 = vst.msk [vmem:[%s197 + $0x190] sm:$0xf] %vm3842, %v3629
      %3944 = vst.msk [vmem:[%s197 + $0x194] sm:$0xf] %vm3842, %v3630
      %3945 = vst.msk [vmem:[%s197 + $0x198] sm:$0xf] %vm3842, %v3631
      %3946 = vst.msk [vmem:[%s197 + $0x19c] sm:$0xf] %vm3842, %v3632
      %3947 = vst.msk [vmem:[%s197 + $0x1a0] sm:$0xf] %vm3842, %v3633
      %3948 = vst.msk [vmem:[%s197 + $0x1a4] sm:$0xf] %vm3842, %v3634
      %3949 = vst.msk [vmem:[%s197 + $0x1a8] sm:$0xf] %vm3842, %v3635
      %3950 = vst.msk [vmem:[%s197 + $0x1ac] sm:$0xf] %vm3842, %v3636
      %3951 = vst.msk [vmem:[%s197 + $0x1b0] sm:$0xf] %vm3842, %v3637
      %3952 = vst.msk [vmem:[%s197 + $0x1b4] sm:$0xf] %vm3842, %v3638
      %3953 = vst.msk [vmem:[%s197 + $0x1b8] sm:$0xf] %vm3842, %v3639
      %3954 = vst.msk [vmem:[%s197 + $0x1bc] sm:$0xf] %vm3842, %v3640
      %3955 = vst.msk [vmem:[%s197 + $0x1c0] sm:$0xf] %vm3842, %v3641
      %3956 = vst.msk [vmem:[%s197 + $0x1c4] sm:$0xf] %vm3842, %v3642
      %3957 = vst.msk [vmem:[%s197 + $0x1c8] sm:$0xf] %vm3842, %v3643
      %3958 = vst.msk [vmem:[%s197 + $0x1cc] sm:$0xf] %vm3842, %v3644
      %3959 = vst.msk [vmem:[%s197 + $0x1d0] sm:$0xf] %vm3842, %v3645
      %3960 = vst.msk [vmem:[%s197 + $0x1d4] sm:$0xf] %vm3842, %v3646
      %3961 = vst.msk [vmem:[%s197 + $0x1d8] sm:$0xf] %vm3842, %v3647
      %3962 = vst.msk [vmem:[%s197 + $0x1dc] sm:$0xf] %vm3842, %v3648
      %3963 = vst.msk [vmem:[%s197 + $0x1e0] sm:$0xf] %vm3842, %v3649
      %3964 = vst.msk [vmem:[%s197 + $0x1e4] sm:$0xf] %vm3842, %v3650
      %3965 = vst.msk [vmem:[%s197 + $0x1e8] sm:$0xf] %vm3842, %v3651
      %3966 = vst.msk [vmem:[%s197 + $0x1ec] sm:$0xf] %vm3842, %v3652
      %3967 = vst.msk [vmem:[%s197 + $0x1f0] sm:$0xf] %vm3842, %v3653
      %3968 = vst.msk [vmem:[%s197 + $0x1f4] sm:$0xf] %vm3842, %v3654
      %3969 = vst.msk [vmem:[%s197 + $0x1f8] sm:$0xf] %vm3842, %v3655
      %3970 = vst.msk [vmem:[%s197 + $0x1fc] sm:$0xf] %vm3842, %v3656
      %3971 = vst.msk [vmem:[%s197 + $0x200] sm:$0xf] %vm3842, %v3657
      %3972 = vst.msk [vmem:[%s197 + $0x204] sm:$0xf] %vm3842, %v3658
      %3973 = vst.msk [vmem:[%s197 + $0x208] sm:$0xf] %vm3842, %v3659
      %3974 = vst.msk [vmem:[%s197 + $0x20c] sm:$0xf] %vm3842, %v3660
      %3975 = vst.msk [vmem:[%s197 + $0x210] sm:$0xf] %vm3842, %v3661
      %3976 = vst.msk [vmem:[%s197 + $0x214] sm:$0xf] %vm3842, %v3662
      %3977 = vst.msk [vmem:[%s197 + $0x218] sm:$0xf] %vm3842, %v3663
      %3978 = vst.msk [vmem:[%s197 + $0x21c] sm:$0xf] %vm3842, %v3664
      %3979 = vst.msk [vmem:[%s197 + $0x220] sm:$0xf] %vm3842, %v3665
      %3980 = vst.msk [vmem:[%s197 + $0x224] sm:$0xf] %vm3842, %v3666
      %3981 = vst.msk [vmem:[%s197 + $0x228] sm:$0xf] %vm3842, %v3667
      %3982 = vst.msk [vmem:[%s197 + $0x22c] sm:$0xf] %vm3842, %v3668
      %3983 = vst.msk [vmem:[%s197 + $0x230] sm:$0xf] %vm3842, %v3669
      %3984 = vst.msk [vmem:[%s197 + $0x234] sm:$0xf] %vm3842, %v3670
      %3985 = vst.msk [vmem:[%s197 + $0x238] sm:$0xf] %vm3842, %v3671
      %3986 = vst.msk [vmem:[%s197 + $0x23c] sm:$0xf] %vm3842, %v3672
      %3987 = vst.msk [vmem:[%s197 + $0x240] sm:$0xf] %vm3842, %v3673
      %3988 = vst.msk [vmem:[%s197 + $0x244] sm:$0xf] %vm3842, %v3674
      %3989 = vst.msk [vmem:[%s197 + $0x248] sm:$0xf] %vm3842, %v3675
      %3990 = vst.msk [vmem:[%s197 + $0x24c] sm:$0xf] %vm3842, %v3676
      %3991 = vst.msk [vmem:[%s197 + $0x250] sm:$0xf] %vm3842, %v3677
      %3992 = vst.msk [vmem:[%s197 + $0x254] sm:$0xf] %vm3842, %v3678
      %3993 = vst.msk [vmem:[%s197 + $0x258] sm:$0xf] %vm3842, %v3679
      %3994 = vst.msk [vmem:[%s197 + $0x25c] sm:$0xf] %vm3842, %v3680
      %3995 = vst.msk [vmem:[%s197 + $0x260] sm:$0xf] %vm3842, %v3681
      %3996 = vst.msk [vmem:[%s197 + $0x264] sm:$0xf] %vm3842, %v3682
      %3997 = vst.msk [vmem:[%s197 + $0x268] sm:$0xf] %vm3842, %v3683
      %3998 = vst.msk [vmem:[%s197 + $0x26c] sm:$0xf] %vm3842, %v3684
      %3999 = vst.msk [vmem:[%s197 + $0x270] sm:$0xf] %vm3842, %v3685
      %4000 = vst.msk [vmem:[%s197 + $0x274] sm:$0xf] %vm3842, %v3686
      %4001 = vst.msk [vmem:[%s197 + $0x278] sm:$0xf] %vm3842, %v3687
      %4002 = vst.msk [vmem:[%s197 + $0x27c] sm:$0xf] %vm3842, %v3688
      %4003 = vst.msk [vmem:[%s197 + $0x280] sm:$0xf] %vm3842, %v3689
      %4004 = vst.msk [vmem:[%s197 + $0x284] sm:$0xf] %vm3842, %v3690
      %4005 = vst.msk [vmem:[%s197 + $0x288] sm:$0xf] %vm3842, %v3691
      %4006 = vst.msk [vmem:[%s197 + $0x28c] sm:$0xf] %vm3842, %v3692
      %4007 = vst.msk [vmem:[%s197 + $0x290] sm:$0xf] %vm3842, %v3693
      %4008 = vst.msk [vmem:[%s197 + $0x294] sm:$0xf] %vm3842, %v3694
      %4009 = vst.msk [vmem:[%s197 + $0x298] sm:$0xf] %vm3842, %v3695
      %4010 = vst.msk [vmem:[%s197 + $0x29c] sm:$0xf] %vm3842, %v3696
      %4011 = vst.msk [vmem:[%s197 + $0x2a0] sm:$0xf] %vm3842, %v3697
      %4012 = vst.msk [vmem:[%s197 + $0x2a4] sm:$0xf] %vm3842, %v3698
      %4013 = vst.msk [vmem:[%s197 + $0x2a8] sm:$0xf] %vm3842, %v3699
      %4014 = vst.msk [vmem:[%s197 + $0x2ac] sm:$0xf] %vm3842, %v3700
      %4015 = vst.msk [vmem:[%s197 + $0x2b0] sm:$0xf] %vm3842, %v3701
      %4016 = vst.msk [vmem:[%s197 + $0x2b4] sm:$0xf] %vm3842, %v3702
      %4017 = vst.msk [vmem:[%s197 + $0x2b8] sm:$0xf] %vm3842, %v3703
      %4018 = vst.msk [vmem:[%s197 + $0x2bc] sm:$0xf] %vm3842, %v3704
      %4019 = vst.msk [vmem:[%s197 + $0x2c0] sm:$0xf] %vm3842, %v3705
      %4020 = vst.msk [vmem:[%s197 + $0x2c4] sm:$0xf] %vm3842, %v3706
      %4021 = vst.msk [vmem:[%s197 + $0x2c8] sm:$0xf] %vm3842, %v3707
      %4022 = vst.msk [vmem:[%s197 + $0x2cc] sm:$0xf] %vm3842, %v3708
      %4023 = vst.msk [vmem:[%s197 + $0x2d0] sm:$0xf] %vm3842, %v3709
      %4024 = vst.msk [vmem:[%s197 + $0x2d4] sm:$0xf] %vm3842, %v3710
      %4025 = vst.msk [vmem:[%s197 + $0x2d8] sm:$0xf] %vm3842, %v3711
      %4026 = vst.msk [vmem:[%s197 + $0x2dc] sm:$0xf] %vm3842, %v3712
      %4027 = vst.msk [vmem:[%s197 + $0x2e0] sm:$0xf] %vm3842, %v3713
      %4028 = vst.msk [vmem:[%s197 + $0x2e4] sm:$0xf] %vm3842, %v3714
      %4029 = vst.msk [vmem:[%s197 + $0x2e8] sm:$0xf] %vm3842, %v3715
      %4030 = vst.msk [vmem:[%s197 + $0x2ec] sm:$0xf] %vm3842, %v3716
      %4031 = vst.msk [vmem:[%s197 + $0x2f0] sm:$0xf] %vm3842, %v3717
      %4032 = vst.msk [vmem:[%s197 + $0x2f4] sm:$0xf] %vm3842, %v3718
      %4033 = vst.msk [vmem:[%s197 + $0x2f8] sm:$0xf] %vm3842, %v3719
      %4034 = vst.msk [vmem:[%s197 + $0x2fc] sm:$0xf] %vm3842, %v3720
      %4035 = vst.msk [vmem:[%s197 + $0x300] sm:$0xf] %vm3842, %v3721
      %4036 = vst.msk [vmem:[%s197 + $0x304] sm:$0xf] %vm3842, %v3722
      %4037 = vst.msk [vmem:[%s197 + $0x308] sm:$0xf] %vm3842, %v3723
      %4038 = vst.msk [vmem:[%s197 + $0x30c] sm:$0xf] %vm3842, %v3724
      %4039 = vst.msk [vmem:[%s197 + $0x310] sm:$0xf] %vm3842, %v3725
      %4040 = vst.msk [vmem:[%s197 + $0x314] sm:$0xf] %vm3842, %v3726
      %4041 = vst.msk [vmem:[%s197 + $0x318] sm:$0xf] %vm3842, %v3727
      %4042 = vst.msk [vmem:[%s197 + $0x31c] sm:$0xf] %vm3842, %v3728
      %4043 = vst.msk [vmem:[%s197 + $0x320] sm:$0xf] %vm3842, %v3729
      %4044 = vst.msk [vmem:[%s197 + $0x324] sm:$0xf] %vm3842, %v3730
      %4045 = vst.msk [vmem:[%s197 + $0x328] sm:$0xf] %vm3842, %v3731
      %4046 = vst.msk [vmem:[%s197 + $0x32c] sm:$0xf] %vm3842, %v3732
      %4047 = vst.msk [vmem:[%s197 + $0x330] sm:$0xf] %vm3842, %v3733
      %4048 = vst.msk [vmem:[%s197 + $0x334] sm:$0xf] %vm3842, %v3734
      %4049 = vst.msk [vmem:[%s197 + $0x338] sm:$0xf] %vm3842, %v3735
      %4050 = vst.msk [vmem:[%s197 + $0x33c] sm:$0xf] %vm3842, %v3736
      %4051 = vst.msk [vmem:[%s197 + $0x340] sm:$0xf] %vm3842, %v3737
      %4052 = vst.msk [vmem:[%s197 + $0x344] sm:$0xf] %vm3842, %v3738
      %4053 = vst.msk [vmem:[%s197 + $0x348] sm:$0xf] %vm3842, %v3739
      %4054 = vst.msk [vmem:[%s197 + $0x34c] sm:$0xf] %vm3842, %v3740
      %4055 = vst.msk [vmem:[%s197 + $0x350] sm:$0xf] %vm3842, %v3741
      %4056 = vst.msk [vmem:[%s197 + $0x354] sm:$0xf] %vm3842, %v3742
      %4057 = vst.msk [vmem:[%s197 + $0x358] sm:$0xf] %vm3842, %v3743
      %4058 = vst.msk [vmem:[%s197 + $0x35c] sm:$0xf] %vm3842, %v3744
      %4059 = vst.msk [vmem:[%s197 + $0x360] sm:$0xf] %vm3842, %v3745
      %4060 = vst.msk [vmem:[%s197 + $0x364] sm:$0xf] %vm3842, %v3746
      %4061 = vst.msk [vmem:[%s197 + $0x368] sm:$0xf] %vm3842, %v3747
      %4062 = vst.msk [vmem:[%s197 + $0x36c] sm:$0xf] %vm3842, %v3748
      %4063 = vst.msk [vmem:[%s197 + $0x370] sm:$0xf] %vm3842, %v3749
      %4064 = vst.msk [vmem:[%s197 + $0x374] sm:$0xf] %vm3842, %v3750
      %4065 = vst.msk [vmem:[%s197 + $0x378] sm:$0xf] %vm3842, %v3751
      %4066 = vst.msk [vmem:[%s197 + $0x37c] sm:$0xf] %vm3842, %v3752
      %4067 = vst.msk [vmem:[%s197 + $0x380] sm:$0xf] %vm3842, %v3753
      %4068 = vst.msk [vmem:[%s197 + $0x384] sm:$0xf] %vm3842, %v3754
      %4069 = vst.msk [vmem:[%s197 + $0x388] sm:$0xf] %vm3842, %v3755
      %4070 = vst.msk [vmem:[%s197 + $0x38c] sm:$0xf] %vm3842, %v3756
      %4071 = vst.msk [vmem:[%s197 + $0x390] sm:$0xf] %vm3842, %v3757
      %4072 = vst.msk [vmem:[%s197 + $0x394] sm:$0xf] %vm3842, %v3758
      %4073 = vst.msk [vmem:[%s197 + $0x398] sm:$0xf] %vm3842, %v3759
      %4074 = vst.msk [vmem:[%s197 + $0x39c] sm:$0xf] %vm3842, %v3760
      %4075 = vst.msk [vmem:[%s197 + $0x3a0] sm:$0xf] %vm3842, %v3761
      %4076 = vst.msk [vmem:[%s197 + $0x3a4] sm:$0xf] %vm3842, %v3762
      %4077 = vst.msk [vmem:[%s197 + $0x3a8] sm:$0xf] %vm3842, %v3763
      %4078 = vst.msk [vmem:[%s197 + $0x3ac] sm:$0xf] %vm3842, %v3764
      %4079 = vst.msk [vmem:[%s197 + $0x3b0] sm:$0xf] %vm3842, %v3765
      %4080 = vst.msk [vmem:[%s197 + $0x3b4] sm:$0xf] %vm3842, %v3766
      %4081 = vst.msk [vmem:[%s197 + $0x3b8] sm:$0xf] %vm3842, %v3767
      %4082 = vst.msk [vmem:[%s197 + $0x3bc] sm:$0xf] %vm3842, %v3768
      %4083 = vst.msk [vmem:[%s197 + $0x3c0] sm:$0xf] %vm3842, %v3769
      %4084 = vst.msk [vmem:[%s197 + $0x3c4] sm:$0xf] %vm3842, %v3770
      %4085 = vst.msk [vmem:[%s197 + $0x3c8] sm:$0xf] %vm3842, %v3771
      %4086 = vst.msk [vmem:[%s197 + $0x3cc] sm:$0xf] %vm3842, %v3772
      %4087 = vst.msk [vmem:[%s197 + $0x3d0] sm:$0xf] %vm3842, %v3773
      %4088 = vst.msk [vmem:[%s197 + $0x3d4] sm:$0xf] %vm3842, %v3774
      %4089 = vst.msk [vmem:[%s197 + $0x3d8] sm:$0xf] %vm3842, %v3775
      %4090 = vst.msk [vmem:[%s197 + $0x3dc] sm:$0xf] %vm3842, %v3776
      %4091 = vst.msk [vmem:[%s197 + $0x3e0] sm:$0xf] %vm3842, %v3777
      %4092 = vst.msk [vmem:[%s197 + $0x3e4] sm:$0xf] %vm3842, %v3778
      %4093 = vst.msk [vmem:[%s197 + $0x3e8] sm:$0xf] %vm3842, %v3779
      %4094 = vst.msk [vmem:[%s197 + $0x3ec] sm:$0xf] %vm3842, %v3780
      %4095 = vst.msk [vmem:[%s197 + $0x3f0] sm:$0xf] %vm3842, %v3781
      %4096 = vst.msk [vmem:[%s197 + $0x3f4] sm:$0xf] %vm3842, %v3782
      %4097 = vst.msk [vmem:[%s197 + $0x3f8] sm:$0xf] %vm3842, %v3783
      %4098 = vst.msk [vmem:[%s197 + $0x3fc] sm:$0xf] %vm3842, %v3784
      %4099 = vst.msk [vmem:[%s197 + $0x400] sm:$0xf] %vm3842, %v3785
      %4100 = vst.msk [vmem:[%s197 + $0x404] sm:$0xf] %vm3842, %v3786
      %4101 = vst.msk [vmem:[%s197 + $0x408] sm:$0xf] %vm3842, %v3787
      %4102 = vst.msk [vmem:[%s197 + $0x40c] sm:$0xf] %vm3842, %v3788
      %4103 = vst.msk [vmem:[%s197 + $0x410] sm:$0xf] %vm3842, %v3789
      %4104 = vst.msk [vmem:[%s197 + $0x414] sm:$0xf] %vm3842, %v3790
      %4105 = vst.msk [vmem:[%s197 + $0x418] sm:$0xf] %vm3842, %v3791
      %4106 = vst.msk [vmem:[%s197 + $0x41c] sm:$0xf] %vm3842, %v3792
      %4107 = vst.msk [vmem:[%s197 + $0x420] sm:$0xf] %vm3842, %v3793
      %4108 = vst.msk [vmem:[%s197 + $0x424] sm:$0xf] %vm3842, %v3794
      %4109 = vst.msk [vmem:[%s197 + $0x428] sm:$0xf] %vm3842, %v3795
      %4110 = vst.msk [vmem:[%s197 + $0x42c] sm:$0xf] %vm3842, %v3796
      %4111 = vst.msk [vmem:[%s197 + $0x430] sm:$0xf] %vm3842, %v3797
      %4112 = vst.msk [vmem:[%s197 + $0x434] sm:$0xf] %vm3842, %v3798
      %4113 = vst.msk [vmem:[%s197 + $0x438] sm:$0xf] %vm3842, %v3799
      %4114 = vst.msk [vmem:[%s197 + $0x43c] sm:$0xf] %vm3842, %v3800
      %4115 = vst.msk [vmem:[%s197 + $0x440] sm:$0xf] %vm3842, %v3801
      %4116 = vst.msk [vmem:[%s197 + $0x444] sm:$0xf] %vm3842, %v3802
      %4117 = vst.msk [vmem:[%s197 + $0x448] sm:$0xf] %vm3842, %v3803
      %4118 = vst.msk [vmem:[%s197 + $0x44c] sm:$0xf] %vm3842, %v3804
      %4119 = vst.msk [vmem:[%s197 + $0x450] sm:$0xf] %vm3842, %v3805
      %4120 = vst.msk [vmem:[%s197 + $0x454] sm:$0xf] %vm3842, %v3806
      %4121 = vst.msk [vmem:[%s197 + $0x458] sm:$0xf] %vm3842, %v3807
      %4122 = vst.msk [vmem:[%s197 + $0x45c] sm:$0xf] %vm3842, %v3808
      %4123 = vst.msk [vmem:[%s197 + $0x460] sm:$0xf] %vm3842, %v3809
      %4124 = vst.msk [vmem:[%s197 + $0x464] sm:$0xf] %vm3842, %v3810
      %4125 = vst.msk [vmem:[%s197 + $0x468] sm:$0xf] %vm3842, %v3811
      %4126 = vst.msk [vmem:[%s197 + $0x46c] sm:$0xf] %vm3842, %v3812
      %4127 = vst.msk [vmem:[%s197 + $0x470] sm:$0xf] %vm3842, %v3813
      %4128 = vst.msk [vmem:[%s197 + $0x474] sm:$0xf] %vm3842, %v3814
      %4129 = vst.msk [vmem:[%s197 + $0x478] sm:$0xf] %vm3842, %v3815
      %4130 = vst.msk [vmem:[%s197 + $0x47c] sm:$0xf] %vm3842, %v3816
      %4131 = vst.msk [vmem:[%s197 + $0x480] sm:$0xf] %vm3842, %v3817
      %4132 = vst.msk [vmem:[%s197 + $0x484] sm:$0xf] %vm3842, %v3818
      %4133 = vst.msk [vmem:[%s197 + $0x488] sm:$0xf] %vm3842, %v3819
      %4134 = vst.msk [vmem:[%s197 + $0x48c] sm:$0xf] %vm3842, %v3820
      %4135 = vst.msk [vmem:[%s197 + $0x490] sm:$0xf] %vm3842, %v3821
      %4136 = vst.msk [vmem:[%s197 + $0x494] sm:$0xf] %vm3842, %v3822
      %4137 = vst.msk [vmem:[%s197 + $0x498] sm:$0xf] %vm3842, %v3823
      %4138 = vst.msk [vmem:[%s197 + $0x49c] sm:$0xf] %vm3842, %v3824
      %4139 = vst.msk [vmem:[%s197 + $0x4a0] sm:$0xf] %vm3842, %v3825
      %4140 = vst.msk [vmem:[%s197 + $0x4a4] sm:$0xf] %vm3842, %v3826
      %4141 = vst.msk [vmem:[%s197 + $0x4a8] sm:$0xf] %vm3842, %v3827
      %4142 = vst.msk [vmem:[%s197 + $0x4ac] sm:$0xf] %vm3842, %v3828
      %4143 = vst.msk [vmem:[%s197 + $0x4b0] sm:$0xf] %vm3842, %v3829
      %4144 = vst.msk [vmem:[%s197 + $0x4b4] sm:$0xf] %vm3842, %v3830
      %4145 = vst.msk [vmem:[%s197 + $0x4b8] sm:$0xf] %vm3842, %v3831
      %4146 = vst.msk [vmem:[%s197 + $0x4bc] sm:$0xf] %vm3842, %v3832
      %4147 = vst.msk [vmem:[%s197 + $0x4c0] sm:$0xf] %vm3842, %v3833
      %4148 = vst.msk [vmem:[%s197 + $0x4c4] sm:$0xf] %vm3842, %v3834
      %4149 = vst.msk [vmem:[%s197 + $0x4c8] sm:$0xf] %vm3842, %v3835
      %4150 = vst.msk [vmem:[%s197 + $0x4cc] sm:$0xf] %vm3842, %v3836
      %4151 = vst.msk [vmem:[%s197 + $0x4d0] sm:$0xf] %vm3842, %v3837
      %4152 = vst.msk [vmem:[%s197 + $0x4d4] sm:$0xf] %vm3842, %v3838
      %4153 = vst.msk [vmem:[%s197 + $0x4d8] sm:$0xf] %vm3842, %v3839
      %4154 = vst.msk [vmem:[%s197 + $0x4dc] sm:$0xf] %vm3842, %v3840
      %vm4155 = vcmask 254976
      %4156 = vst.msk [vmem:[%s197 + $0x4e0] sm:$0x3] %vm4155, %v3841
      %p4157 = scmp.lt.s32.totalorder %s15, 1
      %s4158 = scalar_select %p4157, %s15, 1
      %s4159 = smul.addr %s4158, 313
      %s4160 = smul.addr %s4159, 4
      %s4161 = scalar_lea.vmem %s4, %s4160
      // Predicated region
      $region37: #{tpu_custom_call.1} parent=35 // pred_check
        %p4162 = pneg %p122
      $region38: #{tpu_custom_call.1} parent=35 // pred_check_branch
        %4164 = sbr.rel (%p4162) target = $region40
      $region39: #{tpu_custom_call.1} parent=35 // pred_region
        _
      $region40: #{tpu_custom_call.1} parent=35 // pred_fallthru
        _
    $region36: #{tpu_custom_call.1} parent=5 // pred_fallthru
      _
    %p4165 = scmp.le.s32.totalorder 2, %s10
    // Predicated region
    $region41: #{tpu_custom_call.1} parent=5 // pred_check
      %p4166 = pneg %p4165
    $region42: #{tpu_custom_call.1} parent=5 // pred_check_branch
      %4168 = sbr.rel (%p4166) target = $region44
    $region43: #{tpu_custom_call.1} parent=5 // pred_region
      %s4169 = ssub.s32 %s10, 2
      // Predicated region
      $region45: #{tpu_custom_call.1} parent=43 // pred_check
        %p4170 = pneg %p128
      $region46: #{tpu_custom_call.1} parent=43 // pred_check_branch
        %4172 = sbr.rel (%p4170) target = $region48
      $region47: #{tpu_custom_call.1} parent=43 // pred_region
        %p4173 = scmp.lt.s32.totalorder %s16, 1
        %s4174 = scalar_select %p4173, %s16, 1
        %s4175 = smul.addr %s4174, 313
        %s4176 = smul.addr %s4175, 4
        %s4177 = scalar_lea.vmem %s4, %s4176
      $region48: #{tpu_custom_call.1} parent=43 // pred_fallthru
        _
    $region44: #{tpu_custom_call.1} parent=5 // pred_fallthru
      _
  $region6: #{tpu_custom_call.1} parent=0 // loop_footer
    %s14 = sadd.s32 1, %s10
  $region7: #{tpu_custom_call.1} parent=0 // loop_footer_branch
    %9 = sbr.rel target = $region3
  $region8: #{tpu_custom_call.1} parent=0 // loop_exit
    _

</llo_original>
